<compile_context>
chip_gen: v7x
topology: tpu7x:2x2x1
jax: 0.10.0
libtpu: 0.0.40
codegen_flags: <defaults>
</compile_context>

<pallas_src>
import math

import jax
import jax.numpy as jnp
from jax.experimental import pallas as pl
from jax.experimental.pallas import tpu as pltpu

# ---------------- module configuration (small shapes consistent with the module) ----------
B = 2                                   # batch
N_TOK = 8                               # number of query tokens
QUERY_DIM = 128                         # query_dim == out_query_dim
OUT_QUERY_DIM = QUERY_DIM
IN_DIM = 16                             # in_dim == eff_in_dim (sampled channels)
OUT_DIM = IN_DIM                        # out_dim defaults to in_dim
IN_POINTS = 8                           # num sampling points
OUT_POINTS = max(IN_POINTS, 32)         # out_points = max(in_points, 32) -> 32
PG_INNER = int(0.25 * QUERY_DIM)        # pg_inner_dim = 0.25 * query_dim -> 32
CHANNEL_PARAMS = IN_DIM * OUT_DIM       # 256
SPATIAL_PARAMS = IN_POINTS * OUT_POINTS  # 256
TOTAL_PARAMS = CHANNEL_PARAMS + SPATIAL_PARAMS  # 512
FLAT_DIM = OUT_POINTS * OUT_DIM         # 512 (lane-dense: multiple of 128)
LN_EPS = 1e-5                           # nn.LayerNorm default


# ---------------- shared math helpers (used by kernel and by the pure-JAX reference) ------
def _layernorm(x, g, b):
    mu = jnp.mean(x, axis=-1, keepdims=True)
    var = jnp.mean((x - mu) ** 2, axis=-1, keepdims=True)
    return (x - mu) * jax.lax.rsqrt(var + LN_EPS) * g + b


def _gelu(x):
    # TODO(synk): nn.GELU is exact (erf-based); erf lowering availability in Mosaic is
    # version-dependent, so the tanh approximation is used (deviation ~1e-3).
    c = math.sqrt(2.0 / math.pi)
    return 0.5 * x * (1.0 + jnp.tanh(c * (x + 0.044715 * x * x * x)))


# ---------------- the fused Pallas kernel --------------------------------------------------
def adaptive_mixing_kernel(q_ref, s_ref, g_ref, b_ref, w1_ref, b1_ref, w2_ref, b2_ref,
                           mb_ref, sbf_ref, wp_ref, bp_ref, o_ref):
    """One token-slab per grid step: everything stays in VMEM between the two HBM touches
    (load query/sampled/weights, store the lane-dense (tokens, 128) output)."""
    x = q_ref[...]                                # (T, D)        f32
    s = s_ref[...]                                # (T, Pin, Cin) f32
    n = x.shape[0]

    # --- parameter_generator: LayerNorm -> Linear -> Linear ---------------------------------
    y = _layernorm(x, g_ref[...], b_ref[...])
    h = jnp.dot(y, w1_ref[...], preferred_element_type=jnp.float32) + b1_ref[...]   # (T, 32)
    w2 = w2_ref[...]                              # bf16 weight (halved HBM traffic)
    params = jnp.dot(h.astype(w2.dtype), w2,
                     preferred_element_type=jnp.float32) + b2_ref[...]              # (T, 512)

    # --- split/reshape the generated mixing parameters in-kernel (split at lane 256) --------
    cm = params[:, :CHANNEL_PARAMS].reshape(n, IN_DIM, OUT_DIM).astype(jnp.bfloat16)
    sm = params[:, CHANNEL_PARAMS:].reshape(n, OUT_POINTS, IN_POINTS).astype(jnp.bfloat16)

    # --- channel mixing (+m_beta) -> GELU (bf16 operands, f32 accumulation) -----------------
    mixed = jnp.einsum('npc,ncd->npd', s.astype(jnp.bfloat16), cm,
                       preferred_element_type=jnp.float32) + mb_ref[...]   # (T, Pin, Cout)
    mixed = _gelu(mixed)

    # --- spatial mixing; bias + GELU deferred until after the lane-dense flatten ------------
    mixed = jnp.einsum('nop,npd->nod', sm, mixed.astype(jnp.bfloat16),
                       preferred_element_type=jnp.float32)                 # (T, Pout, Cout)

    flat = mixed.reshape(n, FLAT_DIM)                                      # (T, 512) lane-dense
    flat = _gelu(flat + sbf_ref[...])             # s_beta pre-tiled to (1, 512): exact rewrite

    # --- out_proj: lane-dense (T, 512) @ (512, 128) on the MXU -------------------------------
    wp = wp_ref[...]                              # bf16 weight
    o_ref[...] = (jnp.dot(flat.astype(wp.dtype), wp,
                          preferred_element_type=jnp.float32) + bp_ref[...]).astype(o_ref.dtype)


# ---------------- wrapper -------------------------------------------------------------------
def _num_grid_steps(total_tokens):
    """One grid step per TensorCore: 1 on v5e/v6e (single TC), 2 on v7x (2 TCs)."""
    steps = 1
    try:
        kind = jax.devices()[0].device_kind.lower()
        if "v7" in kind or "7x" in kind:
            steps = 2
    except Exception:
        steps = 1
    while steps > 1 and total_tokens % steps:
        steps -= 1
    return max(1, steps)


def adaptive_mixing(p, sampled, query):
    """sampled: (B, N, 1, in_points, in_dim); query: (B, N, query_dim) -> (B, N, out_query_dim)."""
    Bq, Nq, g, Pn, Cn = sampled.shape
    assert g == 1 and Pn == IN_POINTS and Cn == IN_DIM
    assert query.shape == (Bq, Nq, QUERY_DIM)

    # Flatten (B, N) into one token axis so the grid is sized by TC count, not batch.
    T = Bq * Nq
    s = sampled.reshape(T, Pn, Cn)
    q = query.reshape(T, QUERY_DIM)

    # Pre-tile s_beta (per out-point) into a lane-dense (1, Pout*Cout) bias so the second
    # bias-add + GELU run on the flattened slab (exact: flatten index = point*Cout + channel).
    sb_flat = jnp.repeat(p['s_beta'].reshape(-1), OUT_DIM).reshape(1, FLAT_DIM)

    steps = _num_grid_steps(T)
    tt = T // steps                               # tokens per grid step (16 or 8; multiple of 8)

    batched = [q, s]
    weights = [p['ln_g'], p['ln_b'], p['pg_w1'], p['pg_b1'], p['pg_w2'], p['pg_b2'],
               p['m_beta'], sb_flat, p['proj_w'], p['proj_b']]

    def tspec(shape):                             # token-blocked tile (split along first dim)
        nd = len(shape)
        return pl.BlockSpec((tt,) + tuple(shape[1:]),
                            lambda t, _n=nd: (t,) + (0,) * (_n - 1))

    def rspec(shape):                             # replicated whole-array tile (weights)
        nd = len(shape)
        return pl.BlockSpec(tuple(shape), lambda t, _n=nd: (0,) * _n)

    out = pl.pallas_call(
        adaptive_mixing_kernel,
        out_shape=jax.ShapeDtypeStruct((T, OUT_QUERY_DIM), jnp.float32),
        grid=(steps,),                            # 1 step (v5e/v6e) or 2 parallel steps (v7x)
        in_specs=[tspec(q.shape), tspec(s.shape)] + [rspec(w.shape) for w in weights],
        out_specs=tspec((T, OUT_QUERY_DIM)),
        compiler_params=pltpu.CompilerParams(dimension_semantics=("parallel",)),
    )(*batched, *weights)
    return out.reshape(Bq, Nq, OUT_QUERY_DIM)


# ---------------- pure-JAX reference (mirrors the kernel's bf16 dot-input handling) ---------
def adaptive_mixing_ref(p, sampled, query):
    Bq, Nq, g, Pn, Cn = sampled.shape
    assert g == 1
    hi = jax.lax.Precision.HIGHEST
    s = sampled.reshape(Bq * Nq, Pn, Cn)
    y = _layernorm(query.reshape(Bq * Nq, -1), p['ln_g'], p['ln_b'])
    h = jnp.dot(y, p['pg_w1'], precision=hi, preferred_element_type=jnp.float32) + p['pg_b1']
    prm = jnp.dot(h.astype(p['pg_w2'].dtype), p['pg_w2'],
                  preferred_element_type=jnp.float32) + p['pg_b2']
    cm = prm[:, :CHANNEL_PARAMS].reshape(Bq * Nq, IN_DIM, OUT_DIM).astype(jnp.bfloat16)
    sm = prm[:, CHANNEL_PARAMS:].reshape(Bq * Nq, OUT_POINTS, IN_POINTS).astype(jnp.bfloat16)
    out = jnp.einsum('npc,ncd->npd', s.astype(jnp.bfloat16), cm, precision=hi,
                     preferred_element_type=jnp.float32) + p['m_beta'][None]
    out = _gelu(out)
    out = jnp.einsum('nop,npd->nod', sm, out.astype(jnp.bfloat16), precision=hi,
                     preferred_element_type=jnp.float32) + p['s_beta'][None]
    out = _gelu(out)
    flat = out.reshape(Bq * Nq, FLAT_DIM)
    o = jnp.dot(flat.astype(p['proj_w'].dtype), p['proj_w'],
                preferred_element_type=jnp.float32) + p['proj_b']
    return o.reshape(Bq, Nq, OUT_QUERY_DIM)


# ---------------- deterministic parameter init ----------------------------------------------
def init_params(key):
    ks = jax.random.split(key, 8)

    def nrm(k, shape, scale):
        return (jax.random.normal(k, shape) * scale).astype(jnp.float32)

    return {
        # parameter_generator[0]: LayerNorm(query_dim)
        'ln_g': jnp.ones((1, QUERY_DIM), jnp.float32),
        'ln_b': jnp.zeros((1, QUERY_DIM), jnp.float32),
        # parameter_generator[1]: Linear(query_dim, pg_inner_dim)   (stored (in, out))
        'pg_w1': nrm(ks[0], (QUERY_DIM, PG_INNER), 0.05),
        'pg_b1': nrm(ks[1], (1, PG_INNER), 0.02),
        # parameter_generator[2]: Linear(pg_inner_dim, total_param_count) -- large, bf16 weight
        'pg_w2': nrm(ks[2], (PG_INNER, TOTAL_PARAMS), 0.05).astype(jnp.bfloat16),
        'pg_b2': nrm(ks[3], (1, TOTAL_PARAMS), 0.05),
        # mixing biases (m_beta: per out channel; s_beta: per out point)
        'm_beta': nrm(ks[4], (1, OUT_DIM), 0.1),
        's_beta': nrm(ks[5], (OUT_POINTS, 1), 0.1),
        # out_proj: Linear(out_points * out_dim, out_query_dim) -- large, bf16 weight
        'proj_w': nrm(ks[6], (FLAT_DIM, OUT_QUERY_DIM), 0.03).astype(jnp.bfloat16),
        'proj_b': nrm(ks[7], (1, OUT_QUERY_DIM), 0.02),
    }


# ---------------- main -----------------------------------------------------------------------
if __name__ == "__main__":
    root = jax.random.PRNGKey(0)
    k_p, k_s, k_q = jax.random.split(root, 3)
    params = init_params(k_p)

    sampled = jax.random.normal(k_s, (B, N_TOK, 1, IN_POINTS, IN_DIM), jnp.float32)
    query = jax.random.normal(k_q, (B, N_TOK, QUERY_DIM), jnp.float32)

    out = jax.jit(adaptive_mixing)(params, sampled, query)
    jax.block_until_ready(out)

    ref = adaptive_mixing_ref(params, sampled, query)
    jax.block_until_ready(ref)

    assert out.shape == (B, N_TOK, OUT_QUERY_DIM)
    assert bool(jnp.all(jnp.isfinite(out)))
    max_err = float(jnp.max(jnp.abs(out - ref)))
    assert max_err < 2e-3, f"kernel vs reference mismatch: max abs err = {max_err}"
    print("KERNEL_OK")
</pallas_src>

<mosaic_0001>
module attributes {stable_mosaic.version = 11 : i64} {
  func.func @adaptive_mixing_kernel(%arg0: i32, %arg1: memref<16x128xf32, #tpu.memory_space<vmem>>, %arg2: memref<16x8x16xf32, #tpu.memory_space<vmem>>, %arg3: memref<1x128xf32, #tpu.memory_space<vmem>>, %arg4: memref<1x128xf32, #tpu.memory_space<vmem>>, %arg5: memref<128x32xf32, #tpu.memory_space<vmem>>, %arg6: memref<1x32xf32, #tpu.memory_space<vmem>>, %arg7: memref<32x512xbf16, #tpu.memory_space<vmem>>, %arg8: memref<1x512xf32, #tpu.memory_space<vmem>>, %arg9: memref<1x16xf32, #tpu.memory_space<vmem>>, %arg10: memref<1x512xf32, #tpu.memory_space<vmem>>, %arg11: memref<512x128xbf16, #tpu.memory_space<vmem>>, %arg12: memref<1x128xf32, #tpu.memory_space<vmem>>, %arg13: memref<16x128xf32, #tpu.memory_space<vmem>>) attributes {dimension_semantics = [#tpu.dimension_semantics<parallel>], iteration_bounds = array<i64: 1>, scalar_prefetch = 0 : i64, scratch_operands = 0 : i64, tpu.core_type = #tpu.core_type<tc>, window_params = [{transform_indices = @transform_0, window_bounds = array<i64: 16, 128>}, {transform_indices = @transform_1, window_bounds = array<i64: 16, 8, 16>}, {pipeline_mode = #tpu.pipeline_mode<synchronous>, transform_indices = @transform_2, window_bounds = array<i64: 1, 128>}, {pipeline_mode = #tpu.pipeline_mode<synchronous>, transform_indices = @transform_3, window_bounds = array<i64: 1, 128>}, {pipeline_mode = #tpu.pipeline_mode<synchronous>, transform_indices = @transform_4, window_bounds = array<i64: 128, 32>}, {pipeline_mode = #tpu.pipeline_mode<synchronous>, transform_indices = @transform_5, window_bounds = array<i64: 1, 32>}, {pipeline_mode = #tpu.pipeline_mode<synchronous>, transform_indices = @transform_6, window_bounds = array<i64: 32, 512>}, {pipeline_mode = #tpu.pipeline_mode<synchronous>, transform_indices = @transform_7, window_bounds = array<i64: 1, 512>}, {pipeline_mode = #tpu.pipeline_mode<synchronous>, transform_indices = @transform_8, window_bounds = array<i64: 1, 16>}, {pipeline_mode = #tpu.pipeline_mode<synchronous>, transform_indices = @transform_9, window_bounds = array<i64: 1, 512>}, {pipeline_mode = #tpu.pipeline_mode<synchronous>, transform_indices = @transform_10, window_bounds = array<i64: 512, 128>}, {pipeline_mode = #tpu.pipeline_mode<synchronous>, transform_indices = @transform_11, window_bounds = array<i64: 1, 128>}, {transform_indices = @transform_12, window_bounds = array<i64: 16, 128>}]} {
    %c0 = arith.constant 0 : index
    %c0_0 = arith.constant 0 : index
    %0 = vector.load %arg1[%c0, %c0_0] : memref<16x128xf32, #tpu.memory_space<vmem>>, vector<16x128xf32>
    %c0_1 = arith.constant 0 : index
    %c0_2 = arith.constant 0 : index
    %c0_3 = arith.constant 0 : index
    %1 = vector.load %arg2[%c0_1, %c0_2, %c0_3] : memref<16x8x16xf32, #tpu.memory_space<vmem>>, vector<16x8x16xf32>
    %c0_4 = arith.constant 0 : index
    %c0_5 = arith.constant 0 : index
    %2 = vector.load %arg3[%c0_4, %c0_5] : memref<1x128xf32, #tpu.memory_space<vmem>>, vector<1x128xf32>
    %c0_6 = arith.constant 0 : index
    %c0_7 = arith.constant 0 : index
    %3 = vector.load %arg4[%c0_6, %c0_7] : memref<1x128xf32, #tpu.memory_space<vmem>>, vector<1x128xf32>
    %cst = arith.constant dense<0.000000e+00> : vector<16xf32>
    %4 = vector.multi_reduction <add>, %0, %cst [1] : vector<16x128xf32> to vector<16xf32>
    %5 = vector.shape_cast %4 : vector<16xf32> to vector<16x1xf32>
    %cst_8 = arith.constant 1.280000e+02 : f32
    %6 = vector.broadcast %cst_8 : f32 to vector<16x1xf32>
    %7 = arith.divf %5, %6 : vector<16x1xf32>
    %8 = vector.broadcast %7 : vector<16x1xf32> to vector<16x128xf32>
    %9 = arith.subf %0, %8 : vector<16x128xf32>
    %10 = arith.mulf %9, %9 : vector<16x128xf32>
    %cst_9 = arith.constant dense<0.000000e+00> : vector<16xf32>
    %11 = vector.multi_reduction <add>, %10, %cst_9 [1] : vector<16x128xf32> to vector<16xf32>
    %12 = vector.shape_cast %11 : vector<16xf32> to vector<16x1xf32>
    %cst_10 = arith.constant 1.280000e+02 : f32
    %13 = vector.broadcast %cst_10 : f32 to vector<16x1xf32>
    %14 = arith.divf %12, %13 : vector<16x1xf32>
    %15 = vector.broadcast %7 : vector<16x1xf32> to vector<16x128xf32>
    %16 = arith.subf %0, %15 : vector<16x128xf32>
    %cst_11 = arith.constant 9.99999974E-6 : f32
    %17 = vector.broadcast %cst_11 : f32 to vector<16x1xf32>
    %18 = arith.addf %14, %17 : vector<16x1xf32>
    %19 = math.rsqrt %18 : vector<16x1xf32>
    %20 = vector.broadcast %19 : vector<16x1xf32> to vector<16x128xf32>
    %21 = arith.mulf %16, %20 : vector<16x128xf32>
    %22 = vector.broadcast %2 : vector<1x128xf32> to vector<16x128xf32>
    %23 = arith.mulf %21, %22 : vector<16x128xf32>
    %24 = vector.broadcast %3 : vector<1x128xf32> to vector<16x128xf32>
    %25 = arith.addf %23, %24 : vector<16x128xf32>
    %c0_12 = arith.constant 0 : index
    %c0_13 = arith.constant 0 : index
    %26 = vector.load %arg5[%c0_12, %c0_13] : memref<128x32xf32, #tpu.memory_space<vmem>>, vector<128x32xf32>
    %cst_14 = arith.constant dense<0.000000e+00> : vector<16x32xf32>
    %27 = tpu.matmul %25, %26, %cst_14 {dimension_numbers = #tpu.dot_dimension_numbers<[1], [0], [0], [1], [0, 0, 1, 1], [], []>} : vector<16x128xf32>, vector<128x32xf32>, vector<16x32xf32> -> vector<16x32xf32>
    %c0_15 = arith.constant 0 : index
    %c0_16 = arith.constant 0 : index
    %28 = vector.load %arg6[%c0_15, %c0_16] : memref<1x32xf32, #tpu.memory_space<vmem>>, vector<1x32xf32>
    %29 = vector.broadcast %28 : vector<1x32xf32> to vector<16x32xf32>
    %30 = arith.addf %27, %29 : vector<16x32xf32>
    %c0_17 = arith.constant 0 : index
    %c0_18 = arith.constant 0 : index
    %31 = vector.load %arg7[%c0_17, %c0_18] : memref<32x512xbf16, #tpu.memory_space<vmem>>, vector<32x512xbf16>
    %32 = arith.truncf %30 : vector<16x32xf32> to vector<16x32xbf16>
    %cst_19 = arith.constant dense<0.000000e+00> : vector<16x512xf32>
    %33 = tpu.matmul %32, %31, %cst_19 {dimension_numbers = #tpu.dot_dimension_numbers<[1], [0], [0], [1], [0, 0, 1, 1], [], []>} : vector<16x32xbf16>, vector<32x512xbf16>, vector<16x512xf32> -> vector<16x512xf32>
    %c0_20 = arith.constant 0 : index
    %c0_21 = arith.constant 0 : index
    %34 = vector.load %arg8[%c0_20, %c0_21] : memref<1x512xf32, #tpu.memory_space<vmem>>, vector<1x512xf32>
    %35 = vector.broadcast %34 : vector<1x512xf32> to vector<16x512xf32>
    %36 = arith.addf %33, %35 : vector<16x512xf32>
    %37 = vector.extract_strided_slice %36 {offsets = [0, 0], sizes = [16, 256], strides = [1, 1]} : vector<16x512xf32> to vector<16x256xf32>
    %38 = vector.shape_cast %37 : vector<16x256xf32> to vector<16x16x16xf32>
    %39 = arith.truncf %38 : vector<16x16x16xf32> to vector<16x16x16xbf16>
    %40 = vector.extract_strided_slice %36 {offsets = [0, 256], sizes = [16, 256], strides = [1, 1]} : vector<16x512xf32> to vector<16x256xf32>
    %41 = vector.shape_cast %40 : vector<16x256xf32> to vector<16x32x8xf32>
    %42 = arith.truncf %41 : vector<16x32x8xf32> to vector<16x32x8xbf16>
    %43 = arith.truncf %1 : vector<16x8x16xf32> to vector<16x8x16xbf16>
    "tpu.trace_start"() <{level = 10 : i32, message = "npc,ncd->npd"}> : () -> ()
    %cst_22 = arith.constant dense<0.000000e+00> : vector<16x8x16xf32>
    %44 = tpu.matmul %43, %39, %cst_22 {dimension_numbers = #tpu.dot_dimension_numbers<[2], [1], [1], [2], [0, 0, 0, 1, 1, 2], [0], [0]>} : vector<16x8x16xbf16>, vector<16x16x16xbf16>, vector<16x8x16xf32> -> vector<16x8x16xf32>
    "tpu.trace_stop"() : () -> ()
    %c0_23 = arith.constant 0 : index
    %c0_24 = arith.constant 0 : index
    %45 = vector.load %arg9[%c0_23, %c0_24] : memref<1x16xf32, #tpu.memory_space<vmem>>, vector<1x16xf32>
    %46 = vector.shape_cast %45 : vector<1x16xf32> to vector<1x1x16xf32>
    %47 = vector.broadcast %46 : vector<1x1x16xf32> to vector<16x8x16xf32>
    %48 = arith.addf %44, %47 : vector<16x8x16xf32>
    %cst_25 = arith.constant 5.000000e-01 : f32
    %49 = vector.broadcast %cst_25 : f32 to vector<16x8x16xf32>
    %50 = arith.mulf %49, %48 : vector<16x8x16xf32>
    %cst_26 = arith.constant 4.471500e-02 : f32
    %51 = vector.broadcast %cst_26 : f32 to vector<16x8x16xf32>
    %52 = arith.mulf %51, %48 : vector<16x8x16xf32>
    %53 = arith.mulf %52, %48 : vector<16x8x16xf32>
    %54 = arith.mulf %53, %48 : vector<16x8x16xf32>
    %55 = arith.addf %48, %54 : vector<16x8x16xf32>
    %cst_27 = arith.constant 0.797884583 : f32
    %56 = vector.broadcast %cst_27 : f32 to vector<16x8x16xf32>
    %57 = arith.mulf %56, %55 : vector<16x8x16xf32>
    %58 = math.tanh %57 : vector<16x8x16xf32>
    %cst_28 = arith.constant 1.000000e+00 : f32
    %59 = vector.broadcast %cst_28 : f32 to vector<16x8x16xf32>
    %60 = arith.addf %59, %58 : vector<16x8x16xf32>
    %61 = arith.mulf %50, %60 : vector<16x8x16xf32>
    %62 = arith.truncf %61 : vector<16x8x16xf32> to vector<16x8x16xbf16>
    "tpu.trace_start"() <{level = 10 : i32, message = "nop,npd->nod"}> : () -> ()
    %cst_29 = arith.constant dense<0.000000e+00> : vector<16x32x16xf32>
    %63 = tpu.matmul %42, %62, %cst_29 {dimension_numbers = #tpu.dot_dimension_numbers<[2], [1], [1], [2], [0, 0, 0, 1, 1, 2], [0], [0]>} : vector<16x32x8xbf16>, vector<16x8x16xbf16>, vector<16x32x16xf32> -> vector<16x32x16xf32>
    "tpu.trace_stop"() : () -> ()
    %64 = vector.shape_cast %63 : vector<16x32x16xf32> to vector<16x512xf32>
    %c0_30 = arith.constant 0 : index
    %c0_31 = arith.constant 0 : index
    %65 = vector.load %arg10[%c0_30, %c0_31] : memref<1x512xf32, #tpu.memory_space<vmem>>, vector<1x512xf32>
    %66 = vector.broadcast %65 : vector<1x512xf32> to vector<16x512xf32>
    %67 = arith.addf %64, %66 : vector<16x512xf32>
    %cst_32 = arith.constant 5.000000e-01 : f32
    %68 = vector.broadcast %cst_32 : f32 to vector<16x512xf32>
    %69 = arith.mulf %68, %67 : vector<16x512xf32>
    %cst_33 = arith.constant 4.471500e-02 : f32
    %70 = vector.broadcast %cst_33 : f32 to vector<16x512xf32>
    %71 = arith.mulf %70, %67 : vector<16x512xf32>
    %72 = arith.mulf %71, %67 : vector<16x512xf32>
    %73 = arith.mulf %72, %67 : vector<16x512xf32>
    %74 = arith.addf %67, %73 : vector<16x512xf32>
    %cst_34 = arith.constant 0.797884583 : f32
    %75 = vector.broadcast %cst_34 : f32 to vector<16x512xf32>
    %76 = arith.mulf %75, %74 : vector<16x512xf32>
    %77 = math.tanh %76 : vector<16x512xf32>
    %cst_35 = arith.constant 1.000000e+00 : f32
    %78 = vector.broadcast %cst_35 : f32 to vector<16x512xf32>
    %79 = arith.addf %78, %77 : vector<16x512xf32>
    %80 = arith.mulf %69, %79 : vector<16x512xf32>
    %c0_36 = arith.constant 0 : index
    %c0_37 = arith.constant 0 : index
    %81 = vector.load %arg11[%c0_36, %c0_37] : memref<512x128xbf16, #tpu.memory_space<vmem>>, vector<512x128xbf16>
    %82 = arith.truncf %80 : vector<16x512xf32> to vector<16x512xbf16>
    %cst_38 = arith.constant dense<0.000000e+00> : vector<16x128xf32>
    %83 = tpu.matmul %82, %81, %cst_38 {dimension_numbers = #tpu.dot_dimension_numbers<[1], [0], [0], [1], [0, 0, 1, 1], [], []>} : vector<16x512xbf16>, vector<512x128xbf16>, vector<16x128xf32> -> vector<16x128xf32>
    %c0_39 = arith.constant 0 : index
    %c0_40 = arith.constant 0 : index
    %84 = vector.load %arg12[%c0_39, %c0_40] : memref<1x128xf32, #tpu.memory_space<vmem>>, vector<1x128xf32>
    %85 = vector.broadcast %84 : vector<1x128xf32> to vector<16x128xf32>
    %86 = arith.addf %83, %85 : vector<16x128xf32>
    %c0_41 = arith.constant 0 : index
    %c0_42 = arith.constant 0 : index
    %87 = vector.load %arg13[%c0_41, %c0_42] : memref<16x128xf32, #tpu.memory_space<vmem>>, vector<16x128xf32>
    tpu.vector_store %arg13[%c0_41, %c0_42], %86 {strides = array<i32>} : memref<16x128xf32, #tpu.memory_space<vmem>>, vector<16x128xf32>,
    return
  }
  func.func @transform_0(%arg0: i32) -> (i32, i32) {
    %c0_i32 = arith.constant 0 : i32
    %c0_i32_0 = arith.constant 0 : i32
    return %arg0, %c0_i32 : i32, i32
  }
  func.func @transform_1(%arg0: i32) -> (i32, i32, i32) {
    %c0_i32 = arith.constant 0 : i32
    %c0_i32_0 = arith.constant 0 : i32
    %c0_i32_1 = arith.constant 0 : i32
    return %arg0, %c0_i32, %c0_i32_0 : i32, i32, i32
  }
  func.func @transform_2(%arg0: i32) -> (i32, i32) {
    %c0_i32 = arith.constant 0 : i32
    %c0_i32_0 = arith.constant 0 : i32
    %c0_i32_1 = arith.constant 0 : i32
    return %c0_i32, %c0_i32_0 : i32, i32
  }
  func.func @transform_3(%arg0: i32) -> (i32, i32) {
    %c0_i32 = arith.constant 0 : i32
    %c0_i32_0 = arith.constant 0 : i32
    %c0_i32_1 = arith.constant 0 : i32
    return %c0_i32, %c0_i32_0 : i32, i32
  }
  func.func @transform_4(%arg0: i32) -> (i32, i32) {
    %c0_i32 = arith.constant 0 : i32
    %c0_i32_0 = arith.constant 0 : i32
    %c0_i32_1 = arith.constant 0 : i32
    return %c0_i32, %c0_i32_0 : i32, i32
  }
  func.func @transform_5(%arg0: i32) -> (i32, i32) {
    %c0_i32 = arith.constant 0 : i32
    %c0_i32_0 = arith.constant 0 : i32
    %c0_i32_1 = arith.constant 0 : i32
    return %c0_i32, %c0_i32_0 : i32, i32
  }
  func.func @transform_6(%arg0: i32) -> (i32, i32) {
    %c0_i32 = arith.constant 0 : i32
    %c0_i32_0 = arith.constant 0 : i32
    %c0_i32_1 = arith.constant 0 : i32
    return %c0_i32, %c0_i32_0 : i32, i32
  }
  func.func @transform_7(%arg0: i32) -> (i32, i32) {
    %c0_i32 = arith.constant 0 : i32
    %c0_i32_0 = arith.constant 0 : i32
    %c0_i32_1 = arith.constant 0 : i32
    return %c0_i32, %c0_i32_0 : i32, i32
  }
  func.func @transform_8(%arg0: i32) -> (i32, i32) {
    %c0_i32 = arith.constant 0 : i32
    %c0_i32_0 = arith.constant 0 : i32
    %c0_i32_1 = arith.constant 0 : i32
    return %c0_i32, %c0_i32_0 : i32, i32
  }
  func.func @transform_9(%arg0: i32) -> (i32, i32) {
    %c0_i32 = arith.constant 0 : i32
    %c0_i32_0 = arith.constant 0 : i32
    %c0_i32_1 = arith.constant 0 : i32
    return %c0_i32, %c0_i32_0 : i32, i32
  }
  func.func @transform_10(%arg0: i32) -> (i32, i32) {
    %c0_i32 = arith.constant 0 : i32
    %c0_i32_0 = arith.constant 0 : i32
    %c0_i32_1 = arith.constant 0 : i32
    return %c0_i32, %c0_i32_0 : i32, i32
  }
  func.func @transform_11(%arg0: i32) -> (i32, i32) {
    %c0_i32 = arith.constant 0 : i32
    %c0_i32_0 = arith.constant 0 : i32
    %c0_i32_1 = arith.constant 0 : i32
    return %c0_i32, %c0_i32_0 : i32, i32
  }
  func.func @transform_12(%arg0: i32) -> (i32, i32) {
    %c0_i32 = arith.constant 0 : i32
    %c0_i32_0 = arith.constant 0 : i32
    return %arg0, %c0_i32 : i32, i32
  }
}

</mosaic_0001>

<llo_original>
// kernel: adaptive_mixing.1
$region0: #{adaptive_mixing.1}
  #allocation0 [shape = 'u32[]', space=smem, size = 0x4, offset = 0x4, fixed_abs, tag = 'smem constant byte address 0x4 - core index']
  #allocation1 [shape = 'u32[144,128]{1,0:T(1,128)}', space=vmem, size = 0x12000, scoped, tag = 'internal scratch']
  %s0 = inlined_call_operand.vmem [shape: f32[16,128], index: 0, kind: input, shape index: {}]
  %s1 = inlined_call_operand.hbm [shape: f32[16,8,16], index: 1, kind: input, shape index: {}]
  %s2 = inlined_call_operand.vmem [shape: f32[1,128], index: 2, kind: input, shape index: {}]
  %s3 = inlined_call_operand.vmem [shape: f32[1,128], index: 3, kind: input, shape index: {}]
  %s4 = inlined_call_operand.vmem [shape: f32[128,32], index: 4, kind: input, shape index: {}]
  %s5 = inlined_call_operand.hbm [shape: f32[1,32], index: 5, kind: input, shape index: {}]
  %s6 = inlined_call_operand.hbm [shape: bf16[32,512], index: 6, kind: input, shape index: {}]
  %s7 = inlined_call_operand.hbm [shape: f32[1,512], index: 7, kind: input, shape index: {}]
  %s8 = inlined_call_operand.hbm [shape: f32[1,16], index: 8, kind: input, shape index: {}]
  %s9 = inlined_call_operand.vmem [shape: f32[1,512], index: 9, kind: input, shape index: {}]
  %s10 = inlined_call_operand.vmem [shape: bf16[512,128], index: 10, kind: input, shape index: {}]
  %s11 = inlined_call_operand.hbm [shape: f32[1,128], index: 11, kind: input, shape index: {}]
  %s12 = inlined_call_operand.hbm [shape: f32[16,128], index: 12, kind: output, shape index: {}]
  %s13 = sld [smem:[#allocation0]]
  $region82: #{adaptive_mixing.1} parent=0
    _
  %s15 = ssub.s32 1, %s13
  %s16 = scalar_select 0, %s15, %s13
  $region1: #{adaptive_mixing.1} parent=0
    #allocation2 [shape = 'u8[65536]{0}', space=vmem, size = 0x10000, scoped, tag = 'input window, operand 1, single buffered']
    #allocation3 [shape = 's32[1]{0}', space=sflag, size = 0x4, scoped, tag = 'scoped memory for adaptive_mixing.1']
    #allocation4 [shape = 's32[1]{0}', space=sflag, size = 0x4, scoped, tag = 'scoped memory for adaptive_mixing.1']
    #allocation5 [shape = 'u8[512]{0}', space=vmem, size = 0x400, scoped, tag = 'input window, operand 5, single buffered']
    #allocation6 [shape = 's32[1]{0}', space=sflag, size = 0x4, scoped, tag = 'scoped memory for adaptive_mixing.1']
    #allocation7 [shape = 'u8[32768]{0}', space=vmem, size = 0x8000, scoped, tag = 'input window, operand 6, single buffered']
    #allocation8 [shape = 'u8[2048]{0}', space=vmem, size = 0x800, scoped, tag = 'input window, operand 7, single buffered']
    #allocation9 [shape = 's32[1]{0}', space=sflag, size = 0x4, scoped, tag = 'scoped memory for adaptive_mixing.1']
    #allocation10 [shape = 'u8[512]{0}', space=vmem, size = 0x400, scoped, tag = 'input window, operand 8, single buffered']
    #allocation11 [shape = 'u8[512]{0}', space=vmem, size = 0x400, scoped, tag = 'input window, operand 11, single buffered']
    #allocation12 [shape = 's32[1]{0}', space=sflag, size = 0x4, scoped, tag = 'scoped memory for adaptive_mixing.1']
    #allocation13 [shape = 'u8[8192]{0}', space=vmem, size = 0x2000, scoped, tag = 'output window, operand 0, single buffered']
    %17 = vsyncpa [#allocation3], 0
    %18 = vsyncpa [#allocation6], 0
    %19 = vsyncpa [#allocation9], 0
    %20 = vsyncpa [#allocation12], 0
    %21 = vsyncpa [#allocation4], 0
    // Predicated region
    $region2: #{adaptive_mixing.1} parent=1 // pred_check
      _
    $region3: #{adaptive_mixing.1} parent=1 // pred_check_branch
      %23 = sbr.rel (0) target = $region5
    $region4: #{adaptive_mixing.1} parent=1 // pred_region
      _
    $region5: #{adaptive_mixing.1} parent=1 // pred_fallthru
      _
    // Predicated region
    $region6: #{adaptive_mixing.1} parent=1 // pred_check
      _
    $region7: #{adaptive_mixing.1} parent=1 // pred_check_branch
      %25 = sbr.rel (0) target = $region9
    $region8: #{adaptive_mixing.1} parent=1 // pred_region
      %s27 = ssub.s32 2048, 2048
      %28 = vsyncadd [#allocation3], %s27
      %s29 = sshll.u32 [#allocation2], 4
      %s30 = int_to_ptr.vmem [resolvable:$true] %s29
      %35 = dma.hbm_to_vmem [thread:$0]  %s1, 2048, %s30, [#allocation3], 128, 128, 8
    $region9: #{adaptive_mixing.1} parent=1 // pred_fallthru
      _
    // Predicated region
    $region10: #{adaptive_mixing.1} parent=1 // pred_check
      _
    $region11: #{adaptive_mixing.1} parent=1 // pred_check_branch
      %37 = sbr.rel (0) target = $region13
    $region12: #{adaptive_mixing.1} parent=1 // pred_region
      _
    $region13: #{adaptive_mixing.1} parent=1 // pred_fallthru
      _
    // Predicated region
    $region14: #{adaptive_mixing.1} parent=1 // pred_check
      _
    $region15: #{adaptive_mixing.1} parent=1 // pred_check_branch
      %39 = sbr.rel (0) target = $region17
    $region16: #{adaptive_mixing.1} parent=1 // pred_region
      _
    $region17: #{adaptive_mixing.1} parent=1 // pred_fallthru
      _
    // Predicated region
    $region18: #{adaptive_mixing.1} parent=1 // pred_check
      _
    $region19: #{adaptive_mixing.1} parent=1 // pred_check_branch
      %41 = sbr.rel (0) target = $region21
    $region20: #{adaptive_mixing.1} parent=1 // pred_region
      _
    $region21: #{adaptive_mixing.1} parent=1 // pred_fallthru
      _
    // Predicated region
    $region22: #{adaptive_mixing.1} parent=1 // pred_check
      _
    $region23: #{adaptive_mixing.1} parent=1 // pred_check_branch
      %43 = sbr.rel (0) target = $region25
    $region24: #{adaptive_mixing.1} parent=1 // pred_region
      %s45 = ssub.s32 16, 16
      %46 = vsyncadd [#allocation6], %s45
      %s48 = sshll.u32 [#allocation5], 4
      %s49 = int_to_ptr.vmem [resolvable:$true] %s48
      %51 = dma.hbm_to_vmem [thread:$0]  %s5, 16, %s49, [#allocation6]
    $region25: #{adaptive_mixing.1} parent=1 // pred_fallthru
      _
    // Predicated region
    $region26: #{adaptive_mixing.1} parent=1 // pred_check
      _
    $region27: #{adaptive_mixing.1} parent=1 // pred_check_branch
      %53 = sbr.rel (0) target = $region29
    $region28: #{adaptive_mixing.1} parent=1 // pred_region
      %s55 = ssub.s32 1024, 1024
      %56 = vsyncadd [#allocation6], %s55
      %s57 = sshll.u32 [#allocation7], 4
      %s58 = int_to_ptr.vmem [resolvable:$true] %s57
      %63 = dma.hbm_to_vmem [thread:$0]  %s6, 1024, %s58, [#allocation6], 256, 256, 16
    $region29: #{adaptive_mixing.1} parent=1 // pred_fallthru
      _
    // Predicated region
    $region30: #{adaptive_mixing.1} parent=1 // pred_check
      _
    $region31: #{adaptive_mixing.1} parent=1 // pred_check_branch
      %65 = sbr.rel (0) target = $region33
    $region32: #{adaptive_mixing.1} parent=1 // pred_region
      %s67 = ssub.s32 64, 64
      %68 = vsyncadd [#allocation9], %s67
      %s70 = sshll.u32 [#allocation8], 4
      %s71 = int_to_ptr.vmem [resolvable:$true] %s70
      %73 = dma.hbm_to_vmem [thread:$0]  %s7, 64, %s71, [#allocation9]
    $region33: #{adaptive_mixing.1} parent=1 // pred_fallthru
      _
    // Predicated region
    $region34: #{adaptive_mixing.1} parent=1 // pred_check
      _
    $region35: #{adaptive_mixing.1} parent=1 // pred_check_branch
      %75 = sbr.rel (0) target = $region37
    $region36: #{adaptive_mixing.1} parent=1 // pred_region
      %s77 = ssub.s32 16, 16
      %78 = vsyncadd [#allocation9], %s77
      %s80 = sshll.u32 [#allocation10], 4
      %s81 = int_to_ptr.vmem [resolvable:$true] %s80
      %83 = dma.hbm_to_vmem [thread:$0]  %s8, 16, %s81, [#allocation9]
    $region37: #{adaptive_mixing.1} parent=1 // pred_fallthru
      _
    // Predicated region
    $region38: #{adaptive_mixing.1} parent=1 // pred_check
      _
    $region39: #{adaptive_mixing.1} parent=1 // pred_check_branch
      %85 = sbr.rel (0) target = $region41
    $region40: #{adaptive_mixing.1} parent=1 // pred_region
      _
    $region41: #{adaptive_mixing.1} parent=1 // pred_fallthru
      _
    // Predicated region
    $region42: #{adaptive_mixing.1} parent=1 // pred_check
      _
    $region43: #{adaptive_mixing.1} parent=1 // pred_check_branch
      %87 = sbr.rel (0) target = $region45
    $region44: #{adaptive_mixing.1} parent=1 // pred_region
      _
    $region45: #{adaptive_mixing.1} parent=1 // pred_fallthru
      _
    // Predicated region
    $region46: #{adaptive_mixing.1} parent=1 // pred_check
      _
    $region47: #{adaptive_mixing.1} parent=1 // pred_check_branch
      %89 = sbr.rel (0) target = $region49
    $region48: #{adaptive_mixing.1} parent=1 // pred_region
      %s91 = ssub.s32 16, 16
      %92 = vsyncadd [#allocation12], %s91
      %s94 = sshll.u32 [#allocation11], 4
      %s95 = int_to_ptr.vmem [resolvable:$true] %s94
      %97 = dma.hbm_to_vmem [thread:$0]  %s11, 16, %s95, [#allocation12]
    $region49: #{adaptive_mixing.1} parent=1 // pred_fallthru
      _
    // Predicated region
    $region50: #{adaptive_mixing.1} parent=1 // pred_check
      _
    $region51: #{adaptive_mixing.1} parent=1 // pred_check_branch
      %99 = sbr.rel (0) target = $region53
    $region52: #{adaptive_mixing.1} parent=1 // pred_region
      %100 = dma.done [#allocation3], 2048
    $region53: #{adaptive_mixing.1} parent=1 // pred_fallthru
      _
    // Predicated region
    $region54: #{adaptive_mixing.1} parent=1 // pred_check
      _
    $region55: #{adaptive_mixing.1} parent=1 // pred_check_branch
      %102 = sbr.rel (0) target = $region57
    $region56: #{adaptive_mixing.1} parent=1 // pred_region
      %103 = dma.done [#allocation6], 16
    $region57: #{adaptive_mixing.1} parent=1 // pred_fallthru
      _
    // Predicated region
    $region58: #{adaptive_mixing.1} parent=1 // pred_check
      _
    $region59: #{adaptive_mixing.1} parent=1 // pred_check_branch
      %105 = sbr.rel (0) target = $region61
    $region60: #{adaptive_mixing.1} parent=1 // pred_region
      %106 = dma.done [#allocation6], 1024
    $region61: #{adaptive_mixing.1} parent=1 // pred_fallthru
      _
    // Predicated region
    $region62: #{adaptive_mixing.1} parent=1 // pred_check
      _
    $region63: #{adaptive_mixing.1} parent=1 // pred_check_branch
      %108 = sbr.rel (0) target = $region65
    $region64: #{adaptive_mixing.1} parent=1 // pred_region
      %109 = dma.done [#allocation9], 64
    $region65: #{adaptive_mixing.1} parent=1 // pred_fallthru
      _
    // Predicated region
    $region66: #{adaptive_mixing.1} parent=1 // pred_check
      _
    $region67: #{adaptive_mixing.1} parent=1 // pred_check_branch
      %111 = sbr.rel (0) target = $region69
    $region68: #{adaptive_mixing.1} parent=1 // pred_region
      %112 = dma.done [#allocation9], 16
    $region69: #{adaptive_mixing.1} parent=1 // pred_fallthru
      _
    // Predicated region
    $region70: #{adaptive_mixing.1} parent=1 // pred_check
      _
    $region71: #{adaptive_mixing.1} parent=1 // pred_check_branch
      %114 = sbr.rel (0) target = $region73
    $region72: #{adaptive_mixing.1} parent=1 // pred_region
      %115 = dma.done [#allocation12], 16
    $region73: #{adaptive_mixing.1} parent=1 // pred_fallthru
      _
    %v117 = vld [vmem:[%s0] sm:$0xff]
    %v118 = vld [vmem:[%s0 + $0x8] sm:$0xff]
    %v119 = vld [vmem:[#allocation2] sm:$0xff]
    %v120 = vld [vmem:[#allocation2 + $0x8] sm:$0xff]
    %v121 = vld [vmem:[#allocation2 + $0x10] sm:$0xff]
    %v122 = vld [vmem:[#allocation2 + $0x18] sm:$0xff]
    %v123 = vld [vmem:[#allocation2 + $0x20] sm:$0xff]
    %v124 = vld [vmem:[#allocation2 + $0x28] sm:$0xff]
    %v125 = vld [vmem:[#allocation2 + $0x30] sm:$0xff]
    %v126 = vld [vmem:[#allocation2 + $0x38] sm:$0xff]
    %v127 = vld [vmem:[#allocation2 + $0x40] sm:$0xff]
    %v128 = vld [vmem:[#allocation2 + $0x48] sm:$0xff]
    %v129 = vld [vmem:[#allocation2 + $0x50] sm:$0xff]
    %v130 = vld [vmem:[#allocation2 + $0x58] sm:$0xff]
    %v131 = vld [vmem:[#allocation2 + $0x60] sm:$0xff]
    %v132 = vld [vmem:[#allocation2 + $0x68] sm:$0xff]
    %v133 = vld [vmem:[#allocation2 + $0x70] sm:$0xff]
    %v134 = vld [vmem:[#allocation2 + $0x78] sm:$0xff]
    %v135 = vld [vmem:[%s2] sm:$0x1]
    %v136 = vld [vmem:[%s3] sm:$0x1]
    %137 = vadd.xlane.f32.xlu0 %v117
    %v138 = vpop.xlane.xlu0 %137
    %139 = vadd.xlane.f32.xlu0 %v118
    %v140 = vpop.xlane.xlu0 %139
    %v141 = vrcp.pop 128.0
    %v142 = vmul.f32 %v138, %v141
    %v143 = vmul.f32 %v140, %v141
    %v144 = vsub.f32 %v117, %v142
    %v145 = vsub.f32 %v118, %v143
    %v146 = vmul.f32 %v144, %v144
    %v147 = vmul.f32 %v145, %v145
    %148 = vadd.xlane.f32.xlu0 %v146
    %v149 = vpop.xlane.xlu0 %148
    %150 = vadd.xlane.f32.xlu0 %v147
    %v151 = vpop.xlane.xlu0 %150
    %v152 = vmul.f32 %v149, %v141
    %v153 = vmul.f32 %v151, %v141
    %v154 = vadd.f32 %v152, 1e-05
    %v155 = vadd.f32 %v153, 1e-05
    %v156 = vrsqrt.pop %v154
    %v157 = vrsqrt.pop %v155
    %v158 = vmul.f32 %v144, %v156
    %v159 = vmul.f32 %v145, %v157
    %v161 = vlaneseq
    %v162 = vshrl.u32 %v161, 7
    %v163 = vsub.s32 0, %v162
    %v164 = vrot.slane %v135, %v163
    %v166 = vmul.f32 %v158, %v164
    %v167 = vmul.f32 %v159, %v164
    %v169 = vlaneseq
    %v170 = vshrl.u32 %v169, 7
    %v171 = vsub.s32 0, %v170
    %v172 = vrot.slane %v136, %v171
    %v174 = vadd.f32 %v166, %v172
    %v175 = vadd.f32 %v167, %v172
    %v176 = vld [vmem:[%s4] sm:$0xff]
    %v177 = vld [vmem:[%s4 + $0x8] sm:$0xff]
    %v178 = vld [vmem:[%s4 + $0x10] sm:$0xff]
    %v179 = vld [vmem:[%s4 + $0x18] sm:$0xff]
    %v180 = vld [vmem:[%s4 + $0x20] sm:$0xff]
    %v181 = vld [vmem:[%s4 + $0x28] sm:$0xff]
    %v182 = vld [vmem:[%s4 + $0x30] sm:$0xff]
    %v183 = vld [vmem:[%s4 + $0x38] sm:$0xff]
    %v184 = vld [vmem:[%s4 + $0x40] sm:$0xff]
    %v185 = vld [vmem:[%s4 + $0x48] sm:$0xff]
    %v186 = vld [vmem:[%s4 + $0x50] sm:$0xff]
    %v187 = vld [vmem:[%s4 + $0x58] sm:$0xff]
    %v188 = vld [vmem:[%s4 + $0x60] sm:$0xff]
    %v189 = vld [vmem:[%s4 + $0x68] sm:$0xff]
    %v190 = vld [vmem:[%s4 + $0x70] sm:$0xff]
    %v191 = vld [vmem:[%s4 + $0x78] sm:$0xff]
    %v192 = vld [vmem:[#allocation5] sm:$0x1]
    %v194 = vlaneseq
    %v195 = vshrl.u32 %v194, 7
    %v196 = vsub.s32 0, %v195
    %v197 = vrot.slane %v192, %v196
    %199 = vmatprep.subr.mxu0 0.0
    %200 = vmatpush1.msra.mxu0 %v176
    %201 = vmatprep.subr.mxu0 0.0
    %202 = vmatpush1.msra.mxu0 %v177
    %203 = vmatprep.subr.mxu0 0.0
    %204 = vmatpush1.msra.mxu0 %v178
    %205 = vmatprep.subr.mxu0 0.0
    %206 = vmatpush1.msra.mxu0 %v179
    %207 = vmatprep.subr.mxu0 0.0
    %208 = vmatpush1.msra.mxu0 %v180
    %209 = vmatprep.subr.mxu0 0.0
    %210 = vmatpush1.msra.mxu0 %v181
    %211 = vmatprep.subr.mxu0 0.0
    %212 = vmatpush1.msra.mxu0 %v182
    %213 = vmatprep.subr.mxu0 0.0
    %214 = vmatpush1.msra.mxu0 %v183
    %215 = vmatprep.subr.mxu0 0.0
    %216 = vmatpush1.msra.mxu0 %v184
    %217 = vmatprep.subr.mxu0 0.0
    %218 = vmatpush1.msra.mxu0 %v185
    %219 = vmatprep.subr.mxu0 0.0
    %220 = vmatpush1.msra.mxu0 %v186
    %221 = vmatprep.subr.mxu0 0.0
    %222 = vmatpush1.msra.mxu0 %v187
    %223 = vmatprep.subr.mxu0 0.0
    %224 = vmatpush1.msra.mxu0 %v188
    %225 = vmatprep.subr.mxu0 0.0
    %226 = vmatpush1.msra.mxu0 %v189
    %227 = vmatprep.subr.mxu0 0.0
    %228 = vmatpush1.msra.mxu0 %v190
    %229 = vmatprep.subr.mxu0 0.0
    %230 = vmatpush1.msra.mxu0 %v191
    %231 = vmatprep.subr.mxu0 0.0
    %232 = vmatpush1.msra.mxu0 0.0
    %233 = vmatprep.subr.mxu0 0.0
    %234 = vmatpush1.msra.mxu0 0.0
    %235 = vmatprep.subr.mxu0 0.0
    %236 = vmatpush1.msra.mxu0 0.0
    %237 = vmatprep.subr.mxu0 0.0
    %238 = vmatpush1.msra.mxu0 0.0
    %239 = vmatprep.subr.mxu0 0.0
    %240 = vmatpush1.msra.mxu0 0.0
    %241 = vmatprep.subr.mxu0 0.0
    %242 = vmatpush1.msra.mxu0 0.0
    %243 = vmatprep.subr.mxu0 0.0
    %244 = vmatpush1.msra.mxu0 0.0
    %245 = vmatprep.subr.mxu0 0.0
    %246 = vmatpush1.msra.mxu0 0.0
    %247 = vmatprep.subr.mxu0 0.0
    %248 = vmatpush1.msra.mxu0 0.0
    %249 = vmatprep.subr.mxu0 0.0
    %250 = vmatpush1.msra.mxu0 0.0
    %251 = vmatprep.subr.mxu0 0.0
    %252 = vmatpush1.msra.mxu0 0.0
    %253 = vmatprep.subr.mxu0 0.0
    %254 = vmatpush1.msra.mxu0 0.0
    %255 = vmatprep.subr.mxu0 0.0
    %256 = vmatpush1.msra.mxu0 0.0
    %257 = vmatprep.subr.mxu0 0.0
    %258 = vmatpush1.msra.mxu0 0.0
    %259 = vmatprep.subr.mxu0 0.0
    %260 = vmatpush1.msra.mxu0 0.0
    %261 = vmatprep.subr.mxu0 0.0
    %262 = vmatpush1.msra.mxu0 0.0
    %263 = vmatprep.mubr.f32.mxu0 0.0
    %264 = vmatmul.mubr.f32.gmra.mrb[0].mxu0 %v174
    %v265 = vpop.f32.mrb[0].mxu0
    %v266 = vadd.f32 %v197, %v265
    %v267 = vpop.f32.mrb[0].mxu0
    %268 = vmatprep.mubr.f32.mxu0 0.0
    %269 = vmatmul.mubr.f32.gmra.mrb[0].mxu0 %v175
    %v270 = vpop.f32.mrb[0].mxu0
    %v271 = vadd.f32 %v197, %v270
    %v272 = vpop.f32.mrb[0].mxu0
    %273 = vdwg.mxu0
    %v274 = vld [vmem:[#allocation7] sm:$0xff]
    %v275 = vld [vmem:[#allocation7 + $0x8] sm:$0xff]
    %v276 = vld [vmem:[#allocation7 + $0x10] sm:$0xff]
    %v277 = vld [vmem:[#allocation7 + $0x18] sm:$0xff]
    %v278 = vld [vmem:[#allocation7 + $0x20] sm:$0xff]
    %v279 = vld [vmem:[#allocation7 + $0x28] sm:$0xff]
    %v280 = vld [vmem:[#allocation7 + $0x30] sm:$0xff]
    %v281 = vld [vmem:[#allocation7 + $0x38] sm:$0xff]
    %v282 = vpack.c.bf16 %v271, %v266
    %v283 = vld [vmem:[#allocation8] sm:$0xf]
    %v285 = vlaneseq
    %v286 = vshrl.u32 %v285, 7
    %v287 = vsub.s32 0, %v286
    %v288 = vrot.slane %v283, %v287
    %v289 = vlaneseq
    %v290 = vshrl.u32 %v289, 7
    %v291 = vsub.s32 1, %v290
    %v292 = vrot.slane %v283, %v291
    %v293 = vlaneseq
    %v294 = vshrl.u32 %v293, 7
    %v295 = vsub.s32 2, %v294
    %v296 = vrot.slane %v283, %v295
    %v297 = vlaneseq
    %v298 = vshrl.u32 %v297, 7
    %v299 = vsub.s32 3, %v298
    %v300 = vrot.slane %v283, %v299
    %v313 = vunpack.c.l.b16 %v274
    %v314 = vunpack.c.h.b16 %v274
    %v315 = vunpack.c.l.b16 %v275
    %v316 = vunpack.c.h.b16 %v275
    %v317 = vunpack.c.l.b16 %v276
    %v318 = vunpack.c.h.b16 %v276
    %v319 = vunpack.c.l.b16 %v277
    %v320 = vunpack.c.h.b16 %v277
    %v321 = vunpack.c.l.b16 %v278
    %v322 = vunpack.c.h.b16 %v278
    %v323 = vunpack.c.l.b16 %v279
    %v324 = vunpack.c.h.b16 %v279
    %v325 = vunpack.c.l.b16 %v280
    %v326 = vunpack.c.h.b16 %v280
    %v327 = vunpack.c.l.b16 %v281
    %v328 = vunpack.c.h.b16 %v281
    %v329 = vpack.c.b16 %v317, %v313
    %v330 = vpack.c.b16 %v318, %v314
    %v331 = vpack.c.b16 %v319, %v315
    %v332 = vpack.c.b16 %v320, %v316
    %v333 = vpack.c.b16 %v325, %v321
    %v334 = vpack.c.b16 %v326, %v322
    %v335 = vpack.c.b16 %v327, %v323
    %v336 = vpack.c.b16 %v328, %v324
    %vm345 = vcmask 261120
    %v347 = vsel %vm345, %v282, 0
    %349 = vmatprep.subr.bf16.mxu0 %v330
    %350 = vmatpush1.bf16.msra.mxu0 %v329
    %351 = vmatprep.subr.bf16.mxu0 %v334
    %352 = vmatpush1.bf16.msra.mxu0 %v333
    %353 = vmatprep.subr.bf16.mxu0 0
    %354 = vmatpush1.bf16.msra.mxu0 0
    %355 = vmatprep.subr.bf16.mxu0 0
    %356 = vmatpush1.bf16.msra.mxu0 0
    %357 = vmatprep.subr.bf16.mxu0 0
    %358 = vmatpush1.bf16.msra.mxu0 0
    %359 = vmatprep.subr.bf16.mxu0 0
    %360 = vmatpush1.bf16.msra.mxu0 0
    %361 = vmatprep.subr.bf16.mxu0 0
    %362 = vmatpush1.bf16.msra.mxu0 0
    %363 = vmatprep.subr.bf16.mxu0 0
    %364 = vmatpush1.bf16.msra.mxu0 0
    %365 = vmatprep.subr.bf16.mxu0 0
    %366 = vmatpush1.bf16.msra.mxu0 0
    %367 = vmatprep.subr.bf16.mxu0 0
    %368 = vmatpush1.bf16.msra.mxu0 0
    %369 = vmatprep.subr.bf16.mxu0 0
    %370 = vmatpush1.bf16.msra.mxu0 0
    %371 = vmatprep.subr.bf16.mxu0 0
    %372 = vmatpush1.bf16.msra.mxu0 0
    %373 = vmatprep.subr.bf16.mxu0 0
    %374 = vmatpush1.bf16.msra.mxu0 0
    %375 = vmatprep.subr.bf16.mxu0 0
    %376 = vmatpush1.bf16.msra.mxu0 0
    %377 = vmatprep.subr.bf16.mxu0 0
    %378 = vmatpush1.bf16.msra.mxu0 0
    %379 = vmatprep.subr.bf16.mxu0 0
    %380 = vmatpush1.bf16.msra.mxu0 0
    %381 = vmatprep.mubr.bf16.mxu0 0
    %382 = vmatmul.mubr.bf16.gmra.mrb[0].mxu0 %v347
    %v383 = vpop.f32.mrb[0].mxu0
    %v384 = vadd.f32 %v288, %v383
    %v385 = vpop.f32.mrb[0].mxu0
    %v386 = vadd.f32 %v292, %v385
    %v387 = vpop.f32.mrb[0].mxu0
    %v388 = vadd.f32 %v288, %v387
    %v389 = vpop.f32.mrb[0].mxu0
    %v390 = vadd.f32 %v292, %v389
    %391 = vdwg.mxu0
    %392 = vmatprep.subr.bf16.mxu0 %v332
    %393 = vmatpush1.bf16.msra.mxu0 %v331
    %394 = vmatprep.subr.bf16.mxu0 %v336
    %395 = vmatpush1.bf16.msra.mxu0 %v335
    %396 = vmatprep.subr.bf16.mxu0 0
    %397 = vmatpush1.bf16.msra.mxu0 0
    %398 = vmatprep.subr.bf16.mxu0 0
    %399 = vmatpush1.bf16.msra.mxu0 0
    %400 = vmatprep.subr.bf16.mxu0 0
    %401 = vmatpush1.bf16.msra.mxu0 0
    %402 = vmatprep.subr.bf16.mxu0 0
    %403 = vmatpush1.bf16.msra.mxu0 0
    %404 = vmatprep.subr.bf16.mxu0 0
    %405 = vmatpush1.bf16.msra.mxu0 0
    %406 = vmatprep.subr.bf16.mxu0 0
    %407 = vmatpush1.bf16.msra.mxu0 0
    %408 = vmatprep.subr.bf16.mxu0 0
    %409 = vmatpush1.bf16.msra.mxu0 0
    %410 = vmatprep.subr.bf16.mxu0 0
    %411 = vmatpush1.bf16.msra.mxu0 0
    %412 = vmatprep.subr.bf16.mxu0 0
    %413 = vmatpush1.bf16.msra.mxu0 0
    %414 = vmatprep.subr.bf16.mxu0 0
    %415 = vmatpush1.bf16.msra.mxu0 0
    %416 = vmatprep.subr.bf16.mxu0 0
    %417 = vmatpush1.bf16.msra.mxu0 0
    %418 = vmatprep.subr.bf16.mxu0 0
    %419 = vmatpush1.bf16.msra.mxu0 0
    %420 = vmatprep.subr.bf16.mxu0 0
    %421 = vmatpush1.bf16.msra.mxu0 0
    %422 = vmatprep.subr.bf16.mxu0 0
    %423 = vmatpush1.bf16.msra.mxu0 0
    %424 = vmatprep.mubr.bf16.mxu0 0
    %425 = vmatmul.mubr.bf16.gmra.mrb[0].mxu0 %v347
    %v426 = vpop.f32.mrb[0].mxu0
    %v427 = vadd.f32 %v296, %v426
    %v428 = vpop.f32.mrb[0].mxu0
    %v429 = vadd.f32 %v300, %v428
    %v430 = vpop.f32.mrb[0].mxu0
    %v431 = vadd.f32 %v296, %v430
    %v432 = vpop.f32.mrb[0].mxu0
    %v433 = vadd.f32 %v300, %v432
    %434 = vdwg.mxu0
    %437 = vrot.lane.b32.xlu0 %v384, 112
    %v438 = vpop.permute.xlu0 %437
    %439 = vrot.lane.b32.xlu0 %v388, 112
    %v440 = vpop.permute.xlu0 %439
    %443 = vrot.lane.b32.xlu0 %v384, 96
    %v444 = vpop.permute.xlu0 %443
    %445 = vrot.lane.b32.xlu0 %v388, 96
    %v446 = vpop.permute.xlu0 %445
    %449 = vrot.lane.b32.xlu0 %v384, 80
    %v450 = vpop.permute.xlu0 %449
    %451 = vrot.lane.b32.xlu0 %v388, 80
    %v452 = vpop.permute.xlu0 %451
    %455 = vrot.lane.b32.xlu0 %v384, 64
    %v456 = vpop.permute.xlu0 %455
    %457 = vrot.lane.b32.xlu0 %v388, 64
    %v458 = vpop.permute.xlu0 %457
    %461 = vrot.lane.b32.xlu0 %v384, 48
    %v462 = vpop.permute.xlu0 %461
    %463 = vrot.lane.b32.xlu0 %v388, 48
    %v464 = vpop.permute.xlu0 %463
    %467 = vrot.lane.b32.xlu0 %v384, 32
    %v468 = vpop.permute.xlu0 %467
    %469 = vrot.lane.b32.xlu0 %v388, 32
    %v470 = vpop.permute.xlu0 %469
    %473 = vrot.lane.b32.xlu0 %v384, 16
    %v474 = vpop.permute.xlu0 %473
    %475 = vrot.lane.b32.xlu0 %v388, 16
    %v476 = vpop.permute.xlu0 %475
    %481 = vrot.lane.b32.xlu0 %v386, 112
    %v482 = vpop.permute.xlu0 %481
    %483 = vrot.lane.b32.xlu0 %v390, 112
    %v484 = vpop.permute.xlu0 %483
    %487 = vrot.lane.b32.xlu0 %v386, 96
    %v488 = vpop.permute.xlu0 %487
    %489 = vrot.lane.b32.xlu0 %v390, 96
    %v490 = vpop.permute.xlu0 %489
    %493 = vrot.lane.b32.xlu0 %v386, 80
    %v494 = vpop.permute.xlu0 %493
    %495 = vrot.lane.b32.xlu0 %v390, 80
    %v496 = vpop.permute.xlu0 %495
    %499 = vrot.lane.b32.xlu0 %v386, 64
    %v500 = vpop.permute.xlu0 %499
    %501 = vrot.lane.b32.xlu0 %v390, 64
    %v502 = vpop.permute.xlu0 %501
    %505 = vrot.lane.b32.xlu0 %v386, 48
    %v506 = vpop.permute.xlu0 %505
    %507 = vrot.lane.b32.xlu0 %v390, 48
    %v508 = vpop.permute.xlu0 %507
    %511 = vrot.lane.b32.xlu0 %v386, 32
    %v512 = vpop.permute.xlu0 %511
    %513 = vrot.lane.b32.xlu0 %v390, 32
    %v514 = vpop.permute.xlu0 %513
    %517 = vrot.lane.b32.xlu0 %v386, 16
    %v518 = vpop.permute.xlu0 %517
    %519 = vrot.lane.b32.xlu0 %v390, 16
    %v520 = vpop.permute.xlu0 %519
    %v523 = vcombine.low %v384, %v444
    %v524 = vcombine.high %v384, %v444
    %v526 = vunpack.c.l.s4 1983009808
    %v527 = vunpack.c.0.s8 %v526
    %v528 = vlaneseq
    %v529 = vshrl.u32 %v528, 7
    %v530 = vsub.s32 %v527, %v529
    %v531 = vrot.slane %v523, %v530
    %v533 = vunpack.c.l.s4 1983009808
    %v534 = vunpack.c.0.s8 %v533
    %v535 = vlaneseq
    %v536 = vshrl.u32 %v535, 7
    %v537 = vsub.s32 %v534, %v536
    %v538 = vrot.slane %v524, %v537
    %v539 = vcombine.low %v438, %v450
    %v540 = vcombine.high %v438, %v450
    %v542 = vunpack.c.l.s4 1983009808
    %v543 = vunpack.c.0.s8 %v542
    %v544 = vlaneseq
    %v545 = vshrl.u32 %v544, 7
    %v546 = vsub.s32 %v543, %v545
    %v547 = vrot.slane %v539, %v546
    %v549 = vunpack.c.l.s4 1983009808
    %v550 = vunpack.c.0.s8 %v549
    %v551 = vlaneseq
    %v552 = vshrl.u32 %v551, 7
    %v553 = vsub.s32 %v550, %v552
    %v554 = vrot.slane %v540, %v553
    %v555 = vcombine.low %v456, %v468
    %v556 = vcombine.high %v456, %v468
    %v558 = vunpack.c.l.s4 1983009808
    %v559 = vunpack.c.0.s8 %v558
    %v560 = vlaneseq
    %v561 = vshrl.u32 %v560, 7
    %v562 = vsub.s32 %v559, %v561
    %v563 = vrot.slane %v555, %v562
    %v565 = vunpack.c.l.s4 1983009808
    %v566 = vunpack.c.0.s8 %v565
    %v567 = vlaneseq
    %v568 = vshrl.u32 %v567, 7
    %v569 = vsub.s32 %v566, %v568
    %v570 = vrot.slane %v556, %v569
    %v571 = vcombine.low %v462, %v474
    %v572 = vcombine.high %v462, %v474
    %v574 = vunpack.c.l.s4 1983009808
    %v575 = vunpack.c.0.s8 %v574
    %v576 = vlaneseq
    %v577 = vshrl.u32 %v576, 7
    %v578 = vsub.s32 %v575, %v577
    %v579 = vrot.slane %v571, %v578
    %v581 = vunpack.c.l.s4 1983009808
    %v582 = vunpack.c.0.s8 %v581
    %v583 = vlaneseq
    %v584 = vshrl.u32 %v583, 7
    %v585 = vsub.s32 %v582, %v584
    %v586 = vrot.slane %v572, %v585
    %v587 = vcombine.low %v531, %v547
    %v588 = vcombine.high %v531, %v547
    %v590 = vunpack.c.l.s4 1934713408
    %v591 = vunpack.c.0.s8 %v590
    %v592 = vlaneseq
    %v593 = vshrl.u32 %v592, 7
    %v594 = vsub.s32 %v591, %v593
    %v595 = vrot.slane %v587, %v594
    %v597 = vunpack.c.l.s4 1934713408
    %v598 = vunpack.c.0.s8 %v597
    %v599 = vlaneseq
    %v600 = vshrl.u32 %v599, 7
    %v601 = vsub.s32 %v598, %v600
    %v602 = vrot.slane %v588, %v601
    %v603 = vcombine.low %v538, %v554
    %v604 = vcombine.high %v538, %v554
    %v606 = vunpack.c.l.s4 1934713408
    %v607 = vunpack.c.0.s8 %v606
    %v608 = vlaneseq
    %v609 = vshrl.u32 %v608, 7
    %v610 = vsub.s32 %v607, %v609
    %v611 = vrot.slane %v603, %v610
    %v613 = vunpack.c.l.s4 1934713408
    %v614 = vunpack.c.0.s8 %v613
    %v615 = vlaneseq
    %v616 = vshrl.u32 %v615, 7
    %v617 = vsub.s32 %v614, %v616
    %v618 = vrot.slane %v604, %v617
    %v619 = vcombine.low %v563, %v579
    %v620 = vcombine.high %v563, %v579
    %v622 = vunpack.c.l.s4 1934713408
    %v623 = vunpack.c.0.s8 %v622
    %v624 = vlaneseq
    %v625 = vshrl.u32 %v624, 7
    %v626 = vsub.s32 %v623, %v625
    %v627 = vrot.slane %v619, %v626
    %v629 = vunpack.c.l.s4 1934713408
    %v630 = vunpack.c.0.s8 %v629
    %v631 = vlaneseq
    %v632 = vshrl.u32 %v631, 7
    %v633 = vsub.s32 %v630, %v632
    %v634 = vrot.slane %v620, %v633
    %v635 = vcombine.low %v570, %v586
    %v636 = vcombine.high %v570, %v586
    %v638 = vunpack.c.l.s4 1934713408
    %v639 = vunpack.c.0.s8 %v638
    %v640 = vlaneseq
    %v641 = vshrl.u32 %v640, 7
    %v642 = vsub.s32 %v639, %v641
    %v643 = vrot.slane %v635, %v642
    %v645 = vunpack.c.l.s4 1934713408
    %v646 = vunpack.c.0.s8 %v645
    %v647 = vlaneseq
    %v648 = vshrl.u32 %v647, 7
    %v649 = vsub.s32 %v646, %v648
    %v650 = vrot.slane %v636, %v649
    %v651 = vcombine.low %v595, %v627
    %v652 = vcombine.high %v595, %v627
    %v653 = vcombine.low %v602, %v634
    %v654 = vcombine.high %v602, %v634
    %v655 = vcombine.low %v611, %v643
    %v656 = vcombine.high %v611, %v643
    %v657 = vcombine.low %v618, %v650
    %v658 = vcombine.high %v618, %v650
    %v659 = vcombine.low %v386, %v488
    %v660 = vcombine.high %v386, %v488
    %v662 = vunpack.c.l.s4 1983009808
    %v663 = vunpack.c.0.s8 %v662
    %v664 = vlaneseq
    %v665 = vshrl.u32 %v664, 7
    %v666 = vsub.s32 %v663, %v665
    %v667 = vrot.slane %v659, %v666
    %v669 = vunpack.c.l.s4 1983009808
    %v670 = vunpack.c.0.s8 %v669
    %v671 = vlaneseq
    %v672 = vshrl.u32 %v671, 7
    %v673 = vsub.s32 %v670, %v672
    %v674 = vrot.slane %v660, %v673
    %v675 = vcombine.low %v482, %v494
    %v676 = vcombine.high %v482, %v494
    %v678 = vunpack.c.l.s4 1983009808
    %v679 = vunpack.c.0.s8 %v678
    %v680 = vlaneseq
    %v681 = vshrl.u32 %v680, 7
    %v682 = vsub.s32 %v679, %v681
    %v683 = vrot.slane %v675, %v682
    %v685 = vunpack.c.l.s4 1983009808
    %v686 = vunpack.c.0.s8 %v685
    %v687 = vlaneseq
    %v688 = vshrl.u32 %v687, 7
    %v689 = vsub.s32 %v686, %v688
    %v690 = vrot.slane %v676, %v689
    %v691 = vcombine.low %v500, %v512
    %v692 = vcombine.high %v500, %v512
    %v694 = vunpack.c.l.s4 1983009808
    %v695 = vunpack.c.0.s8 %v694
    %v696 = vlaneseq
    %v697 = vshrl.u32 %v696, 7
    %v698 = vsub.s32 %v695, %v697
    %v699 = vrot.slane %v691, %v698
    %v701 = vunpack.c.l.s4 1983009808
    %v702 = vunpack.c.0.s8 %v701
    %v703 = vlaneseq
    %v704 = vshrl.u32 %v703, 7
    %v705 = vsub.s32 %v702, %v704
    %v706 = vrot.slane %v692, %v705
    %v707 = vcombine.low %v506, %v518
    %v708 = vcombine.high %v506, %v518
    %v710 = vunpack.c.l.s4 1983009808
    %v711 = vunpack.c.0.s8 %v710
    %v712 = vlaneseq
    %v713 = vshrl.u32 %v712, 7
    %v714 = vsub.s32 %v711, %v713
    %v715 = vrot.slane %v707, %v714
    %v717 = vunpack.c.l.s4 1983009808
    %v718 = vunpack.c.0.s8 %v717
    %v719 = vlaneseq
    %v720 = vshrl.u32 %v719, 7
    %v721 = vsub.s32 %v718, %v720
    %v722 = vrot.slane %v708, %v721
    %v723 = vcombine.low %v667, %v683
    %v724 = vcombine.high %v667, %v683
    %v726 = vunpack.c.l.s4 1934713408
    %v727 = vunpack.c.0.s8 %v726
    %v728 = vlaneseq
    %v729 = vshrl.u32 %v728, 7
    %v730 = vsub.s32 %v727, %v729
    %v731 = vrot.slane %v723, %v730
    %v733 = vunpack.c.l.s4 1934713408
    %v734 = vunpack.c.0.s8 %v733
    %v735 = vlaneseq
    %v736 = vshrl.u32 %v735, 7
    %v737 = vsub.s32 %v734, %v736
    %v738 = vrot.slane %v724, %v737
    %v739 = vcombine.low %v674, %v690
    %v740 = vcombine.high %v674, %v690
    %v742 = vunpack.c.l.s4 1934713408
    %v743 = vunpack.c.0.s8 %v742
    %v744 = vlaneseq
    %v745 = vshrl.u32 %v744, 7
    %v746 = vsub.s32 %v743, %v745
    %v747 = vrot.slane %v739, %v746
    %v749 = vunpack.c.l.s4 1934713408
    %v750 = vunpack.c.0.s8 %v749
    %v751 = vlaneseq
    %v752 = vshrl.u32 %v751, 7
    %v753 = vsub.s32 %v750, %v752
    %v754 = vrot.slane %v740, %v753
    %v755 = vcombine.low %v699, %v715
    %v756 = vcombine.high %v699, %v715
    %v758 = vunpack.c.l.s4 1934713408
    %v759 = vunpack.c.0.s8 %v758
    %v760 = vlaneseq
    %v761 = vshrl.u32 %v760, 7
    %v762 = vsub.s32 %v759, %v761
    %v763 = vrot.slane %v755, %v762
    %v765 = vunpack.c.l.s4 1934713408
    %v766 = vunpack.c.0.s8 %v765
    %v767 = vlaneseq
    %v768 = vshrl.u32 %v767, 7
    %v769 = vsub.s32 %v766, %v768
    %v770 = vrot.slane %v756, %v769
    %v771 = vcombine.low %v706, %v722
    %v772 = vcombine.high %v706, %v722
    %v774 = vunpack.c.l.s4 1934713408
    %v775 = vunpack.c.0.s8 %v774
    %v776 = vlaneseq
    %v777 = vshrl.u32 %v776, 7
    %v778 = vsub.s32 %v775, %v777
    %v779 = vrot.slane %v771, %v778
    %v781 = vunpack.c.l.s4 1934713408
    %v782 = vunpack.c.0.s8 %v781
    %v783 = vlaneseq
    %v784 = vshrl.u32 %v783, 7
    %v785 = vsub.s32 %v782, %v784
    %v786 = vrot.slane %v772, %v785
    %v787 = vcombine.low %v731, %v763
    %v788 = vcombine.high %v731, %v763
    %v789 = vcombine.low %v738, %v770
    %v790 = vcombine.high %v738, %v770
    %v791 = vcombine.low %v747, %v779
    %v792 = vcombine.high %v747, %v779
    %v793 = vcombine.low %v754, %v786
    %v794 = vcombine.high %v754, %v786
    %v795 = vcombine.low %v388, %v446
    %v796 = vcombine.high %v388, %v446
    %v798 = vunpack.c.l.s4 1983009808
    %v799 = vunpack.c.0.s8 %v798
    %v800 = vlaneseq
    %v801 = vshrl.u32 %v800, 7
    %v802 = vsub.s32 %v799, %v801
    %v803 = vrot.slane %v795, %v802
    %v805 = vunpack.c.l.s4 1983009808
    %v806 = vunpack.c.0.s8 %v805
    %v807 = vlaneseq
    %v808 = vshrl.u32 %v807, 7
    %v809 = vsub.s32 %v806, %v808
    %v810 = vrot.slane %v796, %v809
    %v811 = vcombine.low %v440, %v452
    %v812 = vcombine.high %v440, %v452
    %v814 = vunpack.c.l.s4 1983009808
    %v815 = vunpack.c.0.s8 %v814
    %v816 = vlaneseq
    %v817 = vshrl.u32 %v816, 7
    %v818 = vsub.s32 %v815, %v817
    %v819 = vrot.slane %v811, %v818
    %v821 = vunpack.c.l.s4 1983009808
    %v822 = vunpack.c.0.s8 %v821
    %v823 = vlaneseq
    %v824 = vshrl.u32 %v823, 7
    %v825 = vsub.s32 %v822, %v824
    %v826 = vrot.slane %v812, %v825
    %v827 = vcombine.low %v458, %v470
    %v828 = vcombine.high %v458, %v470
    %v830 = vunpack.c.l.s4 1983009808
    %v831 = vunpack.c.0.s8 %v830
    %v832 = vlaneseq
    %v833 = vshrl.u32 %v832, 7
    %v834 = vsub.s32 %v831, %v833
    %v835 = vrot.slane %v827, %v834
    %v837 = vunpack.c.l.s4 1983009808
    %v838 = vunpack.c.0.s8 %v837
    %v839 = vlaneseq
    %v840 = vshrl.u32 %v839, 7
    %v841 = vsub.s32 %v838, %v840
    %v842 = vrot.slane %v828, %v841
    %v843 = vcombine.low %v464, %v476
    %v844 = vcombine.high %v464, %v476
    %v846 = vunpack.c.l.s4 1983009808
    %v847 = vunpack.c.0.s8 %v846
    %v848 = vlaneseq
    %v849 = vshrl.u32 %v848, 7
    %v850 = vsub.s32 %v847, %v849
    %v851 = vrot.slane %v843, %v850
    %v853 = vunpack.c.l.s4 1983009808
    %v854 = vunpack.c.0.s8 %v853
    %v855 = vlaneseq
    %v856 = vshrl.u32 %v855, 7
    %v857 = vsub.s32 %v854, %v856
    %v858 = vrot.slane %v844, %v857
    %v859 = vcombine.low %v803, %v819
    %v860 = vcombine.high %v803, %v819
    %v862 = vunpack.c.l.s4 1934713408
    %v863 = vunpack.c.0.s8 %v862
    %v864 = vlaneseq
    %v865 = vshrl.u32 %v864, 7
    %v866 = vsub.s32 %v863, %v865
    %v867 = vrot.slane %v859, %v866
    %v869 = vunpack.c.l.s4 1934713408
    %v870 = vunpack.c.0.s8 %v869
    %v871 = vlaneseq
    %v872 = vshrl.u32 %v871, 7
    %v873 = vsub.s32 %v870, %v872
    %v874 = vrot.slane %v860, %v873
    %v875 = vcombine.low %v810, %v826
    %v876 = vcombine.high %v810, %v826
    %v878 = vunpack.c.l.s4 1934713408
    %v879 = vunpack.c.0.s8 %v878
    %v880 = vlaneseq
    %v881 = vshrl.u32 %v880, 7
    %v882 = vsub.s32 %v879, %v881
    %v883 = vrot.slane %v875, %v882
    %v885 = vunpack.c.l.s4 1934713408
    %v886 = vunpack.c.0.s8 %v885
    %v887 = vlaneseq
    %v888 = vshrl.u32 %v887, 7
    %v889 = vsub.s32 %v886, %v888
    %v890 = vrot.slane %v876, %v889
    %v891 = vcombine.low %v835, %v851
    %v892 = vcombine.high %v835, %v851
    %v894 = vunpack.c.l.s4 1934713408
    %v895 = vunpack.c.0.s8 %v894
    %v896 = vlaneseq
    %v897 = vshrl.u32 %v896, 7
    %v898 = vsub.s32 %v895, %v897
    %v899 = vrot.slane %v891, %v898
    %v901 = vunpack.c.l.s4 1934713408
    %v902 = vunpack.c.0.s8 %v901
    %v903 = vlaneseq
    %v904 = vshrl.u32 %v903, 7
    %v905 = vsub.s32 %v902, %v904
    %v906 = vrot.slane %v892, %v905
    %v907 = vcombine.low %v842, %v858
    %v908 = vcombine.high %v842, %v858
    %v910 = vunpack.c.l.s4 1934713408
    %v911 = vunpack.c.0.s8 %v910
    %v912 = vlaneseq
    %v913 = vshrl.u32 %v912, 7
    %v914 = vsub.s32 %v911, %v913
    %v915 = vrot.slane %v907, %v914
    %v917 = vunpack.c.l.s4 1934713408
    %v918 = vunpack.c.0.s8 %v917
    %v919 = vlaneseq
    %v920 = vshrl.u32 %v919, 7
    %v921 = vsub.s32 %v918, %v920
    %v922 = vrot.slane %v908, %v921
    %v923 = vcombine.low %v867, %v899
    %v924 = vcombine.high %v867, %v899
    %v925 = vcombine.low %v874, %v906
    %v926 = vcombine.high %v874, %v906
    %v927 = vcombine.low %v883, %v915
    %v928 = vcombine.high %v883, %v915
    %v929 = vcombine.low %v890, %v922
    %v930 = vcombine.high %v890, %v922
    %v931 = vcombine.low %v390, %v490
    %v932 = vcombine.high %v390, %v490
    %v934 = vunpack.c.l.s4 1983009808
    %v935 = vunpack.c.0.s8 %v934
    %v936 = vlaneseq
    %v937 = vshrl.u32 %v936, 7
    %v938 = vsub.s32 %v935, %v937
    %v939 = vrot.slane %v931, %v938
    %v941 = vunpack.c.l.s4 1983009808
    %v942 = vunpack.c.0.s8 %v941
    %v943 = vlaneseq
    %v944 = vshrl.u32 %v943, 7
    %v945 = vsub.s32 %v942, %v944
    %v946 = vrot.slane %v932, %v945
    %v947 = vcombine.low %v484, %v496
    %v948 = vcombine.high %v484, %v496
    %v950 = vunpack.c.l.s4 1983009808
    %v951 = vunpack.c.0.s8 %v950
    %v952 = vlaneseq
    %v953 = vshrl.u32 %v952, 7
    %v954 = vsub.s32 %v951, %v953
    %v955 = vrot.slane %v947, %v954
    %v957 = vunpack.c.l.s4 1983009808
    %v958 = vunpack.c.0.s8 %v957
    %v959 = vlaneseq
    %v960 = vshrl.u32 %v959, 7
    %v961 = vsub.s32 %v958, %v960
    %v962 = vrot.slane %v948, %v961
    %v963 = vcombine.low %v502, %v514
    %v964 = vcombine.high %v502, %v514
    %v966 = vunpack.c.l.s4 1983009808
    %v967 = vunpack.c.0.s8 %v966
    %v968 = vlaneseq
    %v969 = vshrl.u32 %v968, 7
    %v970 = vsub.s32 %v967, %v969
    %v971 = vrot.slane %v963, %v970
    %v973 = vunpack.c.l.s4 1983009808
    %v974 = vunpack.c.0.s8 %v973
    %v975 = vlaneseq
    %v976 = vshrl.u32 %v975, 7
    %v977 = vsub.s32 %v974, %v976
    %v978 = vrot.slane %v964, %v977
    %v979 = vcombine.low %v508, %v520
    %v980 = vcombine.high %v508, %v520
    %v982 = vunpack.c.l.s4 1983009808
    %v983 = vunpack.c.0.s8 %v982
    %v984 = vlaneseq
    %v985 = vshrl.u32 %v984, 7
    %v986 = vsub.s32 %v983, %v985
    %v987 = vrot.slane %v979, %v986
    %v989 = vunpack.c.l.s4 1983009808
    %v990 = vunpack.c.0.s8 %v989
    %v991 = vlaneseq
    %v992 = vshrl.u32 %v991, 7
    %v993 = vsub.s32 %v990, %v992
    %v994 = vrot.slane %v980, %v993
    %v995 = vcombine.low %v939, %v955
    %v996 = vcombine.high %v939, %v955
    %v998 = vunpack.c.l.s4 1934713408
    %v999 = vunpack.c.0.s8 %v998
    %v1000 = vlaneseq
    %v1001 = vshrl.u32 %v1000, 7
    %v1002 = vsub.s32 %v999, %v1001
    %v1003 = vrot.slane %v995, %v1002
    %v1005 = vunpack.c.l.s4 1934713408
    %v1006 = vunpack.c.0.s8 %v1005
    %v1007 = vlaneseq
    %v1008 = vshrl.u32 %v1007, 7
    %v1009 = vsub.s32 %v1006, %v1008
    %v1010 = vrot.slane %v996, %v1009
    %v1011 = vcombine.low %v946, %v962
    %v1012 = vcombine.high %v946, %v962
    %v1014 = vunpack.c.l.s4 1934713408
    %v1015 = vunpack.c.0.s8 %v1014
    %v1016 = vlaneseq
    %v1017 = vshrl.u32 %v1016, 7
    %v1018 = vsub.s32 %v1015, %v1017
    %v1019 = vrot.slane %v1011, %v1018
    %v1021 = vunpack.c.l.s4 1934713408
    %v1022 = vunpack.c.0.s8 %v1021
    %v1023 = vlaneseq
    %v1024 = vshrl.u32 %v1023, 7
    %v1025 = vsub.s32 %v1022, %v1024
    %v1026 = vrot.slane %v1012, %v1025
    %v1027 = vcombine.low %v971, %v987
    %v1028 = vcombine.high %v971, %v987
    %v1030 = vunpack.c.l.s4 1934713408
    %v1031 = vunpack.c.0.s8 %v1030
    %v1032 = vlaneseq
    %v1033 = vshrl.u32 %v1032, 7
    %v1034 = vsub.s32 %v1031, %v1033
    %v1035 = vrot.slane %v1027, %v1034
    %v1037 = vunpack.c.l.s4 1934713408
    %v1038 = vunpack.c.0.s8 %v1037
    %v1039 = vlaneseq
    %v1040 = vshrl.u32 %v1039, 7
    %v1041 = vsub.s32 %v1038, %v1040
    %v1042 = vrot.slane %v1028, %v1041
    %v1043 = vcombine.low %v978, %v994
    %v1044 = vcombine.high %v978, %v994
    %v1046 = vunpack.c.l.s4 1934713408
    %v1047 = vunpack.c.0.s8 %v1046
    %v1048 = vlaneseq
    %v1049 = vshrl.u32 %v1048, 7
    %v1050 = vsub.s32 %v1047, %v1049
    %v1051 = vrot.slane %v1043, %v1050
    %v1053 = vunpack.c.l.s4 1934713408
    %v1054 = vunpack.c.0.s8 %v1053
    %v1055 = vlaneseq
    %v1056 = vshrl.u32 %v1055, 7
    %v1057 = vsub.s32 %v1054, %v1056
    %v1058 = vrot.slane %v1044, %v1057
    %v1059 = vcombine.low %v1003, %v1035
    %v1060 = vcombine.high %v1003, %v1035
    %v1061 = vcombine.low %v1010, %v1042
    %v1062 = vcombine.high %v1010, %v1042
    %v1063 = vcombine.low %v1019, %v1051
    %v1064 = vcombine.high %v1019, %v1051
    %v1065 = vcombine.low %v1026, %v1058
    %v1066 = vcombine.high %v1026, %v1058
    %v1067 = vpack.c.bf16 %v787, %v651
    %v1068 = vpack.c.bf16 %v788, %v652
    %v1069 = vpack.c.bf16 %v789, %v653
    %v1070 = vpack.c.bf16 %v790, %v654
    %v1071 = vpack.c.bf16 %v791, %v655
    %v1072 = vpack.c.bf16 %v792, %v656
    %v1073 = vpack.c.bf16 %v793, %v657
    %v1074 = vpack.c.bf16 %v794, %v658
    %v1075 = vpack.c.bf16 %v1059, %v923
    %v1076 = vpack.c.bf16 %v1060, %v924
    %v1077 = vpack.c.bf16 %v1061, %v925
    %v1078 = vpack.c.bf16 %v1062, %v926
    %v1079 = vpack.c.bf16 %v1063, %v927
    %v1080 = vpack.c.bf16 %v1064, %v928
    %v1081 = vpack.c.bf16 %v1065, %v929
    %v1082 = vpack.c.bf16 %v1066, %v930
    %1085 = vrot.lane.b32.xlu0 %v427, 120
    %v1086 = vpop.permute.xlu0 %1085
    %1087 = vrot.lane.b32.xlu0 %v431, 120
    %v1088 = vpop.permute.xlu0 %1087
    %1091 = vrot.lane.b32.xlu0 %v427, 112
    %v1092 = vpop.permute.xlu0 %1091
    %1093 = vrot.lane.b32.xlu0 %v431, 112
    %v1094 = vpop.permute.xlu0 %1093
    %1097 = vrot.lane.b32.xlu0 %v427, 104
    %v1098 = vpop.permute.xlu0 %1097
    %1099 = vrot.lane.b32.xlu0 %v431, 104
    %v1100 = vpop.permute.xlu0 %1099
    %1103 = vrot.lane.b32.xlu0 %v427, 96
    %v1104 = vpop.permute.xlu0 %1103
    %1105 = vrot.lane.b32.xlu0 %v431, 96
    %v1106 = vpop.permute.xlu0 %1105
    %1109 = vrot.lane.b32.xlu0 %v427, 88
    %v1110 = vpop.permute.xlu0 %1109
    %1111 = vrot.lane.b32.xlu0 %v431, 88
    %v1112 = vpop.permute.xlu0 %1111
    %1115 = vrot.lane.b32.xlu0 %v427, 80
    %v1116 = vpop.permute.xlu0 %1115
    %1117 = vrot.lane.b32.xlu0 %v431, 80
    %v1118 = vpop.permute.xlu0 %1117
    %1121 = vrot.lane.b32.xlu0 %v427, 72
    %v1122 = vpop.permute.xlu0 %1121
    %1123 = vrot.lane.b32.xlu0 %v431, 72
    %v1124 = vpop.permute.xlu0 %1123
    %1127 = vrot.lane.b32.xlu0 %v427, 64
    %v1128 = vpop.permute.xlu0 %1127
    %1129 = vrot.lane.b32.xlu0 %v431, 64
    %v1130 = vpop.permute.xlu0 %1129
    %1133 = vrot.lane.b32.xlu0 %v427, 56
    %v1134 = vpop.permute.xlu0 %1133
    %1135 = vrot.lane.b32.xlu0 %v431, 56
    %v1136 = vpop.permute.xlu0 %1135
    %1139 = vrot.lane.b32.xlu0 %v427, 48
    %v1140 = vpop.permute.xlu0 %1139
    %1141 = vrot.lane.b32.xlu0 %v431, 48
    %v1142 = vpop.permute.xlu0 %1141
    %1145 = vrot.lane.b32.xlu0 %v427, 40
    %v1146 = vpop.permute.xlu0 %1145
    %1147 = vrot.lane.b32.xlu0 %v431, 40
    %v1148 = vpop.permute.xlu0 %1147
    %1151 = vrot.lane.b32.xlu0 %v427, 32
    %v1152 = vpop.permute.xlu0 %1151
    %1153 = vrot.lane.b32.xlu0 %v431, 32
    %v1154 = vpop.permute.xlu0 %1153
    %1157 = vrot.lane.b32.xlu0 %v427, 24
    %v1158 = vpop.permute.xlu0 %1157
    %1159 = vrot.lane.b32.xlu0 %v431, 24
    %v1160 = vpop.permute.xlu0 %1159
    %1163 = vrot.lane.b32.xlu0 %v427, 16
    %v1164 = vpop.permute.xlu0 %1163
    %1165 = vrot.lane.b32.xlu0 %v431, 16
    %v1166 = vpop.permute.xlu0 %1165
    %1169 = vrot.lane.b32.xlu0 %v427, 8
    %v1170 = vpop.permute.xlu0 %1169
    %1171 = vrot.lane.b32.xlu0 %v431, 8
    %v1172 = vpop.permute.xlu0 %1171
    %1177 = vrot.lane.b32.xlu0 %v429, 120
    %v1178 = vpop.permute.xlu0 %1177
    %1179 = vrot.lane.b32.xlu0 %v433, 120
    %v1180 = vpop.permute.xlu0 %1179
    %1183 = vrot.lane.b32.xlu0 %v429, 112
    %v1184 = vpop.permute.xlu0 %1183
    %1185 = vrot.lane.b32.xlu0 %v433, 112
    %v1186 = vpop.permute.xlu0 %1185
    %1189 = vrot.lane.b32.xlu0 %v429, 104
    %v1190 = vpop.permute.xlu0 %1189
    %1191 = vrot.lane.b32.xlu0 %v433, 104
    %v1192 = vpop.permute.xlu0 %1191
    %1195 = vrot.lane.b32.xlu0 %v429, 96
    %v1196 = vpop.permute.xlu0 %1195
    %1197 = vrot.lane.b32.xlu0 %v433, 96
    %v1198 = vpop.permute.xlu0 %1197
    %1201 = vrot.lane.b32.xlu0 %v429, 88
    %v1202 = vpop.permute.xlu0 %1201
    %1203 = vrot.lane.b32.xlu0 %v433, 88
    %v1204 = vpop.permute.xlu0 %1203
    %1207 = vrot.lane.b32.xlu0 %v429, 80
    %v1208 = vpop.permute.xlu0 %1207
    %1209 = vrot.lane.b32.xlu0 %v433, 80
    %v1210 = vpop.permute.xlu0 %1209
    %1213 = vrot.lane.b32.xlu0 %v429, 72
    %v1214 = vpop.permute.xlu0 %1213
    %1215 = vrot.lane.b32.xlu0 %v433, 72
    %v1216 = vpop.permute.xlu0 %1215
    %1219 = vrot.lane.b32.xlu0 %v429, 64
    %v1220 = vpop.permute.xlu0 %1219
    %1221 = vrot.lane.b32.xlu0 %v433, 64
    %v1222 = vpop.permute.xlu0 %1221
    %1225 = vrot.lane.b32.xlu0 %v429, 56
    %v1226 = vpop.permute.xlu0 %1225
    %1227 = vrot.lane.b32.xlu0 %v433, 56
    %v1228 = vpop.permute.xlu0 %1227
    %1231 = vrot.lane.b32.xlu0 %v429, 48
    %v1232 = vpop.permute.xlu0 %1231
    %1233 = vrot.lane.b32.xlu0 %v433, 48
    %v1234 = vpop.permute.xlu0 %1233
    %1237 = vrot.lane.b32.xlu0 %v429, 40
    %v1238 = vpop.permute.xlu0 %1237
    %1239 = vrot.lane.b32.xlu0 %v433, 40
    %v1240 = vpop.permute.xlu0 %1239
    %1243 = vrot.lane.b32.xlu0 %v429, 32
    %v1244 = vpop.permute.xlu0 %1243
    %1245 = vrot.lane.b32.xlu0 %v433, 32
    %v1246 = vpop.permute.xlu0 %1245
    %1249 = vrot.lane.b32.xlu0 %v429, 24
    %v1250 = vpop.permute.xlu0 %1249
    %1251 = vrot.lane.b32.xlu0 %v433, 24
    %v1252 = vpop.permute.xlu0 %1251
    %1255 = vrot.lane.b32.xlu0 %v429, 16
    %v1256 = vpop.permute.xlu0 %1255
    %1257 = vrot.lane.b32.xlu0 %v433, 16
    %v1258 = vpop.permute.xlu0 %1257
    %1261 = vrot.lane.b32.xlu0 %v429, 8
    %v1262 = vpop.permute.xlu0 %1261
    %1263 = vrot.lane.b32.xlu0 %v433, 8
    %v1264 = vpop.permute.xlu0 %1263
    %v1267 = vcombine.low %v427, %v1092
    %v1268 = vcombine.high %v427, %v1092
    %v1270 = vunpack.c.l.s4 1983009808
    %v1271 = vunpack.c.0.s8 %v1270
    %v1272 = vlaneseq
    %v1273 = vshrl.u32 %v1272, 7
    %v1274 = vsub.s32 %v1271, %v1273
    %v1275 = vrot.slane %v1267, %v1274
    %v1277 = vunpack.c.l.s4 1983009808
    %v1278 = vunpack.c.0.s8 %v1277
    %v1279 = vlaneseq
    %v1280 = vshrl.u32 %v1279, 7
    %v1281 = vsub.s32 %v1278, %v1280
    %v1282 = vrot.slane %v1268, %v1281
    %v1283 = vcombine.low %v1086, %v1098
    %v1284 = vcombine.high %v1086, %v1098
    %v1286 = vunpack.c.l.s4 1983009808
    %v1287 = vunpack.c.0.s8 %v1286
    %v1288 = vlaneseq
    %v1289 = vshrl.u32 %v1288, 7
    %v1290 = vsub.s32 %v1287, %v1289
    %v1291 = vrot.slane %v1283, %v1290
    %v1293 = vunpack.c.l.s4 1983009808
    %v1294 = vunpack.c.0.s8 %v1293
    %v1295 = vlaneseq
    %v1296 = vshrl.u32 %v1295, 7
    %v1297 = vsub.s32 %v1294, %v1296
    %v1298 = vrot.slane %v1284, %v1297
    %v1299 = vcombine.low %v1104, %v1116
    %v1300 = vcombine.high %v1104, %v1116
    %v1302 = vunpack.c.l.s4 1983009808
    %v1303 = vunpack.c.0.s8 %v1302
    %v1304 = vlaneseq
    %v1305 = vshrl.u32 %v1304, 7
    %v1306 = vsub.s32 %v1303, %v1305
    %v1307 = vrot.slane %v1299, %v1306
    %v1309 = vunpack.c.l.s4 1983009808
    %v1310 = vunpack.c.0.s8 %v1309
    %v1311 = vlaneseq
    %v1312 = vshrl.u32 %v1311, 7
    %v1313 = vsub.s32 %v1310, %v1312
    %v1314 = vrot.slane %v1300, %v1313
    %v1315 = vcombine.low %v1110, %v1122
    %v1316 = vcombine.high %v1110, %v1122
    %v1318 = vunpack.c.l.s4 1983009808
    %v1319 = vunpack.c.0.s8 %v1318
    %v1320 = vlaneseq
    %v1321 = vshrl.u32 %v1320, 7
    %v1322 = vsub.s32 %v1319, %v1321
    %v1323 = vrot.slane %v1315, %v1322
    %v1325 = vunpack.c.l.s4 1983009808
    %v1326 = vunpack.c.0.s8 %v1325
    %v1327 = vlaneseq
    %v1328 = vshrl.u32 %v1327, 7
    %v1329 = vsub.s32 %v1326, %v1328
    %v1330 = vrot.slane %v1316, %v1329
    %v1331 = vcombine.low %v1275, %v1291
    %v1332 = vcombine.high %v1275, %v1291
    %v1334 = vunpack.c.l.s4 1934713408
    %v1335 = vunpack.c.0.s8 %v1334
    %v1336 = vlaneseq
    %v1337 = vshrl.u32 %v1336, 7
    %v1338 = vsub.s32 %v1335, %v1337
    %v1339 = vrot.slane %v1331, %v1338
    %v1341 = vunpack.c.l.s4 1934713408
    %v1342 = vunpack.c.0.s8 %v1341
    %v1343 = vlaneseq
    %v1344 = vshrl.u32 %v1343, 7
    %v1345 = vsub.s32 %v1342, %v1344
    %v1346 = vrot.slane %v1332, %v1345
    %v1347 = vcombine.low %v1282, %v1298
    %v1348 = vcombine.high %v1282, %v1298
    %v1350 = vunpack.c.l.s4 1934713408
    %v1351 = vunpack.c.0.s8 %v1350
    %v1352 = vlaneseq
    %v1353 = vshrl.u32 %v1352, 7
    %v1354 = vsub.s32 %v1351, %v1353
    %v1355 = vrot.slane %v1347, %v1354
    %v1357 = vunpack.c.l.s4 1934713408
    %v1358 = vunpack.c.0.s8 %v1357
    %v1359 = vlaneseq
    %v1360 = vshrl.u32 %v1359, 7
    %v1361 = vsub.s32 %v1358, %v1360
    %v1362 = vrot.slane %v1348, %v1361
    %v1363 = vcombine.low %v1307, %v1323
    %v1364 = vcombine.high %v1307, %v1323
    %v1366 = vunpack.c.l.s4 1934713408
    %v1367 = vunpack.c.0.s8 %v1366
    %v1368 = vlaneseq
    %v1369 = vshrl.u32 %v1368, 7
    %v1370 = vsub.s32 %v1367, %v1369
    %v1371 = vrot.slane %v1363, %v1370
    %v1373 = vunpack.c.l.s4 1934713408
    %v1374 = vunpack.c.0.s8 %v1373
    %v1375 = vlaneseq
    %v1376 = vshrl.u32 %v1375, 7
    %v1377 = vsub.s32 %v1374, %v1376
    %v1378 = vrot.slane %v1364, %v1377
    %v1379 = vcombine.low %v1314, %v1330
    %v1380 = vcombine.high %v1314, %v1330
    %v1382 = vunpack.c.l.s4 1934713408
    %v1383 = vunpack.c.0.s8 %v1382
    %v1384 = vlaneseq
    %v1385 = vshrl.u32 %v1384, 7
    %v1386 = vsub.s32 %v1383, %v1385
    %v1387 = vrot.slane %v1379, %v1386
    %v1389 = vunpack.c.l.s4 1934713408
    %v1390 = vunpack.c.0.s8 %v1389
    %v1391 = vlaneseq
    %v1392 = vshrl.u32 %v1391, 7
    %v1393 = vsub.s32 %v1390, %v1392
    %v1394 = vrot.slane %v1380, %v1393
    %v1395 = vcombine.low %v1339, %v1371
    %v1396 = vcombine.high %v1339, %v1371
    %v1397 = vcombine.low %v1346, %v1378
    %v1398 = vcombine.high %v1346, %v1378
    %v1399 = vcombine.low %v1355, %v1387
    %v1400 = vcombine.high %v1355, %v1387
    %v1401 = vcombine.low %v1362, %v1394
    %v1402 = vcombine.high %v1362, %v1394
    %v1403 = vcombine.low %v1128, %v1140
    %v1404 = vcombine.high %v1128, %v1140
    %v1406 = vunpack.c.l.s4 1983009808
    %v1407 = vunpack.c.0.s8 %v1406
    %v1408 = vlaneseq
    %v1409 = vshrl.u32 %v1408, 7
    %v1410 = vsub.s32 %v1407, %v1409
    %v1411 = vrot.slane %v1403, %v1410
    %v1413 = vunpack.c.l.s4 1983009808
    %v1414 = vunpack.c.0.s8 %v1413
    %v1415 = vlaneseq
    %v1416 = vshrl.u32 %v1415, 7
    %v1417 = vsub.s32 %v1414, %v1416
    %v1418 = vrot.slane %v1404, %v1417
    %v1419 = vcombine.low %v1134, %v1146
    %v1420 = vcombine.high %v1134, %v1146
    %v1422 = vunpack.c.l.s4 1983009808
    %v1423 = vunpack.c.0.s8 %v1422
    %v1424 = vlaneseq
    %v1425 = vshrl.u32 %v1424, 7
    %v1426 = vsub.s32 %v1423, %v1425
    %v1427 = vrot.slane %v1419, %v1426
    %v1429 = vunpack.c.l.s4 1983009808
    %v1430 = vunpack.c.0.s8 %v1429
    %v1431 = vlaneseq
    %v1432 = vshrl.u32 %v1431, 7
    %v1433 = vsub.s32 %v1430, %v1432
    %v1434 = vrot.slane %v1420, %v1433
    %v1435 = vcombine.low %v1152, %v1164
    %v1436 = vcombine.high %v1152, %v1164
    %v1438 = vunpack.c.l.s4 1983009808
    %v1439 = vunpack.c.0.s8 %v1438
    %v1440 = vlaneseq
    %v1441 = vshrl.u32 %v1440, 7
    %v1442 = vsub.s32 %v1439, %v1441
    %v1443 = vrot.slane %v1435, %v1442
    %v1445 = vunpack.c.l.s4 1983009808
    %v1446 = vunpack.c.0.s8 %v1445
    %v1447 = vlaneseq
    %v1448 = vshrl.u32 %v1447, 7
    %v1449 = vsub.s32 %v1446, %v1448
    %v1450 = vrot.slane %v1436, %v1449
    %v1451 = vcombine.low %v1158, %v1170
    %v1452 = vcombine.high %v1158, %v1170
    %v1454 = vunpack.c.l.s4 1983009808
    %v1455 = vunpack.c.0.s8 %v1454
    %v1456 = vlaneseq
    %v1457 = vshrl.u32 %v1456, 7
    %v1458 = vsub.s32 %v1455, %v1457
    %v1459 = vrot.slane %v1451, %v1458
    %v1461 = vunpack.c.l.s4 1983009808
    %v1462 = vunpack.c.0.s8 %v1461
    %v1463 = vlaneseq
    %v1464 = vshrl.u32 %v1463, 7
    %v1465 = vsub.s32 %v1462, %v1464
    %v1466 = vrot.slane %v1452, %v1465
    %v1467 = vcombine.low %v1411, %v1427
    %v1468 = vcombine.high %v1411, %v1427
    %v1470 = vunpack.c.l.s4 1934713408
    %v1471 = vunpack.c.0.s8 %v1470
    %v1472 = vlaneseq
    %v1473 = vshrl.u32 %v1472, 7
    %v1474 = vsub.s32 %v1471, %v1473
    %v1475 = vrot.slane %v1467, %v1474
    %v1477 = vunpack.c.l.s4 1934713408
    %v1478 = vunpack.c.0.s8 %v1477
    %v1479 = vlaneseq
    %v1480 = vshrl.u32 %v1479, 7
    %v1481 = vsub.s32 %v1478, %v1480
    %v1482 = vrot.slane %v1468, %v1481
    %v1483 = vcombine.low %v1418, %v1434
    %v1484 = vcombine.high %v1418, %v1434
    %v1486 = vunpack.c.l.s4 1934713408
    %v1487 = vunpack.c.0.s8 %v1486
    %v1488 = vlaneseq
    %v1489 = vshrl.u32 %v1488, 7
    %v1490 = vsub.s32 %v1487, %v1489
    %v1491 = vrot.slane %v1483, %v1490
    %v1493 = vunpack.c.l.s4 1934713408
    %v1494 = vunpack.c.0.s8 %v1493
    %v1495 = vlaneseq
    %v1496 = vshrl.u32 %v1495, 7
    %v1497 = vsub.s32 %v1494, %v1496
    %v1498 = vrot.slane %v1484, %v1497
    %v1499 = vcombine.low %v1443, %v1459
    %v1500 = vcombine.high %v1443, %v1459
    %v1502 = vunpack.c.l.s4 1934713408
    %v1503 = vunpack.c.0.s8 %v1502
    %v1504 = vlaneseq
    %v1505 = vshrl.u32 %v1504, 7
    %v1506 = vsub.s32 %v1503, %v1505
    %v1507 = vrot.slane %v1499, %v1506
    %v1509 = vunpack.c.l.s4 1934713408
    %v1510 = vunpack.c.0.s8 %v1509
    %v1511 = vlaneseq
    %v1512 = vshrl.u32 %v1511, 7
    %v1513 = vsub.s32 %v1510, %v1512
    %v1514 = vrot.slane %v1500, %v1513
    %v1515 = vcombine.low %v1450, %v1466
    %v1516 = vcombine.high %v1450, %v1466
    %v1518 = vunpack.c.l.s4 1934713408
    %v1519 = vunpack.c.0.s8 %v1518
    %v1520 = vlaneseq
    %v1521 = vshrl.u32 %v1520, 7
    %v1522 = vsub.s32 %v1519, %v1521
    %v1523 = vrot.slane %v1515, %v1522
    %v1525 = vunpack.c.l.s4 1934713408
    %v1526 = vunpack.c.0.s8 %v1525
    %v1527 = vlaneseq
    %v1528 = vshrl.u32 %v1527, 7
    %v1529 = vsub.s32 %v1526, %v1528
    %v1530 = vrot.slane %v1516, %v1529
    %v1531 = vcombine.low %v1475, %v1507
    %v1532 = vcombine.high %v1475, %v1507
    %v1533 = vcombine.low %v1482, %v1514
    %v1534 = vcombine.high %v1482, %v1514
    %v1535 = vcombine.low %v1491, %v1523
    %v1536 = vcombine.high %v1491, %v1523
    %v1537 = vcombine.low %v1498, %v1530
    %v1538 = vcombine.high %v1498, %v1530
    %v1539 = vcombine.low %v429, %v1184
    %v1540 = vcombine.high %v429, %v1184
    %v1542 = vunpack.c.l.s4 1983009808
    %v1543 = vunpack.c.0.s8 %v1542
    %v1544 = vlaneseq
    %v1545 = vshrl.u32 %v1544, 7
    %v1546 = vsub.s32 %v1543, %v1545
    %v1547 = vrot.slane %v1539, %v1546
    %v1549 = vunpack.c.l.s4 1983009808
    %v1550 = vunpack.c.0.s8 %v1549
    %v1551 = vlaneseq
    %v1552 = vshrl.u32 %v1551, 7
    %v1553 = vsub.s32 %v1550, %v1552
    %v1554 = vrot.slane %v1540, %v1553
    %v1555 = vcombine.low %v1178, %v1190
    %v1556 = vcombine.high %v1178, %v1190
    %v1558 = vunpack.c.l.s4 1983009808
    %v1559 = vunpack.c.0.s8 %v1558
    %v1560 = vlaneseq
    %v1561 = vshrl.u32 %v1560, 7
    %v1562 = vsub.s32 %v1559, %v1561
    %v1563 = vrot.slane %v1555, %v1562
    %v1565 = vunpack.c.l.s4 1983009808
    %v1566 = vunpack.c.0.s8 %v1565
    %v1567 = vlaneseq
    %v1568 = vshrl.u32 %v1567, 7
    %v1569 = vsub.s32 %v1566, %v1568
    %v1570 = vrot.slane %v1556, %v1569
    %v1571 = vcombine.low %v1196, %v1208
    %v1572 = vcombine.high %v1196, %v1208
    %v1574 = vunpack.c.l.s4 1983009808
    %v1575 = vunpack.c.0.s8 %v1574
    %v1576 = vlaneseq
    %v1577 = vshrl.u32 %v1576, 7
    %v1578 = vsub.s32 %v1575, %v1577
    %v1579 = vrot.slane %v1571, %v1578
    %v1581 = vunpack.c.l.s4 1983009808
    %v1582 = vunpack.c.0.s8 %v1581
    %v1583 = vlaneseq
    %v1584 = vshrl.u32 %v1583, 7
    %v1585 = vsub.s32 %v1582, %v1584
    %v1586 = vrot.slane %v1572, %v1585
    %v1587 = vcombine.low %v1202, %v1214
    %v1588 = vcombine.high %v1202, %v1214
    %v1590 = vunpack.c.l.s4 1983009808
    %v1591 = vunpack.c.0.s8 %v1590
    %v1592 = vlaneseq
    %v1593 = vshrl.u32 %v1592, 7
    %v1594 = vsub.s32 %v1591, %v1593
    %v1595 = vrot.slane %v1587, %v1594
    %v1597 = vunpack.c.l.s4 1983009808
    %v1598 = vunpack.c.0.s8 %v1597
    %v1599 = vlaneseq
    %v1600 = vshrl.u32 %v1599, 7
    %v1601 = vsub.s32 %v1598, %v1600
    %v1602 = vrot.slane %v1588, %v1601
    %v1603 = vcombine.low %v1547, %v1563
    %v1604 = vcombine.high %v1547, %v1563
    %v1606 = vunpack.c.l.s4 1934713408
    %v1607 = vunpack.c.0.s8 %v1606
    %v1608 = vlaneseq
    %v1609 = vshrl.u32 %v1608, 7
    %v1610 = vsub.s32 %v1607, %v1609
    %v1611 = vrot.slane %v1603, %v1610
    %v1613 = vunpack.c.l.s4 1934713408
    %v1614 = vunpack.c.0.s8 %v1613
    %v1615 = vlaneseq
    %v1616 = vshrl.u32 %v1615, 7
    %v1617 = vsub.s32 %v1614, %v1616
    %v1618 = vrot.slane %v1604, %v1617
    %v1619 = vcombine.low %v1554, %v1570
    %v1620 = vcombine.high %v1554, %v1570
    %v1622 = vunpack.c.l.s4 1934713408
    %v1623 = vunpack.c.0.s8 %v1622
    %v1624 = vlaneseq
    %v1625 = vshrl.u32 %v1624, 7
    %v1626 = vsub.s32 %v1623, %v1625
    %v1627 = vrot.slane %v1619, %v1626
    %v1629 = vunpack.c.l.s4 1934713408
    %v1630 = vunpack.c.0.s8 %v1629
    %v1631 = vlaneseq
    %v1632 = vshrl.u32 %v1631, 7
    %v1633 = vsub.s32 %v1630, %v1632
    %v1634 = vrot.slane %v1620, %v1633
    %v1635 = vcombine.low %v1579, %v1595
    %v1636 = vcombine.high %v1579, %v1595
    %v1638 = vunpack.c.l.s4 1934713408
    %v1639 = vunpack.c.0.s8 %v1638
    %v1640 = vlaneseq
    %v1641 = vshrl.u32 %v1640, 7
    %v1642 = vsub.s32 %v1639, %v1641
    %v1643 = vrot.slane %v1635, %v1642
    %v1645 = vunpack.c.l.s4 1934713408
    %v1646 = vunpack.c.0.s8 %v1645
    %v1647 = vlaneseq
    %v1648 = vshrl.u32 %v1647, 7
    %v1649 = vsub.s32 %v1646, %v1648
    %v1650 = vrot.slane %v1636, %v1649
    %v1651 = vcombine.low %v1586, %v1602
    %v1652 = vcombine.high %v1586, %v1602
    %v1654 = vunpack.c.l.s4 1934713408
    %v1655 = vunpack.c.0.s8 %v1654
    %v1656 = vlaneseq
    %v1657 = vshrl.u32 %v1656, 7
    %v1658 = vsub.s32 %v1655, %v1657
    %v1659 = vrot.slane %v1651, %v1658
    %v1661 = vunpack.c.l.s4 1934713408
    %v1662 = vunpack.c.0.s8 %v1661
    %v1663 = vlaneseq
    %v1664 = vshrl.u32 %v1663, 7
    %v1665 = vsub.s32 %v1662, %v1664
    %v1666 = vrot.slane %v1652, %v1665
    %v1667 = vcombine.low %v1611, %v1643
    %v1668 = vcombine.high %v1611, %v1643
    %v1669 = vcombine.low %v1618, %v1650
    %v1670 = vcombine.high %v1618, %v1650
    %v1671 = vcombine.low %v1627, %v1659
    %v1672 = vcombine.high %v1627, %v1659
    %v1673 = vcombine.low %v1634, %v1666
    %v1674 = vcombine.high %v1634, %v1666
    %v1675 = vcombine.low %v1220, %v1232
    %v1676 = vcombine.high %v1220, %v1232
    %v1678 = vunpack.c.l.s4 1983009808
    %v1679 = vunpack.c.0.s8 %v1678
    %v1680 = vlaneseq
    %v1681 = vshrl.u32 %v1680, 7
    %v1682 = vsub.s32 %v1679, %v1681
    %v1683 = vrot.slane %v1675, %v1682
    %v1685 = vunpack.c.l.s4 1983009808
    %v1686 = vunpack.c.0.s8 %v1685
    %v1687 = vlaneseq
    %v1688 = vshrl.u32 %v1687, 7
    %v1689 = vsub.s32 %v1686, %v1688
    %v1690 = vrot.slane %v1676, %v1689
    %v1691 = vcombine.low %v1226, %v1238
    %v1692 = vcombine.high %v1226, %v1238
    %v1694 = vunpack.c.l.s4 1983009808
    %v1695 = vunpack.c.0.s8 %v1694
    %v1696 = vlaneseq
    %v1697 = vshrl.u32 %v1696, 7
    %v1698 = vsub.s32 %v1695, %v1697
    %v1699 = vrot.slane %v1691, %v1698
    %v1701 = vunpack.c.l.s4 1983009808
    %v1702 = vunpack.c.0.s8 %v1701
    %v1703 = vlaneseq
    %v1704 = vshrl.u32 %v1703, 7
    %v1705 = vsub.s32 %v1702, %v1704
    %v1706 = vrot.slane %v1692, %v1705
    %v1707 = vcombine.low %v1244, %v1256
    %v1708 = vcombine.high %v1244, %v1256
    %v1710 = vunpack.c.l.s4 1983009808
    %v1711 = vunpack.c.0.s8 %v1710
    %v1712 = vlaneseq
    %v1713 = vshrl.u32 %v1712, 7
    %v1714 = vsub.s32 %v1711, %v1713
    %v1715 = vrot.slane %v1707, %v1714
    %v1717 = vunpack.c.l.s4 1983009808
    %v1718 = vunpack.c.0.s8 %v1717
    %v1719 = vlaneseq
    %v1720 = vshrl.u32 %v1719, 7
    %v1721 = vsub.s32 %v1718, %v1720
    %v1722 = vrot.slane %v1708, %v1721
    %v1723 = vcombine.low %v1250, %v1262
    %v1724 = vcombine.high %v1250, %v1262
    %v1726 = vunpack.c.l.s4 1983009808
    %v1727 = vunpack.c.0.s8 %v1726
    %v1728 = vlaneseq
    %v1729 = vshrl.u32 %v1728, 7
    %v1730 = vsub.s32 %v1727, %v1729
    %v1731 = vrot.slane %v1723, %v1730
    %v1733 = vunpack.c.l.s4 1983009808
    %v1734 = vunpack.c.0.s8 %v1733
    %v1735 = vlaneseq
    %v1736 = vshrl.u32 %v1735, 7
    %v1737 = vsub.s32 %v1734, %v1736
    %v1738 = vrot.slane %v1724, %v1737
    %v1739 = vcombine.low %v1683, %v1699
    %v1740 = vcombine.high %v1683, %v1699
    %v1742 = vunpack.c.l.s4 1934713408
    %v1743 = vunpack.c.0.s8 %v1742
    %v1744 = vlaneseq
    %v1745 = vshrl.u32 %v1744, 7
    %v1746 = vsub.s32 %v1743, %v1745
    %v1747 = vrot.slane %v1739, %v1746
    %v1749 = vunpack.c.l.s4 1934713408
    %v1750 = vunpack.c.0.s8 %v1749
    %v1751 = vlaneseq
    %v1752 = vshrl.u32 %v1751, 7
    %v1753 = vsub.s32 %v1750, %v1752
    %v1754 = vrot.slane %v1740, %v1753
    %v1755 = vcombine.low %v1690, %v1706
    %v1756 = vcombine.high %v1690, %v1706
    %v1758 = vunpack.c.l.s4 1934713408
    %v1759 = vunpack.c.0.s8 %v1758
    %v1760 = vlaneseq
    %v1761 = vshrl.u32 %v1760, 7
    %v1762 = vsub.s32 %v1759, %v1761
    %v1763 = vrot.slane %v1755, %v1762
    %v1765 = vunpack.c.l.s4 1934713408
    %v1766 = vunpack.c.0.s8 %v1765
    %v1767 = vlaneseq
    %v1768 = vshrl.u32 %v1767, 7
    %v1769 = vsub.s32 %v1766, %v1768
    %v1770 = vrot.slane %v1756, %v1769
    %v1771 = vcombine.low %v1715, %v1731
    %v1772 = vcombine.high %v1715, %v1731
    %v1774 = vunpack.c.l.s4 1934713408
    %v1775 = vunpack.c.0.s8 %v1774
    %v1776 = vlaneseq
    %v1777 = vshrl.u32 %v1776, 7
    %v1778 = vsub.s32 %v1775, %v1777
    %v1779 = vrot.slane %v1771, %v1778
    %v1781 = vunpack.c.l.s4 1934713408
    %v1782 = vunpack.c.0.s8 %v1781
    %v1783 = vlaneseq
    %v1784 = vshrl.u32 %v1783, 7
    %v1785 = vsub.s32 %v1782, %v1784
    %v1786 = vrot.slane %v1772, %v1785
    %v1787 = vcombine.low %v1722, %v1738
    %v1788 = vcombine.high %v1722, %v1738
    %v1790 = vunpack.c.l.s4 1934713408
    %v1791 = vunpack.c.0.s8 %v1790
    %v1792 = vlaneseq
    %v1793 = vshrl.u32 %v1792, 7
    %v1794 = vsub.s32 %v1791, %v1793
    %v1795 = vrot.slane %v1787, %v1794
    %v1797 = vunpack.c.l.s4 1934713408
    %v1798 = vunpack.c.0.s8 %v1797
    %v1799 = vlaneseq
    %v1800 = vshrl.u32 %v1799, 7
    %v1801 = vsub.s32 %v1798, %v1800
    %v1802 = vrot.slane %v1788, %v1801
    %v1803 = vcombine.low %v1747, %v1779
    %v1804 = vcombine.high %v1747, %v1779
    %v1805 = vcombine.low %v1754, %v1786
    %v1806 = vcombine.high %v1754, %v1786
    %v1807 = vcombine.low %v1763, %v1795
    %v1808 = vcombine.high %v1763, %v1795
    %v1809 = vcombine.low %v1770, %v1802
    %v1810 = vcombine.high %v1770, %v1802
    %v1811 = vcombine.low %v431, %v1094
    %v1812 = vcombine.high %v431, %v1094
    %v1814 = vunpack.c.l.s4 1983009808
    %v1815 = vunpack.c.0.s8 %v1814
    %v1816 = vlaneseq
    %v1817 = vshrl.u32 %v1816, 7
    %v1818 = vsub.s32 %v1815, %v1817
    %v1819 = vrot.slane %v1811, %v1818
    %v1821 = vunpack.c.l.s4 1983009808
    %v1822 = vunpack.c.0.s8 %v1821
    %v1823 = vlaneseq
    %v1824 = vshrl.u32 %v1823, 7
    %v1825 = vsub.s32 %v1822, %v1824
    %v1826 = vrot.slane %v1812, %v1825
    %v1827 = vcombine.low %v1088, %v1100
    %v1828 = vcombine.high %v1088, %v1100
    %v1830 = vunpack.c.l.s4 1983009808
    %v1831 = vunpack.c.0.s8 %v1830
    %v1832 = vlaneseq
    %v1833 = vshrl.u32 %v1832, 7
    %v1834 = vsub.s32 %v1831, %v1833
    %v1835 = vrot.slane %v1827, %v1834
    %v1837 = vunpack.c.l.s4 1983009808
    %v1838 = vunpack.c.0.s8 %v1837
    %v1839 = vlaneseq
    %v1840 = vshrl.u32 %v1839, 7
    %v1841 = vsub.s32 %v1838, %v1840
    %v1842 = vrot.slane %v1828, %v1841
    %v1843 = vcombine.low %v1106, %v1118
    %v1844 = vcombine.high %v1106, %v1118
    %v1846 = vunpack.c.l.s4 1983009808
    %v1847 = vunpack.c.0.s8 %v1846
    %v1848 = vlaneseq
    %v1849 = vshrl.u32 %v1848, 7
    %v1850 = vsub.s32 %v1847, %v1849
    %v1851 = vrot.slane %v1843, %v1850
    %v1853 = vunpack.c.l.s4 1983009808
    %v1854 = vunpack.c.0.s8 %v1853
    %v1855 = vlaneseq
    %v1856 = vshrl.u32 %v1855, 7
    %v1857 = vsub.s32 %v1854, %v1856
    %v1858 = vrot.slane %v1844, %v1857
    %v1859 = vcombine.low %v1112, %v1124
    %v1860 = vcombine.high %v1112, %v1124
    %v1862 = vunpack.c.l.s4 1983009808
    %v1863 = vunpack.c.0.s8 %v1862
    %v1864 = vlaneseq
    %v1865 = vshrl.u32 %v1864, 7
    %v1866 = vsub.s32 %v1863, %v1865
    %v1867 = vrot.slane %v1859, %v1866
    %v1869 = vunpack.c.l.s4 1983009808
    %v1870 = vunpack.c.0.s8 %v1869
    %v1871 = vlaneseq
    %v1872 = vshrl.u32 %v1871, 7
    %v1873 = vsub.s32 %v1870, %v1872
    %v1874 = vrot.slane %v1860, %v1873
    %v1875 = vcombine.low %v1819, %v1835
    %v1876 = vcombine.high %v1819, %v1835
    %v1878 = vunpack.c.l.s4 1934713408
    %v1879 = vunpack.c.0.s8 %v1878
    %v1880 = vlaneseq
    %v1881 = vshrl.u32 %v1880, 7
    %v1882 = vsub.s32 %v1879, %v1881
    %v1883 = vrot.slane %v1875, %v1882
    %v1885 = vunpack.c.l.s4 1934713408
    %v1886 = vunpack.c.0.s8 %v1885
    %v1887 = vlaneseq
    %v1888 = vshrl.u32 %v1887, 7
    %v1889 = vsub.s32 %v1886, %v1888
    %v1890 = vrot.slane %v1876, %v1889
    %v1891 = vcombine.low %v1826, %v1842
    %v1892 = vcombine.high %v1826, %v1842
    %v1894 = vunpack.c.l.s4 1934713408
    %v1895 = vunpack.c.0.s8 %v1894
    %v1896 = vlaneseq
    %v1897 = vshrl.u32 %v1896, 7
    %v1898 = vsub.s32 %v1895, %v1897
    %v1899 = vrot.slane %v1891, %v1898
    %v1901 = vunpack.c.l.s4 1934713408
    %v1902 = vunpack.c.0.s8 %v1901
    %v1903 = vlaneseq
    %v1904 = vshrl.u32 %v1903, 7
    %v1905 = vsub.s32 %v1902, %v1904
    %v1906 = vrot.slane %v1892, %v1905
    %v1907 = vcombine.low %v1851, %v1867
    %v1908 = vcombine.high %v1851, %v1867
    %v1910 = vunpack.c.l.s4 1934713408
    %v1911 = vunpack.c.0.s8 %v1910
    %v1912 = vlaneseq
    %v1913 = vshrl.u32 %v1912, 7
    %v1914 = vsub.s32 %v1911, %v1913
    %v1915 = vrot.slane %v1907, %v1914
    %v1917 = vunpack.c.l.s4 1934713408
    %v1918 = vunpack.c.0.s8 %v1917
    %v1919 = vlaneseq
    %v1920 = vshrl.u32 %v1919, 7
    %v1921 = vsub.s32 %v1918, %v1920
    %v1922 = vrot.slane %v1908, %v1921
    %v1923 = vcombine.low %v1858, %v1874
    %v1924 = vcombine.high %v1858, %v1874
    %v1926 = vunpack.c.l.s4 1934713408
    %v1927 = vunpack.c.0.s8 %v1926
    %v1928 = vlaneseq
    %v1929 = vshrl.u32 %v1928, 7
    %v1930 = vsub.s32 %v1927, %v1929
    %v1931 = vrot.slane %v1923, %v1930
    %v1933 = vunpack.c.l.s4 1934713408
    %v1934 = vunpack.c.0.s8 %v1933
    %v1935 = vlaneseq
    %v1936 = vshrl.u32 %v1935, 7
    %v1937 = vsub.s32 %v1934, %v1936
    %v1938 = vrot.slane %v1924, %v1937
    %v1939 = vcombine.low %v1883, %v1915
    %v1940 = vcombine.high %v1883, %v1915
    %v1941 = vcombine.low %v1890, %v1922
    %v1942 = vcombine.high %v1890, %v1922
    %v1943 = vcombine.low %v1899, %v1931
    %v1944 = vcombine.high %v1899, %v1931
    %v1945 = vcombine.low %v1906, %v1938
    %v1946 = vcombine.high %v1906, %v1938
    %v1947 = vcombine.low %v1130, %v1142
    %v1948 = vcombine.high %v1130, %v1142
    %v1950 = vunpack.c.l.s4 1983009808
    %v1951 = vunpack.c.0.s8 %v1950
    %v1952 = vlaneseq
    %v1953 = vshrl.u32 %v1952, 7
    %v1954 = vsub.s32 %v1951, %v1953
    %v1955 = vrot.slane %v1947, %v1954
    %v1957 = vunpack.c.l.s4 1983009808
    %v1958 = vunpack.c.0.s8 %v1957
    %v1959 = vlaneseq
    %v1960 = vshrl.u32 %v1959, 7
    %v1961 = vsub.s32 %v1958, %v1960
    %v1962 = vrot.slane %v1948, %v1961
    %v1963 = vcombine.low %v1136, %v1148
    %v1964 = vcombine.high %v1136, %v1148
    %v1966 = vunpack.c.l.s4 1983009808
    %v1967 = vunpack.c.0.s8 %v1966
    %v1968 = vlaneseq
    %v1969 = vshrl.u32 %v1968, 7
    %v1970 = vsub.s32 %v1967, %v1969
    %v1971 = vrot.slane %v1963, %v1970
    %v1973 = vunpack.c.l.s4 1983009808
    %v1974 = vunpack.c.0.s8 %v1973
    %v1975 = vlaneseq
    %v1976 = vshrl.u32 %v1975, 7
    %v1977 = vsub.s32 %v1974, %v1976
    %v1978 = vrot.slane %v1964, %v1977
    %v1979 = vcombine.low %v1154, %v1166
    %v1980 = vcombine.high %v1154, %v1166
    %v1982 = vunpack.c.l.s4 1983009808
    %v1983 = vunpack.c.0.s8 %v1982
    %v1984 = vlaneseq
    %v1985 = vshrl.u32 %v1984, 7
    %v1986 = vsub.s32 %v1983, %v1985
    %v1987 = vrot.slane %v1979, %v1986
    %v1989 = vunpack.c.l.s4 1983009808
    %v1990 = vunpack.c.0.s8 %v1989
    %v1991 = vlaneseq
    %v1992 = vshrl.u32 %v1991, 7
    %v1993 = vsub.s32 %v1990, %v1992
    %v1994 = vrot.slane %v1980, %v1993
    %v1995 = vcombine.low %v1160, %v1172
    %v1996 = vcombine.high %v1160, %v1172
    %v1998 = vunpack.c.l.s4 1983009808
    %v1999 = vunpack.c.0.s8 %v1998
    %v2000 = vlaneseq
    %v2001 = vshrl.u32 %v2000, 7
    %v2002 = vsub.s32 %v1999, %v2001
    %v2003 = vrot.slane %v1995, %v2002
    %v2005 = vunpack.c.l.s4 1983009808
    %v2006 = vunpack.c.0.s8 %v2005
    %v2007 = vlaneseq
    %v2008 = vshrl.u32 %v2007, 7
    %v2009 = vsub.s32 %v2006, %v2008
    %v2010 = vrot.slane %v1996, %v2009
    %v2011 = vcombine.low %v1955, %v1971
    %v2012 = vcombine.high %v1955, %v1971
    %v2014 = vunpack.c.l.s4 1934713408
    %v2015 = vunpack.c.0.s8 %v2014
    %v2016 = vlaneseq
    %v2017 = vshrl.u32 %v2016, 7
    %v2018 = vsub.s32 %v2015, %v2017
    %v2019 = vrot.slane %v2011, %v2018
    %v2021 = vunpack.c.l.s4 1934713408
    %v2022 = vunpack.c.0.s8 %v2021
    %v2023 = vlaneseq
    %v2024 = vshrl.u32 %v2023, 7
    %v2025 = vsub.s32 %v2022, %v2024
    %v2026 = vrot.slane %v2012, %v2025
    %v2027 = vcombine.low %v1962, %v1978
    %v2028 = vcombine.high %v1962, %v1978
    %v2030 = vunpack.c.l.s4 1934713408
    %v2031 = vunpack.c.0.s8 %v2030
    %v2032 = vlaneseq
    %v2033 = vshrl.u32 %v2032, 7
    %v2034 = vsub.s32 %v2031, %v2033
    %v2035 = vrot.slane %v2027, %v2034
    %v2037 = vunpack.c.l.s4 1934713408
    %v2038 = vunpack.c.0.s8 %v2037
    %v2039 = vlaneseq
    %v2040 = vshrl.u32 %v2039, 7
    %v2041 = vsub.s32 %v2038, %v2040
    %v2042 = vrot.slane %v2028, %v2041
    %v2043 = vcombine.low %v1987, %v2003
    %v2044 = vcombine.high %v1987, %v2003
    %v2046 = vunpack.c.l.s4 1934713408
    %v2047 = vunpack.c.0.s8 %v2046
    %v2048 = vlaneseq
    %v2049 = vshrl.u32 %v2048, 7
    %v2050 = vsub.s32 %v2047, %v2049
    %v2051 = vrot.slane %v2043, %v2050
    %v2053 = vunpack.c.l.s4 1934713408
    %v2054 = vunpack.c.0.s8 %v2053
    %v2055 = vlaneseq
    %v2056 = vshrl.u32 %v2055, 7
    %v2057 = vsub.s32 %v2054, %v2056
    %v2058 = vrot.slane %v2044, %v2057
    %v2059 = vcombine.low %v1994, %v2010
    %v2060 = vcombine.high %v1994, %v2010
    %v2062 = vunpack.c.l.s4 1934713408
    %v2063 = vunpack.c.0.s8 %v2062
    %v2064 = vlaneseq
    %v2065 = vshrl.u32 %v2064, 7
    %v2066 = vsub.s32 %v2063, %v2065
    %v2067 = vrot.slane %v2059, %v2066
    %v2069 = vunpack.c.l.s4 1934713408
    %v2070 = vunpack.c.0.s8 %v2069
    %v2071 = vlaneseq
    %v2072 = vshrl.u32 %v2071, 7
    %v2073 = vsub.s32 %v2070, %v2072
    %v2074 = vrot.slane %v2060, %v2073
    %v2075 = vcombine.low %v2019, %v2051
    %v2076 = vcombine.high %v2019, %v2051
    %v2077 = vcombine.low %v2026, %v2058
    %v2078 = vcombine.high %v2026, %v2058
    %v2079 = vcombine.low %v2035, %v2067
    %v2080 = vcombine.high %v2035, %v2067
    %v2081 = vcombine.low %v2042, %v2074
    %v2082 = vcombine.high %v2042, %v2074
    %v2083 = vcombine.low %v433, %v1186
    %v2084 = vcombine.high %v433, %v1186
    %v2086 = vunpack.c.l.s4 1983009808
    %v2087 = vunpack.c.0.s8 %v2086
    %v2088 = vlaneseq
    %v2089 = vshrl.u32 %v2088, 7
    %v2090 = vsub.s32 %v2087, %v2089
    %v2091 = vrot.slane %v2083, %v2090
    %v2093 = vunpack.c.l.s4 1983009808
    %v2094 = vunpack.c.0.s8 %v2093
    %v2095 = vlaneseq
    %v2096 = vshrl.u32 %v2095, 7
    %v2097 = vsub.s32 %v2094, %v2096
    %v2098 = vrot.slane %v2084, %v2097
    %v2099 = vcombine.low %v1180, %v1192
    %v2100 = vcombine.high %v1180, %v1192
    %v2102 = vunpack.c.l.s4 1983009808
    %v2103 = vunpack.c.0.s8 %v2102
    %v2104 = vlaneseq
    %v2105 = vshrl.u32 %v2104, 7
    %v2106 = vsub.s32 %v2103, %v2105
    %v2107 = vrot.slane %v2099, %v2106
    %v2109 = vunpack.c.l.s4 1983009808
    %v2110 = vunpack.c.0.s8 %v2109
    %v2111 = vlaneseq
    %v2112 = vshrl.u32 %v2111, 7
    %v2113 = vsub.s32 %v2110, %v2112
    %v2114 = vrot.slane %v2100, %v2113
    %v2115 = vcombine.low %v1198, %v1210
    %v2116 = vcombine.high %v1198, %v1210
    %v2118 = vunpack.c.l.s4 1983009808
    %v2119 = vunpack.c.0.s8 %v2118
    %v2120 = vlaneseq
    %v2121 = vshrl.u32 %v2120, 7
    %v2122 = vsub.s32 %v2119, %v2121
    %v2123 = vrot.slane %v2115, %v2122
    %v2125 = vunpack.c.l.s4 1983009808
    %v2126 = vunpack.c.0.s8 %v2125
    %v2127 = vlaneseq
    %v2128 = vshrl.u32 %v2127, 7
    %v2129 = vsub.s32 %v2126, %v2128
    %v2130 = vrot.slane %v2116, %v2129
    %v2131 = vcombine.low %v1204, %v1216
    %v2132 = vcombine.high %v1204, %v1216
    %v2134 = vunpack.c.l.s4 1983009808
    %v2135 = vunpack.c.0.s8 %v2134
    %v2136 = vlaneseq
    %v2137 = vshrl.u32 %v2136, 7
    %v2138 = vsub.s32 %v2135, %v2137
    %v2139 = vrot.slane %v2131, %v2138
    %v2141 = vunpack.c.l.s4 1983009808
    %v2142 = vunpack.c.0.s8 %v2141
    %v2143 = vlaneseq
    %v2144 = vshrl.u32 %v2143, 7
    %v2145 = vsub.s32 %v2142, %v2144
    %v2146 = vrot.slane %v2132, %v2145
    %v2147 = vcombine.low %v2091, %v2107
    %v2148 = vcombine.high %v2091, %v2107
    %v2150 = vunpack.c.l.s4 1934713408
    %v2151 = vunpack.c.0.s8 %v2150
    %v2152 = vlaneseq
    %v2153 = vshrl.u32 %v2152, 7
    %v2154 = vsub.s32 %v2151, %v2153
    %v2155 = vrot.slane %v2147, %v2154
    %v2157 = vunpack.c.l.s4 1934713408
    %v2158 = vunpack.c.0.s8 %v2157
    %v2159 = vlaneseq
    %v2160 = vshrl.u32 %v2159, 7
    %v2161 = vsub.s32 %v2158, %v2160
    %v2162 = vrot.slane %v2148, %v2161
    %v2163 = vcombine.low %v2098, %v2114
    %v2164 = vcombine.high %v2098, %v2114
    %v2166 = vunpack.c.l.s4 1934713408
    %v2167 = vunpack.c.0.s8 %v2166
    %v2168 = vlaneseq
    %v2169 = vshrl.u32 %v2168, 7
    %v2170 = vsub.s32 %v2167, %v2169
    %v2171 = vrot.slane %v2163, %v2170
    %v2173 = vunpack.c.l.s4 1934713408
    %v2174 = vunpack.c.0.s8 %v2173
    %v2175 = vlaneseq
    %v2176 = vshrl.u32 %v2175, 7
    %v2177 = vsub.s32 %v2174, %v2176
    %v2178 = vrot.slane %v2164, %v2177
    %v2179 = vcombine.low %v2123, %v2139
    %v2180 = vcombine.high %v2123, %v2139
    %v2182 = vunpack.c.l.s4 1934713408
    %v2183 = vunpack.c.0.s8 %v2182
    %v2184 = vlaneseq
    %v2185 = vshrl.u32 %v2184, 7
    %v2186 = vsub.s32 %v2183, %v2185
    %v2187 = vrot.slane %v2179, %v2186
    %v2189 = vunpack.c.l.s4 1934713408
    %v2190 = vunpack.c.0.s8 %v2189
    %v2191 = vlaneseq
    %v2192 = vshrl.u32 %v2191, 7
    %v2193 = vsub.s32 %v2190, %v2192
    %v2194 = vrot.slane %v2180, %v2193
    %v2195 = vcombine.low %v2130, %v2146
    %v2196 = vcombine.high %v2130, %v2146
    %v2198 = vunpack.c.l.s4 1934713408
    %v2199 = vunpack.c.0.s8 %v2198
    %v2200 = vlaneseq
    %v2201 = vshrl.u32 %v2200, 7
    %v2202 = vsub.s32 %v2199, %v2201
    %v2203 = vrot.slane %v2195, %v2202
    %v2205 = vunpack.c.l.s4 1934713408
    %v2206 = vunpack.c.0.s8 %v2205
    %v2207 = vlaneseq
    %v2208 = vshrl.u32 %v2207, 7
    %v2209 = vsub.s32 %v2206, %v2208
    %v2210 = vrot.slane %v2196, %v2209
    %v2211 = vcombine.low %v2155, %v2187
    %v2212 = vcombine.high %v2155, %v2187
    %v2213 = vcombine.low %v2162, %v2194
    %v2214 = vcombine.high %v2162, %v2194
    %v2215 = vcombine.low %v2171, %v2203
    %v2216 = vcombine.high %v2171, %v2203
    %v2217 = vcombine.low %v2178, %v2210
    %v2218 = vcombine.high %v2178, %v2210
    %v2219 = vcombine.low %v1222, %v1234
    %v2220 = vcombine.high %v1222, %v1234
    %v2222 = vunpack.c.l.s4 1983009808
    %v2223 = vunpack.c.0.s8 %v2222
    %v2224 = vlaneseq
    %v2225 = vshrl.u32 %v2224, 7
    %v2226 = vsub.s32 %v2223, %v2225
    %v2227 = vrot.slane %v2219, %v2226
    %v2229 = vunpack.c.l.s4 1983009808
    %v2230 = vunpack.c.0.s8 %v2229
    %v2231 = vlaneseq
    %v2232 = vshrl.u32 %v2231, 7
    %v2233 = vsub.s32 %v2230, %v2232
    %v2234 = vrot.slane %v2220, %v2233
    %v2235 = vcombine.low %v1228, %v1240
    %v2236 = vcombine.high %v1228, %v1240
    %v2238 = vunpack.c.l.s4 1983009808
    %v2239 = vunpack.c.0.s8 %v2238
    %v2240 = vlaneseq
    %v2241 = vshrl.u32 %v2240, 7
    %v2242 = vsub.s32 %v2239, %v2241
    %v2243 = vrot.slane %v2235, %v2242
    %v2245 = vunpack.c.l.s4 1983009808
    %v2246 = vunpack.c.0.s8 %v2245
    %v2247 = vlaneseq
    %v2248 = vshrl.u32 %v2247, 7
    %v2249 = vsub.s32 %v2246, %v2248
    %v2250 = vrot.slane %v2236, %v2249
    %v2251 = vcombine.low %v1246, %v1258
    %v2252 = vcombine.high %v1246, %v1258
    %v2254 = vunpack.c.l.s4 1983009808
    %v2255 = vunpack.c.0.s8 %v2254
    %v2256 = vlaneseq
    %v2257 = vshrl.u32 %v2256, 7
    %v2258 = vsub.s32 %v2255, %v2257
    %v2259 = vrot.slane %v2251, %v2258
    %v2261 = vunpack.c.l.s4 1983009808
    %v2262 = vunpack.c.0.s8 %v2261
    %v2263 = vlaneseq
    %v2264 = vshrl.u32 %v2263, 7
    %v2265 = vsub.s32 %v2262, %v2264
    %v2266 = vrot.slane %v2252, %v2265
    %v2267 = vcombine.low %v1252, %v1264
    %v2268 = vcombine.high %v1252, %v1264
    %v2270 = vunpack.c.l.s4 1983009808
    %v2271 = vunpack.c.0.s8 %v2270
    %v2272 = vlaneseq
    %v2273 = vshrl.u32 %v2272, 7
    %v2274 = vsub.s32 %v2271, %v2273
    %v2275 = vrot.slane %v2267, %v2274
    %v2277 = vunpack.c.l.s4 1983009808
    %v2278 = vunpack.c.0.s8 %v2277
    %v2279 = vlaneseq
    %v2280 = vshrl.u32 %v2279, 7
    %v2281 = vsub.s32 %v2278, %v2280
    %v2282 = vrot.slane %v2268, %v2281
    %v2283 = vcombine.low %v2227, %v2243
    %v2284 = vcombine.high %v2227, %v2243
    %v2286 = vunpack.c.l.s4 1934713408
    %v2287 = vunpack.c.0.s8 %v2286
    %v2288 = vlaneseq
    %v2289 = vshrl.u32 %v2288, 7
    %v2290 = vsub.s32 %v2287, %v2289
    %v2291 = vrot.slane %v2283, %v2290
    %v2293 = vunpack.c.l.s4 1934713408
    %v2294 = vunpack.c.0.s8 %v2293
    %v2295 = vlaneseq
    %v2296 = vshrl.u32 %v2295, 7
    %v2297 = vsub.s32 %v2294, %v2296
    %v2298 = vrot.slane %v2284, %v2297
    %v2299 = vcombine.low %v2234, %v2250
    %v2300 = vcombine.high %v2234, %v2250
    %v2302 = vunpack.c.l.s4 1934713408
    %v2303 = vunpack.c.0.s8 %v2302
    %v2304 = vlaneseq
    %v2305 = vshrl.u32 %v2304, 7
    %v2306 = vsub.s32 %v2303, %v2305
    %v2307 = vrot.slane %v2299, %v2306
    %v2309 = vunpack.c.l.s4 1934713408
    %v2310 = vunpack.c.0.s8 %v2309
    %v2311 = vlaneseq
    %v2312 = vshrl.u32 %v2311, 7
    %v2313 = vsub.s32 %v2310, %v2312
    %v2314 = vrot.slane %v2300, %v2313
    %v2315 = vcombine.low %v2259, %v2275
    %v2316 = vcombine.high %v2259, %v2275
    %v2318 = vunpack.c.l.s4 1934713408
    %v2319 = vunpack.c.0.s8 %v2318
    %v2320 = vlaneseq
    %v2321 = vshrl.u32 %v2320, 7
    %v2322 = vsub.s32 %v2319, %v2321
    %v2323 = vrot.slane %v2315, %v2322
    %v2325 = vunpack.c.l.s4 1934713408
    %v2326 = vunpack.c.0.s8 %v2325
    %v2327 = vlaneseq
    %v2328 = vshrl.u32 %v2327, 7
    %v2329 = vsub.s32 %v2326, %v2328
    %v2330 = vrot.slane %v2316, %v2329
    %v2331 = vcombine.low %v2266, %v2282
    %v2332 = vcombine.high %v2266, %v2282
    %v2334 = vunpack.c.l.s4 1934713408
    %v2335 = vunpack.c.0.s8 %v2334
    %v2336 = vlaneseq
    %v2337 = vshrl.u32 %v2336, 7
    %v2338 = vsub.s32 %v2335, %v2337
    %v2339 = vrot.slane %v2331, %v2338
    %v2341 = vunpack.c.l.s4 1934713408
    %v2342 = vunpack.c.0.s8 %v2341
    %v2343 = vlaneseq
    %v2344 = vshrl.u32 %v2343, 7
    %v2345 = vsub.s32 %v2342, %v2344
    %v2346 = vrot.slane %v2332, %v2345
    %v2347 = vcombine.low %v2291, %v2323
    %v2348 = vcombine.high %v2291, %v2323
    %v2349 = vcombine.low %v2298, %v2330
    %v2350 = vcombine.high %v2298, %v2330
    %v2351 = vcombine.low %v2307, %v2339
    %v2352 = vcombine.high %v2307, %v2339
    %v2353 = vcombine.low %v2314, %v2346
    %v2354 = vcombine.high %v2314, %v2346
    %v2355 = vpack.c.bf16 %v1531, %v1395
    %v2356 = vpack.c.bf16 %v1803, %v1667
    %v2357 = vpack.c.bf16 %v1532, %v1396
    %v2358 = vpack.c.bf16 %v1804, %v1668
    %v2359 = vpack.c.bf16 %v1533, %v1397
    %v2360 = vpack.c.bf16 %v1805, %v1669
    %v2361 = vpack.c.bf16 %v1534, %v1398
    %v2362 = vpack.c.bf16 %v1806, %v1670
    %v2363 = vpack.c.bf16 %v1535, %v1399
    %v2364 = vpack.c.bf16 %v1807, %v1671
    %v2365 = vpack.c.bf16 %v1536, %v1400
    %v2366 = vpack.c.bf16 %v1808, %v1672
    %v2367 = vpack.c.bf16 %v1537, %v1401
    %v2368 = vpack.c.bf16 %v1809, %v1673
    %v2369 = vpack.c.bf16 %v1538, %v1402
    %v2370 = vpack.c.bf16 %v1810, %v1674
    %v2371 = vpack.c.bf16 %v2075, %v1939
    %v2372 = vpack.c.bf16 %v2347, %v2211
    %v2373 = vpack.c.bf16 %v2076, %v1940
    %v2374 = vpack.c.bf16 %v2348, %v2212
    %v2375 = vpack.c.bf16 %v2077, %v1941
    %v2376 = vpack.c.bf16 %v2349, %v2213
    %v2377 = vpack.c.bf16 %v2078, %v1942
    %v2378 = vpack.c.bf16 %v2350, %v2214
    %v2379 = vpack.c.bf16 %v2079, %v1943
    %v2380 = vpack.c.bf16 %v2351, %v2215
    %v2381 = vpack.c.bf16 %v2080, %v1944
    %v2382 = vpack.c.bf16 %v2352, %v2216
    %v2383 = vpack.c.bf16 %v2081, %v1945
    %v2384 = vpack.c.bf16 %v2353, %v2217
    %v2385 = vpack.c.bf16 %v2082, %v1946
    %v2386 = vpack.c.bf16 %v2354, %v2218
    %v2387 = vpack.c.bf16 %v119, %v119
    %v2388 = vpack.c.bf16 %v120, %v120
    %v2389 = vpack.c.bf16 %v121, %v121
    %v2390 = vpack.c.bf16 %v122, %v122
    %v2391 = vpack.c.bf16 %v123, %v123
    %v2392 = vpack.c.bf16 %v124, %v124
    %v2393 = vpack.c.bf16 %v125, %v125
    %v2394 = vpack.c.bf16 %v126, %v126
    %v2395 = vpack.c.bf16 %v127, %v127
    %v2396 = vpack.c.bf16 %v128, %v128
    %v2397 = vpack.c.bf16 %v129, %v129
    %v2398 = vpack.c.bf16 %v130, %v130
    %v2399 = vpack.c.bf16 %v131, %v131
    %v2400 = vpack.c.bf16 %v132, %v132
    %v2401 = vpack.c.bf16 %v133, %v133
    %v2402 = vpack.c.bf16 %v134, %v134
    %v2403 = vld [vmem:[#allocation10] sm:$0x1]
    %v2405 = vlaneseq
    %v2406 = vshrl.u32 %v2405, 7
    %v2407 = vsub.s32 0, %v2406
    %v2408 = vrot.slane %v2403, %v2407
    %vm2410 = vcmask 130048
    %v2412 = vsel %vm2410, %v2387, 0
    %2414 = vmatprep.subr.bf16.mxu0 0
    %2415 = vmatpush1.bf16.msra.mxu0 %v1067
    %2416 = vmatprep.subr.bf16.mxu0 0
    %2417 = vmatpush1.bf16.msra.mxu0 0
    %2418 = vmatprep.subr.bf16.mxu0 0
    %2419 = vmatpush1.bf16.msra.mxu0 0
    %2420 = vmatprep.subr.bf16.mxu0 0
    %2421 = vmatpush1.bf16.msra.mxu0 0
    %2422 = vmatprep.subr.bf16.mxu0 0
    %2423 = vmatpush1.bf16.msra.mxu0 0
    %2424 = vmatprep.subr.bf16.mxu0 0
    %2425 = vmatpush1.bf16.msra.mxu0 0
    %2426 = vmatprep.subr.bf16.mxu0 0
    %2427 = vmatpush1.bf16.msra.mxu0 0
    %2428 = vmatprep.subr.bf16.mxu0 0
    %2429 = vmatpush1.bf16.msra.mxu0 0
    %2430 = vmatprep.subr.bf16.mxu0 0
    %2431 = vmatpush1.bf16.msra.mxu0 0
    %2432 = vmatprep.subr.bf16.mxu0 0
    %2433 = vmatpush1.bf16.msra.mxu0 0
    %2434 = vmatprep.subr.bf16.mxu0 0
    %2435 = vmatpush1.bf16.msra.mxu0 0
    %2436 = vmatprep.subr.bf16.mxu0 0
    %2437 = vmatpush1.bf16.msra.mxu0 0
    %2438 = vmatprep.subr.bf16.mxu0 0
    %2439 = vmatpush1.bf16.msra.mxu0 0
    %2440 = vmatprep.subr.bf16.mxu0 0
    %2441 = vmatpush1.bf16.msra.mxu0 0
    %2442 = vmatprep.subr.bf16.mxu0 0
    %2443 = vmatpush1.bf16.msra.mxu0 0
    %2444 = vmatprep.subr.bf16.mxu0 0
    %2445 = vmatpush1.bf16.msra.mxu0 0
    %2446 = vmatprep.mubr.bf16.mxu0 0
    %2447 = vmatmul.mubr.bf16.gmra.mrb[0].mxu0 %v2412
    %v2448 = vpop.f32.mrb[0].mxu0
    %v2449 = vadd.f32 %v2408, %v2448
    %v2450 = vpop.f32.mrb[0].mxu0
    %v2451 = vpop.f32.mrb[0].mxu0
    %v2452 = vpop.f32.mrb[0].mxu0
    %2453 = vdwg.mxu0
    %v2455 = vsel %vm2410, %v2388, 0
    %2457 = vmatprep.subr.bf16.mxu0 0
    %2458 = vmatpush1.bf16.msra.mxu0 %v1068
    %2459 = vmatprep.subr.bf16.mxu0 0
    %2460 = vmatpush1.bf16.msra.mxu0 0
    %2461 = vmatprep.subr.bf16.mxu0 0
    %2462 = vmatpush1.bf16.msra.mxu0 0
    %2463 = vmatprep.subr.bf16.mxu0 0
    %2464 = vmatpush1.bf16.msra.mxu0 0
    %2465 = vmatprep.subr.bf16.mxu0 0
    %2466 = vmatpush1.bf16.msra.mxu0 0
    %2467 = vmatprep.subr.bf16.mxu0 0
    %2468 = vmatpush1.bf16.msra.mxu0 0
    %2469 = vmatprep.subr.bf16.mxu0 0
    %2470 = vmatpush1.bf16.msra.mxu0 0
    %2471 = vmatprep.subr.bf16.mxu0 0
    %2472 = vmatpush1.bf16.msra.mxu0 0
    %2473 = vmatprep.subr.bf16.mxu0 0
    %2474 = vmatpush1.bf16.msra.mxu0 0
    %2475 = vmatprep.subr.bf16.mxu0 0
    %2476 = vmatpush1.bf16.msra.mxu0 0
    %2477 = vmatprep.subr.bf16.mxu0 0
    %2478 = vmatpush1.bf16.msra.mxu0 0
    %2479 = vmatprep.subr.bf16.mxu0 0
    %2480 = vmatpush1.bf16.msra.mxu0 0
    %2481 = vmatprep.subr.bf16.mxu0 0
    %2482 = vmatpush1.bf16.msra.mxu0 0
    %2483 = vmatprep.subr.bf16.mxu0 0
    %2484 = vmatpush1.bf16.msra.mxu0 0
    %2485 = vmatprep.subr.bf16.mxu0 0
    %2486 = vmatpush1.bf16.msra.mxu0 0
    %2487 = vmatprep.subr.bf16.mxu0 0
    %2488 = vmatpush1.bf16.msra.mxu0 0
    %2489 = vmatprep.mubr.bf16.mxu0 0
    %2490 = vmatmul.mubr.bf16.gmra.mrb[0].mxu0 %v2455
    %v2491 = vpop.f32.mrb[0].mxu0
    %v2492 = vadd.f32 %v2408, %v2491
    %v2493 = vpop.f32.mrb[0].mxu0
    %v2494 = vpop.f32.mrb[0].mxu0
    %v2495 = vpop.f32.mrb[0].mxu0
    %2496 = vdwg.mxu0
    %v2498 = vsel %vm2410, %v2389, 0
    %2500 = vmatprep.subr.bf16.mxu0 0
    %2501 = vmatpush1.bf16.msra.mxu0 %v1069
    %2502 = vmatprep.subr.bf16.mxu0 0
    %2503 = vmatpush1.bf16.msra.mxu0 0
    %2504 = vmatprep.subr.bf16.mxu0 0
    %2505 = vmatpush1.bf16.msra.mxu0 0
    %2506 = vmatprep.subr.bf16.mxu0 0
    %2507 = vmatpush1.bf16.msra.mxu0 0
    %2508 = vmatprep.subr.bf16.mxu0 0
    %2509 = vmatpush1.bf16.msra.mxu0 0
    %2510 = vmatprep.subr.bf16.mxu0 0
    %2511 = vmatpush1.bf16.msra.mxu0 0
    %2512 = vmatprep.subr.bf16.mxu0 0
    %2513 = vmatpush1.bf16.msra.mxu0 0
    %2514 = vmatprep.subr.bf16.mxu0 0
    %2515 = vmatpush1.bf16.msra.mxu0 0
    %2516 = vmatprep.subr.bf16.mxu0 0
    %2517 = vmatpush1.bf16.msra.mxu0 0
    %2518 = vmatprep.subr.bf16.mxu0 0
    %2519 = vmatpush1.bf16.msra.mxu0 0
    %2520 = vmatprep.subr.bf16.mxu0 0
    %2521 = vmatpush1.bf16.msra.mxu0 0
    %2522 = vmatprep.subr.bf16.mxu0 0
    %2523 = vmatpush1.bf16.msra.mxu0 0
    %2524 = vmatprep.subr.bf16.mxu0 0
    %2525 = vmatpush1.bf16.msra.mxu0 0
    %2526 = vmatprep.subr.bf16.mxu0 0
    %2527 = vmatpush1.bf16.msra.mxu0 0
    %2528 = vmatprep.subr.bf16.mxu0 0
    %2529 = vmatpush1.bf16.msra.mxu0 0
    %2530 = vmatprep.subr.bf16.mxu0 0
    %2531 = vmatpush1.bf16.msra.mxu0 0
    %2532 = vmatprep.mubr.bf16.mxu0 0
    %2533 = vmatmul.mubr.bf16.gmra.mrb[0].mxu0 %v2498
    %v2534 = vpop.f32.mrb[0].mxu0
    %v2535 = vadd.f32 %v2408, %v2534
    %v2536 = vpop.f32.mrb[0].mxu0
    %v2537 = vpop.f32.mrb[0].mxu0
    %v2538 = vpop.f32.mrb[0].mxu0
    %2539 = vdwg.mxu0
    %v2541 = vsel %vm2410, %v2390, 0
    %2543 = vmatprep.subr.bf16.mxu0 0
    %2544 = vmatpush1.bf16.msra.mxu0 %v1070
    %2545 = vmatprep.subr.bf16.mxu0 0
    %2546 = vmatpush1.bf16.msra.mxu0 0
    %2547 = vmatprep.subr.bf16.mxu0 0
    %2548 = vmatpush1.bf16.msra.mxu0 0
    %2549 = vmatprep.subr.bf16.mxu0 0
    %2550 = vmatpush1.bf16.msra.mxu0 0
    %2551 = vmatprep.subr.bf16.mxu0 0
    %2552 = vmatpush1.bf16.msra.mxu0 0
    %2553 = vmatprep.subr.bf16.mxu0 0
    %2554 = vmatpush1.bf16.msra.mxu0 0
    %2555 = vmatprep.subr.bf16.mxu0 0
    %2556 = vmatpush1.bf16.msra.mxu0 0
    %2557 = vmatprep.subr.bf16.mxu0 0
    %2558 = vmatpush1.bf16.msra.mxu0 0
    %2559 = vmatprep.subr.bf16.mxu0 0
    %2560 = vmatpush1.bf16.msra.mxu0 0
    %2561 = vmatprep.subr.bf16.mxu0 0
    %2562 = vmatpush1.bf16.msra.mxu0 0
    %2563 = vmatprep.subr.bf16.mxu0 0
    %2564 = vmatpush1.bf16.msra.mxu0 0
    %2565 = vmatprep.subr.bf16.mxu0 0
    %2566 = vmatpush1.bf16.msra.mxu0 0
    %2567 = vmatprep.subr.bf16.mxu0 0
    %2568 = vmatpush1.bf16.msra.mxu0 0
    %2569 = vmatprep.subr.bf16.mxu0 0
    %2570 = vmatpush1.bf16.msra.mxu0 0
    %2571 = vmatprep.subr.bf16.mxu0 0
    %2572 = vmatpush1.bf16.msra.mxu0 0
    %2573 = vmatprep.subr.bf16.mxu0 0
    %2574 = vmatpush1.bf16.msra.mxu0 0
    %2575 = vmatprep.mubr.bf16.mxu0 0
    %2576 = vmatmul.mubr.bf16.gmra.mrb[0].mxu0 %v2541
    %v2577 = vpop.f32.mrb[0].mxu0
    %v2578 = vadd.f32 %v2408, %v2577
    %v2579 = vpop.f32.mrb[0].mxu0
    %v2580 = vpop.f32.mrb[0].mxu0
    %v2581 = vpop.f32.mrb[0].mxu0
    %2582 = vdwg.mxu0
    %v2584 = vsel %vm2410, %v2391, 0
    %2586 = vmatprep.subr.bf16.mxu0 0
    %2587 = vmatpush1.bf16.msra.mxu0 %v1071
    %2588 = vmatprep.subr.bf16.mxu0 0
    %2589 = vmatpush1.bf16.msra.mxu0 0
    %2590 = vmatprep.subr.bf16.mxu0 0
    %2591 = vmatpush1.bf16.msra.mxu0 0
    %2592 = vmatprep.subr.bf16.mxu0 0
    %2593 = vmatpush1.bf16.msra.mxu0 0
    %2594 = vmatprep.subr.bf16.mxu0 0
    %2595 = vmatpush1.bf16.msra.mxu0 0
    %2596 = vmatprep.subr.bf16.mxu0 0
    %2597 = vmatpush1.bf16.msra.mxu0 0
    %2598 = vmatprep.subr.bf16.mxu0 0
    %2599 = vmatpush1.bf16.msra.mxu0 0
    %2600 = vmatprep.subr.bf16.mxu0 0
    %2601 = vmatpush1.bf16.msra.mxu0 0
    %2602 = vmatprep.subr.bf16.mxu0 0
    %2603 = vmatpush1.bf16.msra.mxu0 0
    %2604 = vmatprep.subr.bf16.mxu0 0
    %2605 = vmatpush1.bf16.msra.mxu0 0
    %2606 = vmatprep.subr.bf16.mxu0 0
    %2607 = vmatpush1.bf16.msra.mxu0 0
    %2608 = vmatprep.subr.bf16.mxu0 0
    %2609 = vmatpush1.bf16.msra.mxu0 0
    %2610 = vmatprep.subr.bf16.mxu0 0
    %2611 = vmatpush1.bf16.msra.mxu0 0
    %2612 = vmatprep.subr.bf16.mxu0 0
    %2613 = vmatpush1.bf16.msra.mxu0 0
    %2614 = vmatprep.subr.bf16.mxu0 0
    %2615 = vmatpush1.bf16.msra.mxu0 0
    %2616 = vmatprep.subr.bf16.mxu0 0
    %2617 = vmatpush1.bf16.msra.mxu0 0
    %2618 = vmatprep.mubr.bf16.mxu0 0
    %2619 = vmatmul.mubr.bf16.gmra.mrb[0].mxu0 %v2584
    %v2620 = vpop.f32.mrb[0].mxu0
    %v2621 = vadd.f32 %v2408, %v2620
    %v2622 = vpop.f32.mrb[0].mxu0
    %v2623 = vpop.f32.mrb[0].mxu0
    %v2624 = vpop.f32.mrb[0].mxu0
    %2625 = vdwg.mxu0
    %v2627 = vsel %vm2410, %v2392, 0
    %2629 = vmatprep.subr.bf16.mxu0 0
    %2630 = vmatpush1.bf16.msra.mxu0 %v1072
    %2631 = vmatprep.subr.bf16.mxu0 0
    %2632 = vmatpush1.bf16.msra.mxu0 0
    %2633 = vmatprep.subr.bf16.mxu0 0
    %2634 = vmatpush1.bf16.msra.mxu0 0
    %2635 = vmatprep.subr.bf16.mxu0 0
    %2636 = vmatpush1.bf16.msra.mxu0 0
    %2637 = vmatprep.subr.bf16.mxu0 0
    %2638 = vmatpush1.bf16.msra.mxu0 0
    %2639 = vmatprep.subr.bf16.mxu0 0
    %2640 = vmatpush1.bf16.msra.mxu0 0
    %2641 = vmatprep.subr.bf16.mxu0 0
    %2642 = vmatpush1.bf16.msra.mxu0 0
    %2643 = vmatprep.subr.bf16.mxu0 0
    %2644 = vmatpush1.bf16.msra.mxu0 0
    %2645 = vmatprep.subr.bf16.mxu0 0
    %2646 = vmatpush1.bf16.msra.mxu0 0
    %2647 = vmatprep.subr.bf16.mxu0 0
    %2648 = vmatpush1.bf16.msra.mxu0 0
    %2649 = vmatprep.subr.bf16.mxu0 0
    %2650 = vmatpush1.bf16.msra.mxu0 0
    %2651 = vmatprep.subr.bf16.mxu0 0
    %2652 = vmatpush1.bf16.msra.mxu0 0
    %2653 = vmatprep.subr.bf16.mxu0 0
    %2654 = vmatpush1.bf16.msra.mxu0 0
    %2655 = vmatprep.subr.bf16.mxu0 0
    %2656 = vmatpush1.bf16.msra.mxu0 0
    %2657 = vmatprep.subr.bf16.mxu0 0
    %2658 = vmatpush1.bf16.msra.mxu0 0
    %2659 = vmatprep.subr.bf16.mxu0 0
    %2660 = vmatpush1.bf16.msra.mxu0 0
    %2661 = vmatprep.mubr.bf16.mxu0 0
    %2662 = vmatmul.mubr.bf16.gmra.mrb[0].mxu0 %v2627
    %v2663 = vpop.f32.mrb[0].mxu0
    %v2664 = vadd.f32 %v2408, %v2663
    %v2665 = vpop.f32.mrb[0].mxu0
    %v2666 = vpop.f32.mrb[0].mxu0
    %v2667 = vpop.f32.mrb[0].mxu0
    %2668 = vdwg.mxu0
    %v2670 = vsel %vm2410, %v2393, 0
    %2672 = vmatprep.subr.bf16.mxu0 0
    %2673 = vmatpush1.bf16.msra.mxu0 %v1073
    %2674 = vmatprep.subr.bf16.mxu0 0
    %2675 = vmatpush1.bf16.msra.mxu0 0
    %2676 = vmatprep.subr.bf16.mxu0 0
    %2677 = vmatpush1.bf16.msra.mxu0 0
    %2678 = vmatprep.subr.bf16.mxu0 0
    %2679 = vmatpush1.bf16.msra.mxu0 0
    %2680 = vmatprep.subr.bf16.mxu0 0
    %2681 = vmatpush1.bf16.msra.mxu0 0
    %2682 = vmatprep.subr.bf16.mxu0 0
    %2683 = vmatpush1.bf16.msra.mxu0 0
    %2684 = vmatprep.subr.bf16.mxu0 0
    %2685 = vmatpush1.bf16.msra.mxu0 0
    %2686 = vmatprep.subr.bf16.mxu0 0
    %2687 = vmatpush1.bf16.msra.mxu0 0
    %2688 = vmatprep.subr.bf16.mxu0 0
    %2689 = vmatpush1.bf16.msra.mxu0 0
    %2690 = vmatprep.subr.bf16.mxu0 0
    %2691 = vmatpush1.bf16.msra.mxu0 0
    %2692 = vmatprep.subr.bf16.mxu0 0
    %2693 = vmatpush1.bf16.msra.mxu0 0
    %2694 = vmatprep.subr.bf16.mxu0 0
    %2695 = vmatpush1.bf16.msra.mxu0 0
    %2696 = vmatprep.subr.bf16.mxu0 0
    %2697 = vmatpush1.bf16.msra.mxu0 0
    %2698 = vmatprep.subr.bf16.mxu0 0
    %2699 = vmatpush1.bf16.msra.mxu0 0
    %2700 = vmatprep.subr.bf16.mxu0 0
    %2701 = vmatpush1.bf16.msra.mxu0 0
    %2702 = vmatprep.subr.bf16.mxu0 0
    %2703 = vmatpush1.bf16.msra.mxu0 0
    %2704 = vmatprep.mubr.bf16.mxu0 0
    %2705 = vmatmul.mubr.bf16.gmra.mrb[0].mxu0 %v2670
    %v2706 = vpop.f32.mrb[0].mxu0
    %v2707 = vadd.f32 %v2408, %v2706
    %v2708 = vpop.f32.mrb[0].mxu0
    %v2709 = vpop.f32.mrb[0].mxu0
    %v2710 = vpop.f32.mrb[0].mxu0
    %2711 = vdwg.mxu0
    %v2713 = vsel %vm2410, %v2394, 0
    %2715 = vmatprep.subr.bf16.mxu0 0
    %2716 = vmatpush1.bf16.msra.mxu0 %v1074
    %2717 = vmatprep.subr.bf16.mxu0 0
    %2718 = vmatpush1.bf16.msra.mxu0 0
    %2719 = vmatprep.subr.bf16.mxu0 0
    %2720 = vmatpush1.bf16.msra.mxu0 0
    %2721 = vmatprep.subr.bf16.mxu0 0
    %2722 = vmatpush1.bf16.msra.mxu0 0
    %2723 = vmatprep.subr.bf16.mxu0 0
    %2724 = vmatpush1.bf16.msra.mxu0 0
    %2725 = vmatprep.subr.bf16.mxu0 0
    %2726 = vmatpush1.bf16.msra.mxu0 0
    %2727 = vmatprep.subr.bf16.mxu0 0
    %2728 = vmatpush1.bf16.msra.mxu0 0
    %2729 = vmatprep.subr.bf16.mxu0 0
    %2730 = vmatpush1.bf16.msra.mxu0 0
    %2731 = vmatprep.subr.bf16.mxu0 0
    %2732 = vmatpush1.bf16.msra.mxu0 0
    %2733 = vmatprep.subr.bf16.mxu0 0
    %2734 = vmatpush1.bf16.msra.mxu0 0
    %2735 = vmatprep.subr.bf16.mxu0 0
    %2736 = vmatpush1.bf16.msra.mxu0 0
    %2737 = vmatprep.subr.bf16.mxu0 0
    %2738 = vmatpush1.bf16.msra.mxu0 0
    %2739 = vmatprep.subr.bf16.mxu0 0
    %2740 = vmatpush1.bf16.msra.mxu0 0
    %2741 = vmatprep.subr.bf16.mxu0 0
    %2742 = vmatpush1.bf16.msra.mxu0 0
    %2743 = vmatprep.subr.bf16.mxu0 0
    %2744 = vmatpush1.bf16.msra.mxu0 0
    %2745 = vmatprep.subr.bf16.mxu0 0
    %2746 = vmatpush1.bf16.msra.mxu0 0
    %2747 = vmatprep.mubr.bf16.mxu0 0
    %2748 = vmatmul.mubr.bf16.gmra.mrb[0].mxu0 %v2713
    %v2749 = vpop.f32.mrb[0].mxu0
    %v2750 = vadd.f32 %v2408, %v2749
    %v2751 = vpop.f32.mrb[0].mxu0
    %v2752 = vpop.f32.mrb[0].mxu0
    %v2753 = vpop.f32.mrb[0].mxu0
    %2754 = vdwg.mxu0
    %v2756 = vsel %vm2410, %v2395, 0
    %2758 = vmatprep.subr.bf16.mxu0 0
    %2759 = vmatpush1.bf16.msra.mxu0 %v1075
    %2760 = vmatprep.subr.bf16.mxu0 0
    %2761 = vmatpush1.bf16.msra.mxu0 0
    %2762 = vmatprep.subr.bf16.mxu0 0
    %2763 = vmatpush1.bf16.msra.mxu0 0
    %2764 = vmatprep.subr.bf16.mxu0 0
    %2765 = vmatpush1.bf16.msra.mxu0 0
    %2766 = vmatprep.subr.bf16.mxu0 0
    %2767 = vmatpush1.bf16.msra.mxu0 0
    %2768 = vmatprep.subr.bf16.mxu0 0
    %2769 = vmatpush1.bf16.msra.mxu0 0
    %2770 = vmatprep.subr.bf16.mxu0 0
    %2771 = vmatpush1.bf16.msra.mxu0 0
    %2772 = vmatprep.subr.bf16.mxu0 0
    %2773 = vmatpush1.bf16.msra.mxu0 0
    %2774 = vmatprep.subr.bf16.mxu0 0
    %2775 = vmatpush1.bf16.msra.mxu0 0
    %2776 = vmatprep.subr.bf16.mxu0 0
    %2777 = vmatpush1.bf16.msra.mxu0 0
    %2778 = vmatprep.subr.bf16.mxu0 0
    %2779 = vmatpush1.bf16.msra.mxu0 0
    %2780 = vmatprep.subr.bf16.mxu0 0
    %2781 = vmatpush1.bf16.msra.mxu0 0
    %2782 = vmatprep.subr.bf16.mxu0 0
    %2783 = vmatpush1.bf16.msra.mxu0 0
    %2784 = vmatprep.subr.bf16.mxu0 0
    %2785 = vmatpush1.bf16.msra.mxu0 0
    %2786 = vmatprep.subr.bf16.mxu0 0
    %2787 = vmatpush1.bf16.msra.mxu0 0
    %2788 = vmatprep.subr.bf16.mxu0 0
    %2789 = vmatpush1.bf16.msra.mxu0 0
    %2790 = vmatprep.mubr.bf16.mxu0 0
    %2791 = vmatmul.mubr.bf16.gmra.mrb[0].mxu0 %v2756
    %v2792 = vpop.f32.mrb[0].mxu0
    %v2793 = vadd.f32 %v2408, %v2792
    %v2794 = vpop.f32.mrb[0].mxu0
    %v2795 = vpop.f32.mrb[0].mxu0
    %v2796 = vpop.f32.mrb[0].mxu0
    %2797 = vdwg.mxu0
    %v2799 = vsel %vm2410, %v2396, 0
    %2801 = vmatprep.subr.bf16.mxu0 0
    %2802 = vmatpush1.bf16.msra.mxu0 %v1076
    %2803 = vmatprep.subr.bf16.mxu0 0
    %2804 = vmatpush1.bf16.msra.mxu0 0
    %2805 = vmatprep.subr.bf16.mxu0 0
    %2806 = vmatpush1.bf16.msra.mxu0 0
    %2807 = vmatprep.subr.bf16.mxu0 0
    %2808 = vmatpush1.bf16.msra.mxu0 0
    %2809 = vmatprep.subr.bf16.mxu0 0
    %2810 = vmatpush1.bf16.msra.mxu0 0
    %2811 = vmatprep.subr.bf16.mxu0 0
    %2812 = vmatpush1.bf16.msra.mxu0 0
    %2813 = vmatprep.subr.bf16.mxu0 0
    %2814 = vmatpush1.bf16.msra.mxu0 0
    %2815 = vmatprep.subr.bf16.mxu0 0
    %2816 = vmatpush1.bf16.msra.mxu0 0
    %2817 = vmatprep.subr.bf16.mxu0 0
    %2818 = vmatpush1.bf16.msra.mxu0 0
    %2819 = vmatprep.subr.bf16.mxu0 0
    %2820 = vmatpush1.bf16.msra.mxu0 0
    %2821 = vmatprep.subr.bf16.mxu0 0
    %2822 = vmatpush1.bf16.msra.mxu0 0
    %2823 = vmatprep.subr.bf16.mxu0 0
    %2824 = vmatpush1.bf16.msra.mxu0 0
    %2825 = vmatprep.subr.bf16.mxu0 0
    %2826 = vmatpush1.bf16.msra.mxu0 0
    %2827 = vmatprep.subr.bf16.mxu0 0
    %2828 = vmatpush1.bf16.msra.mxu0 0
    %2829 = vmatprep.subr.bf16.mxu0 0
    %2830 = vmatpush1.bf16.msra.mxu0 0
    %2831 = vmatprep.subr.bf16.mxu0 0
    %2832 = vmatpush1.bf16.msra.mxu0 0
    %2833 = vmatprep.mubr.bf16.mxu0 0
    %2834 = vmatmul.mubr.bf16.gmra.mrb[0].mxu0 %v2799
    %v2835 = vpop.f32.mrb[0].mxu0
    %v2836 = vadd.f32 %v2408, %v2835
    %v2837 = vpop.f32.mrb[0].mxu0
    %v2838 = vpop.f32.mrb[0].mxu0
    %v2839 = vpop.f32.mrb[0].mxu0
    %2840 = vdwg.mxu0
    %v2842 = vsel %vm2410, %v2397, 0
    %2844 = vmatprep.subr.bf16.mxu0 0
    %2845 = vmatpush1.bf16.msra.mxu0 %v1077
    %2846 = vmatprep.subr.bf16.mxu0 0
    %2847 = vmatpush1.bf16.msra.mxu0 0
    %2848 = vmatprep.subr.bf16.mxu0 0
    %2849 = vmatpush1.bf16.msra.mxu0 0
    %2850 = vmatprep.subr.bf16.mxu0 0
    %2851 = vmatpush1.bf16.msra.mxu0 0
    %2852 = vmatprep.subr.bf16.mxu0 0
    %2853 = vmatpush1.bf16.msra.mxu0 0
    %2854 = vmatprep.subr.bf16.mxu0 0
    %2855 = vmatpush1.bf16.msra.mxu0 0
    %2856 = vmatprep.subr.bf16.mxu0 0
    %2857 = vmatpush1.bf16.msra.mxu0 0
    %2858 = vmatprep.subr.bf16.mxu0 0
    %2859 = vmatpush1.bf16.msra.mxu0 0
    %2860 = vmatprep.subr.bf16.mxu0 0
    %2861 = vmatpush1.bf16.msra.mxu0 0
    %2862 = vmatprep.subr.bf16.mxu0 0
    %2863 = vmatpush1.bf16.msra.mxu0 0
    %2864 = vmatprep.subr.bf16.mxu0 0
    %2865 = vmatpush1.bf16.msra.mxu0 0
    %2866 = vmatprep.subr.bf16.mxu0 0
    %2867 = vmatpush1.bf16.msra.mxu0 0
    %2868 = vmatprep.subr.bf16.mxu0 0
    %2869 = vmatpush1.bf16.msra.mxu0 0
    %2870 = vmatprep.subr.bf16.mxu0 0
    %2871 = vmatpush1.bf16.msra.mxu0 0
    %2872 = vmatprep.subr.bf16.mxu0 0
    %2873 = vmatpush1.bf16.msra.mxu0 0
    %2874 = vmatprep.subr.bf16.mxu0 0
    %2875 = vmatpush1.bf16.msra.mxu0 0
    %2876 = vmatprep.mubr.bf16.mxu0 0
    %2877 = vmatmul.mubr.bf16.gmra.mrb[0].mxu0 %v2842
    %v2878 = vpop.f32.mrb[0].mxu0
    %v2879 = vadd.f32 %v2408, %v2878
    %v2880 = vpop.f32.mrb[0].mxu0
    %v2881 = vpop.f32.mrb[0].mxu0
    %v2882 = vpop.f32.mrb[0].mxu0
    %2883 = vdwg.mxu0
    %v2885 = vsel %vm2410, %v2398, 0
    %2887 = vmatprep.subr.bf16.mxu0 0
    %2888 = vmatpush1.bf16.msra.mxu0 %v1078
    %2889 = vmatprep.subr.bf16.mxu0 0
    %2890 = vmatpush1.bf16.msra.mxu0 0
    %2891 = vmatprep.subr.bf16.mxu0 0
    %2892 = vmatpush1.bf16.msra.mxu0 0
    %2893 = vmatprep.subr.bf16.mxu0 0
    %2894 = vmatpush1.bf16.msra.mxu0 0
    %2895 = vmatprep.subr.bf16.mxu0 0
    %2896 = vmatpush1.bf16.msra.mxu0 0
    %2897 = vmatprep.subr.bf16.mxu0 0
    %2898 = vmatpush1.bf16.msra.mxu0 0
    %2899 = vmatprep.subr.bf16.mxu0 0
    %2900 = vmatpush1.bf16.msra.mxu0 0
    %2901 = vmatprep.subr.bf16.mxu0 0
    %2902 = vmatpush1.bf16.msra.mxu0 0
    %2903 = vmatprep.subr.bf16.mxu0 0
    %2904 = vmatpush1.bf16.msra.mxu0 0
    %2905 = vmatprep.subr.bf16.mxu0 0
    %2906 = vmatpush1.bf16.msra.mxu0 0
    %2907 = vmatprep.subr.bf16.mxu0 0
    %2908 = vmatpush1.bf16.msra.mxu0 0
    %2909 = vmatprep.subr.bf16.mxu0 0
    %2910 = vmatpush1.bf16.msra.mxu0 0
    %2911 = vmatprep.subr.bf16.mxu0 0
    %2912 = vmatpush1.bf16.msra.mxu0 0
    %2913 = vmatprep.subr.bf16.mxu0 0
    %2914 = vmatpush1.bf16.msra.mxu0 0
    %2915 = vmatprep.subr.bf16.mxu0 0
    %2916 = vmatpush1.bf16.msra.mxu0 0
    %2917 = vmatprep.subr.bf16.mxu0 0
    %2918 = vmatpush1.bf16.msra.mxu0 0
    %2919 = vmatprep.mubr.bf16.mxu0 0
    %2920 = vmatmul.mubr.bf16.gmra.mrb[0].mxu0 %v2885
    %v2921 = vpop.f32.mrb[0].mxu0
    %v2922 = vadd.f32 %v2408, %v2921
    %v2923 = vpop.f32.mrb[0].mxu0
    %v2924 = vpop.f32.mrb[0].mxu0
    %v2925 = vpop.f32.mrb[0].mxu0
    %2926 = vdwg.mxu0
    %v2928 = vsel %vm2410, %v2399, 0
    %2930 = vmatprep.subr.bf16.mxu0 0
    %2931 = vmatpush1.bf16.msra.mxu0 %v1079
    %2932 = vmatprep.subr.bf16.mxu0 0
    %2933 = vmatpush1.bf16.msra.mxu0 0
    %2934 = vmatprep.subr.bf16.mxu0 0
    %2935 = vmatpush1.bf16.msra.mxu0 0
    %2936 = vmatprep.subr.bf16.mxu0 0
    %2937 = vmatpush1.bf16.msra.mxu0 0
    %2938 = vmatprep.subr.bf16.mxu0 0
    %2939 = vmatpush1.bf16.msra.mxu0 0
    %2940 = vmatprep.subr.bf16.mxu0 0
    %2941 = vmatpush1.bf16.msra.mxu0 0
    %2942 = vmatprep.subr.bf16.mxu0 0
    %2943 = vmatpush1.bf16.msra.mxu0 0
    %2944 = vmatprep.subr.bf16.mxu0 0
    %2945 = vmatpush1.bf16.msra.mxu0 0
    %2946 = vmatprep.subr.bf16.mxu0 0
    %2947 = vmatpush1.bf16.msra.mxu0 0
    %2948 = vmatprep.subr.bf16.mxu0 0
    %2949 = vmatpush1.bf16.msra.mxu0 0
    %2950 = vmatprep.subr.bf16.mxu0 0
    %2951 = vmatpush1.bf16.msra.mxu0 0
    %2952 = vmatprep.subr.bf16.mxu0 0
    %2953 = vmatpush1.bf16.msra.mxu0 0
    %2954 = vmatprep.subr.bf16.mxu0 0
    %2955 = vmatpush1.bf16.msra.mxu0 0
    %2956 = vmatprep.subr.bf16.mxu0 0
    %2957 = vmatpush1.bf16.msra.mxu0 0
    %2958 = vmatprep.subr.bf16.mxu0 0
    %2959 = vmatpush1.bf16.msra.mxu0 0
    %2960 = vmatprep.subr.bf16.mxu0 0
    %2961 = vmatpush1.bf16.msra.mxu0 0
    %2962 = vmatprep.mubr.bf16.mxu0 0
    %2963 = vmatmul.mubr.bf16.gmra.mrb[0].mxu0 %v2928
    %v2964 = vpop.f32.mrb[0].mxu0
    %v2965 = vadd.f32 %v2408, %v2964
    %v2966 = vpop.f32.mrb[0].mxu0
    %v2967 = vpop.f32.mrb[0].mxu0
    %v2968 = vpop.f32.mrb[0].mxu0
    %2969 = vdwg.mxu0
    %v2971 = vsel %vm2410, %v2400, 0
    %2973 = vmatprep.subr.bf16.mxu0 0
    %2974 = vmatpush1.bf16.msra.mxu0 %v1080
    %2975 = vmatprep.subr.bf16.mxu0 0
    %2976 = vmatpush1.bf16.msra.mxu0 0
    %2977 = vmatprep.subr.bf16.mxu0 0
    %2978 = vmatpush1.bf16.msra.mxu0 0
    %2979 = vmatprep.subr.bf16.mxu0 0
    %2980 = vmatpush1.bf16.msra.mxu0 0
    %2981 = vmatprep.subr.bf16.mxu0 0
    %2982 = vmatpush1.bf16.msra.mxu0 0
    %2983 = vmatprep.subr.bf16.mxu0 0
    %2984 = vmatpush1.bf16.msra.mxu0 0
    %2985 = vmatprep.subr.bf16.mxu0 0
    %2986 = vmatpush1.bf16.msra.mxu0 0
    %2987 = vmatprep.subr.bf16.mxu0 0
    %2988 = vmatpush1.bf16.msra.mxu0 0
    %2989 = vmatprep.subr.bf16.mxu0 0
    %2990 = vmatpush1.bf16.msra.mxu0 0
    %2991 = vmatprep.subr.bf16.mxu0 0
    %2992 = vmatpush1.bf16.msra.mxu0 0
    %2993 = vmatprep.subr.bf16.mxu0 0
    %2994 = vmatpush1.bf16.msra.mxu0 0
    %2995 = vmatprep.subr.bf16.mxu0 0
    %2996 = vmatpush1.bf16.msra.mxu0 0
    %2997 = vmatprep.subr.bf16.mxu0 0
    %2998 = vmatpush1.bf16.msra.mxu0 0
    %2999 = vmatprep.subr.bf16.mxu0 0
    %3000 = vmatpush1.bf16.msra.mxu0 0
    %3001 = vmatprep.subr.bf16.mxu0 0
    %3002 = vmatpush1.bf16.msra.mxu0 0
    %3003 = vmatprep.subr.bf16.mxu0 0
    %3004 = vmatpush1.bf16.msra.mxu0 0
    %3005 = vmatprep.mubr.bf16.mxu0 0
    %3006 = vmatmul.mubr.bf16.gmra.mrb[0].mxu0 %v2971
    %v3007 = vpop.f32.mrb[0].mxu0
    %v3008 = vadd.f32 %v2408, %v3007
    %v3009 = vpop.f32.mrb[0].mxu0
    %v3010 = vpop.f32.mrb[0].mxu0
    %v3011 = vpop.f32.mrb[0].mxu0
    %3012 = vdwg.mxu0
    %v3014 = vsel %vm2410, %v2401, 0
    %3016 = vmatprep.subr.bf16.mxu0 0
    %3017 = vmatpush1.bf16.msra.mxu0 %v1081
    %3018 = vmatprep.subr.bf16.mxu0 0
    %3019 = vmatpush1.bf16.msra.mxu0 0
    %3020 = vmatprep.subr.bf16.mxu0 0
    %3021 = vmatpush1.bf16.msra.mxu0 0
    %3022 = vmatprep.subr.bf16.mxu0 0
    %3023 = vmatpush1.bf16.msra.mxu0 0
    %3024 = vmatprep.subr.bf16.mxu0 0
    %3025 = vmatpush1.bf16.msra.mxu0 0
    %3026 = vmatprep.subr.bf16.mxu0 0
    %3027 = vmatpush1.bf16.msra.mxu0 0
    %3028 = vmatprep.subr.bf16.mxu0 0
    %3029 = vmatpush1.bf16.msra.mxu0 0
    %3030 = vmatprep.subr.bf16.mxu0 0
    %3031 = vmatpush1.bf16.msra.mxu0 0
    %3032 = vmatprep.subr.bf16.mxu0 0
    %3033 = vmatpush1.bf16.msra.mxu0 0
    %3034 = vmatprep.subr.bf16.mxu0 0
    %3035 = vmatpush1.bf16.msra.mxu0 0
    %3036 = vmatprep.subr.bf16.mxu0 0
    %3037 = vmatpush1.bf16.msra.mxu0 0
    %3038 = vmatprep.subr.bf16.mxu0 0
    %3039 = vmatpush1.bf16.msra.mxu0 0
    %3040 = vmatprep.subr.bf16.mxu0 0
    %3041 = vmatpush1.bf16.msra.mxu0 0
    %3042 = vmatprep.subr.bf16.mxu0 0
    %3043 = vmatpush1.bf16.msra.mxu0 0
    %3044 = vmatprep.subr.bf16.mxu0 0
    %3045 = vmatpush1.bf16.msra.mxu0 0
    %3046 = vmatprep.subr.bf16.mxu0 0
    %3047 = vmatpush1.bf16.msra.mxu0 0
    %3048 = vmatprep.mubr.bf16.mxu0 0
    %3049 = vmatmul.mubr.bf16.gmra.mrb[0].mxu0 %v3014
    %v3050 = vpop.f32.mrb[0].mxu0
    %v3051 = vadd.f32 %v2408, %v3050
    %v3052 = vpop.f32.mrb[0].mxu0
    %v3053 = vpop.f32.mrb[0].mxu0
    %v3054 = vpop.f32.mrb[0].mxu0
    %3055 = vdwg.mxu0
    %v3057 = vsel %vm2410, %v2402, 0
    %3059 = vmatprep.subr.bf16.mxu0 0
    %3060 = vmatpush1.bf16.msra.mxu0 %v1082
    %3061 = vmatprep.subr.bf16.mxu0 0
    %3062 = vmatpush1.bf16.msra.mxu0 0
    %3063 = vmatprep.subr.bf16.mxu0 0
    %3064 = vmatpush1.bf16.msra.mxu0 0
    %3065 = vmatprep.subr.bf16.mxu0 0
    %3066 = vmatpush1.bf16.msra.mxu0 0
    %3067 = vmatprep.subr.bf16.mxu0 0
    %3068 = vmatpush1.bf16.msra.mxu0 0
    %3069 = vmatprep.subr.bf16.mxu0 0
    %3070 = vmatpush1.bf16.msra.mxu0 0
    %3071 = vmatprep.subr.bf16.mxu0 0
    %3072 = vmatpush1.bf16.msra.mxu0 0
    %3073 = vmatprep.subr.bf16.mxu0 0
    %3074 = vmatpush1.bf16.msra.mxu0 0
    %3075 = vmatprep.subr.bf16.mxu0 0
    %3076 = vmatpush1.bf16.msra.mxu0 0
    %3077 = vmatprep.subr.bf16.mxu0 0
    %3078 = vmatpush1.bf16.msra.mxu0 0
    %3079 = vmatprep.subr.bf16.mxu0 0
    %3080 = vmatpush1.bf16.msra.mxu0 0
    %3081 = vmatprep.subr.bf16.mxu0 0
    %3082 = vmatpush1.bf16.msra.mxu0 0
    %3083 = vmatprep.subr.bf16.mxu0 0
    %3084 = vmatpush1.bf16.msra.mxu0 0
    %3085 = vmatprep.subr.bf16.mxu0 0
    %3086 = vmatpush1.bf16.msra.mxu0 0
    %3087 = vmatprep.subr.bf16.mxu0 0
    %3088 = vmatpush1.bf16.msra.mxu0 0
    %3089 = vmatprep.subr.bf16.mxu0 0
    %3090 = vmatpush1.bf16.msra.mxu0 0
    %3091 = vmatprep.mubr.bf16.mxu0 0
    %3092 = vmatmul.mubr.bf16.gmra.mrb[0].mxu0 %v3057
    %v3093 = vpop.f32.mrb[0].mxu0
    %v3094 = vadd.f32 %v2408, %v3093
    %v3095 = vpop.f32.mrb[0].mxu0
    %v3096 = vpop.f32.mrb[0].mxu0
    %v3097 = vpop.f32.mrb[0].mxu0
    %3098 = vdwg.mxu0
    %v3099 = vmul.f32 %v2449, 0.5
    %v3100 = vmul.f32 %v2492, 0.5
    %v3101 = vmul.f32 %v2535, 0.5
    %v3102 = vmul.f32 %v2578, 0.5
    %v3103 = vmul.f32 %v2621, 0.5
    %v3104 = vmul.f32 %v2664, 0.5
    %v3105 = vmul.f32 %v2707, 0.5
    %v3106 = vmul.f32 %v2750, 0.5
    %v3107 = vmul.f32 %v2793, 0.5
    %v3108 = vmul.f32 %v2836, 0.5
    %v3109 = vmul.f32 %v2879, 0.5
    %v3110 = vmul.f32 %v2922, 0.5
    %v3111 = vmul.f32 %v2965, 0.5
    %v3112 = vmul.f32 %v3008, 0.5
    %v3113 = vmul.f32 %v3051, 0.5
    %v3114 = vmul.f32 %v3094, 0.5
    %v3115 = vmul.f32 %v2449, 0.044715
    %v3116 = vmul.f32 %v2492, 0.044715
    %v3117 = vmul.f32 %v2535, 0.044715
    %v3118 = vmul.f32 %v2578, 0.044715
    %v3119 = vmul.f32 %v2621, 0.044715
    %v3120 = vmul.f32 %v2664, 0.044715
    %v3121 = vmul.f32 %v2707, 0.044715
    %v3122 = vmul.f32 %v2750, 0.044715
    %v3123 = vmul.f32 %v2793, 0.044715
    %v3124 = vmul.f32 %v2836, 0.044715
    %v3125 = vmul.f32 %v2879, 0.044715
    %v3126 = vmul.f32 %v2922, 0.044715
    %v3127 = vmul.f32 %v2965, 0.044715
    %v3128 = vmul.f32 %v3008, 0.044715
    %v3129 = vmul.f32 %v3051, 0.044715
    %v3130 = vmul.f32 %v3094, 0.044715
    %v3131 = vmul.f32 %v3115, %v2449
    %v3132 = vmul.f32 %v3116, %v2492
    %v3133 = vmul.f32 %v3117, %v2535
    %v3134 = vmul.f32 %v3118, %v2578
    %v3135 = vmul.f32 %v3119, %v2621
    %v3136 = vmul.f32 %v3120, %v2664
    %v3137 = vmul.f32 %v3121, %v2707
    %v3138 = vmul.f32 %v3122, %v2750
    %v3139 = vmul.f32 %v3123, %v2793
    %v3140 = vmul.f32 %v3124, %v2836
    %v3141 = vmul.f32 %v3125, %v2879
    %v3142 = vmul.f32 %v3126, %v2922
    %v3143 = vmul.f32 %v3127, %v2965
    %v3144 = vmul.f32 %v3128, %v3008
    %v3145 = vmul.f32 %v3129, %v3051
    %v3146 = vmul.f32 %v3130, %v3094
    %v3147 = vmul.f32 %v3131, %v2449
    %v3148 = vmul.f32 %v3132, %v2492
    %v3149 = vmul.f32 %v3133, %v2535
    %v3150 = vmul.f32 %v3134, %v2578
    %v3151 = vmul.f32 %v3135, %v2621
    %v3152 = vmul.f32 %v3136, %v2664
    %v3153 = vmul.f32 %v3137, %v2707
    %v3154 = vmul.f32 %v3138, %v2750
    %v3155 = vmul.f32 %v3139, %v2793
    %v3156 = vmul.f32 %v3140, %v2836
    %v3157 = vmul.f32 %v3141, %v2879
    %v3158 = vmul.f32 %v3142, %v2922
    %v3159 = vmul.f32 %v3143, %v2965
    %v3160 = vmul.f32 %v3144, %v3008
    %v3161 = vmul.f32 %v3145, %v3051
    %v3162 = vmul.f32 %v3146, %v3094
    %v3163 = vadd.f32 %v2449, %v3147
    %v3164 = vadd.f32 %v2492, %v3148
    %v3165 = vadd.f32 %v2535, %v3149
    %v3166 = vadd.f32 %v2578, %v3150
    %v3167 = vadd.f32 %v2621, %v3151
    %v3168 = vadd.f32 %v2664, %v3152
    %v3169 = vadd.f32 %v2707, %v3153
    %v3170 = vadd.f32 %v2750, %v3154
    %v3171 = vadd.f32 %v2793, %v3155
    %v3172 = vadd.f32 %v2836, %v3156
    %v3173 = vadd.f32 %v2879, %v3157
    %v3174 = vadd.f32 %v2922, %v3158
    %v3175 = vadd.f32 %v2965, %v3159
    %v3176 = vadd.f32 %v3008, %v3160
    %v3177 = vadd.f32 %v3051, %v3161
    %v3178 = vadd.f32 %v3094, %v3162
    %v3179 = vmul.f32 %v3163, 0.7978846
    %v3180 = vmul.f32 %v3164, 0.7978846
    %v3181 = vmul.f32 %v3165, 0.7978846
    %v3182 = vmul.f32 %v3166, 0.7978846
    %v3183 = vmul.f32 %v3167, 0.7978846
    %v3184 = vmul.f32 %v3168, 0.7978846
    %v3185 = vmul.f32 %v3169, 0.7978846
    %v3186 = vmul.f32 %v3170, 0.7978846
    %v3187 = vmul.f32 %v3171, 0.7978846
    %v3188 = vmul.f32 %v3172, 0.7978846
    %v3189 = vmul.f32 %v3173, 0.7978846
    %v3190 = vmul.f32 %v3174, 0.7978846
    %v3191 = vmul.f32 %v3175, 0.7978846
    %v3192 = vmul.f32 %v3176, 0.7978846
    %v3193 = vmul.f32 %v3177, 0.7978846
    %v3194 = vmul.f32 %v3178, 0.7978846
    %v3195 = vtanh.pop %v3179
    %v3196 = vtanh.pop %v3180
    %v3197 = vtanh.pop %v3181
    %v3198 = vtanh.pop %v3182
    %v3199 = vtanh.pop %v3183
    %v3200 = vtanh.pop %v3184
    %v3201 = vtanh.pop %v3185
    %v3202 = vtanh.pop %v3186
    %v3203 = vtanh.pop %v3187
    %v3204 = vtanh.pop %v3188
    %v3205 = vtanh.pop %v3189
    %v3206 = vtanh.pop %v3190
    %v3207 = vtanh.pop %v3191
    %v3208 = vtanh.pop %v3192
    %v3209 = vtanh.pop %v3193
    %v3210 = vtanh.pop %v3194
    %v3211 = vadd.f32 %v3195, 1.0
    %v3212 = vadd.f32 %v3196, 1.0
    %v3213 = vadd.f32 %v3197, 1.0
    %v3214 = vadd.f32 %v3198, 1.0
    %v3215 = vadd.f32 %v3199, 1.0
    %v3216 = vadd.f32 %v3200, 1.0
    %v3217 = vadd.f32 %v3201, 1.0
    %v3218 = vadd.f32 %v3202, 1.0
    %v3219 = vadd.f32 %v3203, 1.0
    %v3220 = vadd.f32 %v3204, 1.0
    %v3221 = vadd.f32 %v3205, 1.0
    %v3222 = vadd.f32 %v3206, 1.0
    %v3223 = vadd.f32 %v3207, 1.0
    %v3224 = vadd.f32 %v3208, 1.0
    %v3225 = vadd.f32 %v3209, 1.0
    %v3226 = vadd.f32 %v3210, 1.0
    %v3227 = vmul.f32 %v3099, %v3211
    %v3228 = vmul.f32 %v3100, %v3212
    %v3229 = vmul.f32 %v3101, %v3213
    %v3230 = vmul.f32 %v3102, %v3214
    %v3231 = vmul.f32 %v3103, %v3215
    %v3232 = vmul.f32 %v3104, %v3216
    %v3233 = vmul.f32 %v3105, %v3217
    %v3234 = vmul.f32 %v3106, %v3218
    %v3235 = vmul.f32 %v3107, %v3219
    %v3236 = vmul.f32 %v3108, %v3220
    %v3237 = vmul.f32 %v3109, %v3221
    %v3238 = vmul.f32 %v3110, %v3222
    %v3239 = vmul.f32 %v3111, %v3223
    %v3240 = vmul.f32 %v3112, %v3224
    %v3241 = vmul.f32 %v3113, %v3225
    %v3242 = vmul.f32 %v3114, %v3226
    %v3243 = vpack.c.bf16 %v3227, %v3227
    %v3244 = vpack.c.bf16 %v3228, %v3228
    %v3245 = vpack.c.bf16 %v3229, %v3229
    %v3246 = vpack.c.bf16 %v3230, %v3230
    %v3247 = vpack.c.bf16 %v3231, %v3231
    %v3248 = vpack.c.bf16 %v3232, %v3232
    %v3249 = vpack.c.bf16 %v3233, %v3233
    %v3250 = vpack.c.bf16 %v3234, %v3234
    %v3251 = vpack.c.bf16 %v3235, %v3235
    %v3252 = vpack.c.bf16 %v3236, %v3236
    %v3253 = vpack.c.bf16 %v3237, %v3237
    %v3254 = vpack.c.bf16 %v3238, %v3238
    %v3255 = vpack.c.bf16 %v3239, %v3239
    %v3256 = vpack.c.bf16 %v3240, %v3240
    %v3257 = vpack.c.bf16 %v3241, %v3241
    %v3258 = vpack.c.bf16 %v3242, %v3242
    %vm3259 = vcmask 64512
    %v3261 = vsel %vm3259, %v2355, 0
    %v3264 = vsel %vm3259, %v2356, 0
    %vm3266 = vcmask 1043456
    %v3268 = vsel %vm3266, %v3243, 0
    %3270 = vmatprep.subr.bf16.mxu0 0
    %3271 = vmatpush1.bf16.msra.mxu0 %v3268
    %3272 = vmatprep.subr.bf16.mxu0 0
    %3273 = vmatpush1.bf16.msra.mxu0 0
    %3274 = vmatprep.subr.bf16.mxu0 0
    %3275 = vmatpush1.bf16.msra.mxu0 0
    %3276 = vmatprep.subr.bf16.mxu0 0
    %3277 = vmatpush1.bf16.msra.mxu0 0
    %3278 = vmatprep.subr.bf16.mxu0 0
    %3279 = vmatpush1.bf16.msra.mxu0 0
    %3280 = vmatprep.subr.bf16.mxu0 0
    %3281 = vmatpush1.bf16.msra.mxu0 0
    %3282 = vmatprep.subr.bf16.mxu0 0
    %3283 = vmatpush1.bf16.msra.mxu0 0
    %3284 = vmatprep.subr.bf16.mxu0 0
    %3285 = vmatpush1.bf16.msra.mxu0 0
    %3286 = vmatprep.subr.bf16.mxu0 0
    %3287 = vmatpush1.bf16.msra.mxu0 0
    %3288 = vmatprep.subr.bf16.mxu0 0
    %3289 = vmatpush1.bf16.msra.mxu0 0
    %3290 = vmatprep.subr.bf16.mxu0 0
    %3291 = vmatpush1.bf16.msra.mxu0 0
    %3292 = vmatprep.subr.bf16.mxu0 0
    %3293 = vmatpush1.bf16.msra.mxu0 0
    %3294 = vmatprep.subr.bf16.mxu0 0
    %3295 = vmatpush1.bf16.msra.mxu0 0
    %3296 = vmatprep.subr.bf16.mxu0 0
    %3297 = vmatpush1.bf16.msra.mxu0 0
    %3298 = vmatprep.subr.bf16.mxu0 0
    %3299 = vmatpush1.bf16.msra.mxu0 0
    %3300 = vmatprep.subr.bf16.mxu0 0
    %3301 = vmatpush1.bf16.msra.mxu0 0
    %3302 = vmatprep.mubr.bf16.mxu0 0
    %3303 = vmatmul.mubr.bf16.gmra.mrb[0].mxu0 %v3261
    %v3304 = vpop.f32.mrb[0].mxu0
    %v3305 = vadd.f32 0.0, %v3304
    %v3306 = vpop.f32.mrb[0].mxu0
    %v3307 = vpop.f32.mrb[0].mxu0
    %v3308 = vadd.f32 0.0, %v3307
    %v3309 = vpop.f32.mrb[0].mxu0
    %3310 = vmatprep.mubr.bf16.mxu0 0
    %3311 = vmatmul.mubr.bf16.gmra.mrb[0].mxu0 %v3264
    %v3312 = vpop.f32.mrb[0].mxu0
    %v3313 = vadd.f32 0.0, %v3312
    %v3314 = vpop.f32.mrb[0].mxu0
    %v3315 = vpop.f32.mrb[0].mxu0
    %v3316 = vadd.f32 0.0, %v3315
    %v3317 = vpop.f32.mrb[0].mxu0
    %3318 = vdwg.mxu0
    %v3320 = vsel %vm3259, %v2357, 0
    %v3323 = vsel %vm3259, %v2358, 0
    %v3326 = vsel %vm3266, %v3244, 0
    %3328 = vmatprep.subr.bf16.mxu0 0
    %3329 = vmatpush1.bf16.msra.mxu0 %v3326
    %3330 = vmatprep.subr.bf16.mxu0 0
    %3331 = vmatpush1.bf16.msra.mxu0 0
    %3332 = vmatprep.subr.bf16.mxu0 0
    %3333 = vmatpush1.bf16.msra.mxu0 0
    %3334 = vmatprep.subr.bf16.mxu0 0
    %3335 = vmatpush1.bf16.msra.mxu0 0
    %3336 = vmatprep.subr.bf16.mxu0 0
    %3337 = vmatpush1.bf16.msra.mxu0 0
    %3338 = vmatprep.subr.bf16.mxu0 0
    %3339 = vmatpush1.bf16.msra.mxu0 0
    %3340 = vmatprep.subr.bf16.mxu0 0
    %3341 = vmatpush1.bf16.msra.mxu0 0
    %3342 = vmatprep.subr.bf16.mxu0 0
    %3343 = vmatpush1.bf16.msra.mxu0 0
    %3344 = vmatprep.subr.bf16.mxu0 0
    %3345 = vmatpush1.bf16.msra.mxu0 0
    %3346 = vmatprep.subr.bf16.mxu0 0
    %3347 = vmatpush1.bf16.msra.mxu0 0
    %3348 = vmatprep.subr.bf16.mxu0 0
    %3349 = vmatpush1.bf16.msra.mxu0 0
    %3350 = vmatprep.subr.bf16.mxu0 0
    %3351 = vmatpush1.bf16.msra.mxu0 0
    %3352 = vmatprep.subr.bf16.mxu0 0
    %3353 = vmatpush1.bf16.msra.mxu0 0
    %3354 = vmatprep.subr.bf16.mxu0 0
    %3355 = vmatpush1.bf16.msra.mxu0 0
    %3356 = vmatprep.subr.bf16.mxu0 0
    %3357 = vmatpush1.bf16.msra.mxu0 0
    %3358 = vmatprep.subr.bf16.mxu0 0
    %3359 = vmatpush1.bf16.msra.mxu0 0
    %3360 = vmatprep.mubr.bf16.mxu0 0
    %3361 = vmatmul.mubr.bf16.gmra.mrb[0].mxu0 %v3320
    %v3362 = vpop.f32.mrb[0].mxu0
    %v3363 = vadd.f32 0.0, %v3362
    %v3364 = vpop.f32.mrb[0].mxu0
    %v3365 = vpop.f32.mrb[0].mxu0
    %v3366 = vadd.f32 0.0, %v3365
    %v3367 = vpop.f32.mrb[0].mxu0
    %3368 = vmatprep.mubr.bf16.mxu0 0
    %3369 = vmatmul.mubr.bf16.gmra.mrb[0].mxu0 %v3323
    %v3370 = vpop.f32.mrb[0].mxu0
    %v3371 = vadd.f32 0.0, %v3370
    %v3372 = vpop.f32.mrb[0].mxu0
    %v3373 = vpop.f32.mrb[0].mxu0
    %v3374 = vadd.f32 0.0, %v3373
    %v3375 = vpop.f32.mrb[0].mxu0
    %3376 = vdwg.mxu0
    %v3378 = vsel %vm3259, %v2359, 0
    %v3381 = vsel %vm3259, %v2360, 0
    %v3384 = vsel %vm3266, %v3245, 0
    %3386 = vmatprep.subr.bf16.mxu0 0
    %3387 = vmatpush1.bf16.msra.mxu0 %v3384
    %3388 = vmatprep.subr.bf16.mxu0 0
    %3389 = vmatpush1.bf16.msra.mxu0 0
    %3390 = vmatprep.subr.bf16.mxu0 0
    %3391 = vmatpush1.bf16.msra.mxu0 0
    %3392 = vmatprep.subr.bf16.mxu0 0
    %3393 = vmatpush1.bf16.msra.mxu0 0
    %3394 = vmatprep.subr.bf16.mxu0 0
    %3395 = vmatpush1.bf16.msra.mxu0 0
    %3396 = vmatprep.subr.bf16.mxu0 0
    %3397 = vmatpush1.bf16.msra.mxu0 0
    %3398 = vmatprep.subr.bf16.mxu0 0
    %3399 = vmatpush1.bf16.msra.mxu0 0
    %3400 = vmatprep.subr.bf16.mxu0 0
    %3401 = vmatpush1.bf16.msra.mxu0 0
    %3402 = vmatprep.subr.bf16.mxu0 0
    %3403 = vmatpush1.bf16.msra.mxu0 0
    %3404 = vmatprep.subr.bf16.mxu0 0
    %3405 = vmatpush1.bf16.msra.mxu0 0
    %3406 = vmatprep.subr.bf16.mxu0 0
    %3407 = vmatpush1.bf16.msra.mxu0 0
    %3408 = vmatprep.subr.bf16.mxu0 0
    %3409 = vmatpush1.bf16.msra.mxu0 0
    %3410 = vmatprep.subr.bf16.mxu0 0
    %3411 = vmatpush1.bf16.msra.mxu0 0
    %3412 = vmatprep.subr.bf16.mxu0 0
    %3413 = vmatpush1.bf16.msra.mxu0 0
    %3414 = vmatprep.subr.bf16.mxu0 0
    %3415 = vmatpush1.bf16.msra.mxu0 0
    %3416 = vmatprep.subr.bf16.mxu0 0
    %3417 = vmatpush1.bf16.msra.mxu0 0
    %3418 = vmatprep.mubr.bf16.mxu0 0
    %3419 = vmatmul.mubr.bf16.gmra.mrb[0].mxu0 %v3378
    %v3420 = vpop.f32.mrb[0].mxu0
    %v3421 = vadd.f32 0.0, %v3420
    %v3422 = vpop.f32.mrb[0].mxu0
    %v3423 = vpop.f32.mrb[0].mxu0
    %v3424 = vadd.f32 0.0, %v3423
    %v3425 = vpop.f32.mrb[0].mxu0
    %3426 = vmatprep.mubr.bf16.mxu0 0
    %3427 = vmatmul.mubr.bf16.gmra.mrb[0].mxu0 %v3381
    %v3428 = vpop.f32.mrb[0].mxu0
    %v3429 = vadd.f32 0.0, %v3428
    %v3430 = vpop.f32.mrb[0].mxu0
    %v3431 = vpop.f32.mrb[0].mxu0
    %v3432 = vadd.f32 0.0, %v3431
    %v3433 = vpop.f32.mrb[0].mxu0
    %3434 = vdwg.mxu0
    %v3436 = vsel %vm3259, %v2361, 0
    %v3439 = vsel %vm3259, %v2362, 0
    %v3442 = vsel %vm3266, %v3246, 0
    %3444 = vmatprep.subr.bf16.mxu0 0
    %3445 = vmatpush1.bf16.msra.mxu0 %v3442
    %3446 = vmatprep.subr.bf16.mxu0 0
    %3447 = vmatpush1.bf16.msra.mxu0 0
    %3448 = vmatprep.subr.bf16.mxu0 0
    %3449 = vmatpush1.bf16.msra.mxu0 0
    %3450 = vmatprep.subr.bf16.mxu0 0
    %3451 = vmatpush1.bf16.msra.mxu0 0
    %3452 = vmatprep.subr.bf16.mxu0 0
    %3453 = vmatpush1.bf16.msra.mxu0 0
    %3454 = vmatprep.subr.bf16.mxu0 0
    %3455 = vmatpush1.bf16.msra.mxu0 0
    %3456 = vmatprep.subr.bf16.mxu0 0
    %3457 = vmatpush1.bf16.msra.mxu0 0
    %3458 = vmatprep.subr.bf16.mxu0 0
    %3459 = vmatpush1.bf16.msra.mxu0 0
    %3460 = vmatprep.subr.bf16.mxu0 0
    %3461 = vmatpush1.bf16.msra.mxu0 0
    %3462 = vmatprep.subr.bf16.mxu0 0
    %3463 = vmatpush1.bf16.msra.mxu0 0
    %3464 = vmatprep.subr.bf16.mxu0 0
    %3465 = vmatpush1.bf16.msra.mxu0 0
    %3466 = vmatprep.subr.bf16.mxu0 0
    %3467 = vmatpush1.bf16.msra.mxu0 0
    %3468 = vmatprep.subr.bf16.mxu0 0
    %3469 = vmatpush1.bf16.msra.mxu0 0
    %3470 = vmatprep.subr.bf16.mxu0 0
    %3471 = vmatpush1.bf16.msra.mxu0 0
    %3472 = vmatprep.subr.bf16.mxu0 0
    %3473 = vmatpush1.bf16.msra.mxu0 0
    %3474 = vmatprep.subr.bf16.mxu0 0
    %3475 = vmatpush1.bf16.msra.mxu0 0
    %3476 = vmatprep.mubr.bf16.mxu0 0
    %3477 = vmatmul.mubr.bf16.gmra.mrb[0].mxu0 %v3436
    %v3478 = vpop.f32.mrb[0].mxu0
    %v3479 = vadd.f32 0.0, %v3478
    %v3480 = vpop.f32.mrb[0].mxu0
    %v3481 = vpop.f32.mrb[0].mxu0
    %v3482 = vadd.f32 0.0, %v3481
    %v3483 = vpop.f32.mrb[0].mxu0
    %3484 = vmatprep.mubr.bf16.mxu0 0
    %3485 = vmatmul.mubr.bf16.gmra.mrb[0].mxu0 %v3439
    %v3486 = vpop.f32.mrb[0].mxu0
    %v3487 = vadd.f32 0.0, %v3486
    %v3488 = vpop.f32.mrb[0].mxu0
    %v3489 = vpop.f32.mrb[0].mxu0
    %v3490 = vadd.f32 0.0, %v3489
    %v3491 = vpop.f32.mrb[0].mxu0
    %3492 = vdwg.mxu0
    %v3494 = vsel %vm3259, %v2363, 0
    %v3497 = vsel %vm3259, %v2364, 0
    %v3500 = vsel %vm3266, %v3247, 0
    %3502 = vmatprep.subr.bf16.mxu0 0
    %3503 = vmatpush1.bf16.msra.mxu0 %v3500
    %3504 = vmatprep.subr.bf16.mxu0 0
    %3505 = vmatpush1.bf16.msra.mxu0 0
    %3506 = vmatprep.subr.bf16.mxu0 0
    %3507 = vmatpush1.bf16.msra.mxu0 0
    %3508 = vmatprep.subr.bf16.mxu0 0
    %3509 = vmatpush1.bf16.msra.mxu0 0
    %3510 = vmatprep.subr.bf16.mxu0 0
    %3511 = vmatpush1.bf16.msra.mxu0 0
    %3512 = vmatprep.subr.bf16.mxu0 0
    %3513 = vmatpush1.bf16.msra.mxu0 0
    %3514 = vmatprep.subr.bf16.mxu0 0
    %3515 = vmatpush1.bf16.msra.mxu0 0
    %3516 = vmatprep.subr.bf16.mxu0 0
    %3517 = vmatpush1.bf16.msra.mxu0 0
    %3518 = vmatprep.subr.bf16.mxu0 0
    %3519 = vmatpush1.bf16.msra.mxu0 0
    %3520 = vmatprep.subr.bf16.mxu0 0
    %3521 = vmatpush1.bf16.msra.mxu0 0
    %3522 = vmatprep.subr.bf16.mxu0 0
    %3523 = vmatpush1.bf16.msra.mxu0 0
    %3524 = vmatprep.subr.bf16.mxu0 0
    %3525 = vmatpush1.bf16.msra.mxu0 0
    %3526 = vmatprep.subr.bf16.mxu0 0
    %3527 = vmatpush1.bf16.msra.mxu0 0
    %3528 = vmatprep.subr.bf16.mxu0 0
    %3529 = vmatpush1.bf16.msra.mxu0 0
    %3530 = vmatprep.subr.bf16.mxu0 0
    %3531 = vmatpush1.bf16.msra.mxu0 0
    %3532 = vmatprep.subr.bf16.mxu0 0
    %3533 = vmatpush1.bf16.msra.mxu0 0
    %3534 = vmatprep.mubr.bf16.mxu0 0
    %3535 = vmatmul.mubr.bf16.gmra.mrb[0].mxu0 %v3494
    %v3536 = vpop.f32.mrb[0].mxu0
    %v3537 = vadd.f32 0.0, %v3536
    %v3538 = vpop.f32.mrb[0].mxu0
    %v3539 = vpop.f32.mrb[0].mxu0
    %v3540 = vadd.f32 0.0, %v3539
    %v3541 = vpop.f32.mrb[0].mxu0
    %3542 = vmatprep.mubr.bf16.mxu0 0
    %3543 = vmatmul.mubr.bf16.gmra.mrb[0].mxu0 %v3497
    %v3544 = vpop.f32.mrb[0].mxu0
    %v3545 = vadd.f32 0.0, %v3544
    %v3546 = vpop.f32.mrb[0].mxu0
    %v3547 = vpop.f32.mrb[0].mxu0
    %v3548 = vadd.f32 0.0, %v3547
    %v3549 = vpop.f32.mrb[0].mxu0
    %3550 = vdwg.mxu0
    %v3552 = vsel %vm3259, %v2365, 0
    %v3555 = vsel %vm3259, %v2366, 0
    %v3558 = vsel %vm3266, %v3248, 0
    %3560 = vmatprep.subr.bf16.mxu0 0
    %3561 = vmatpush1.bf16.msra.mxu0 %v3558
    %3562 = vmatprep.subr.bf16.mxu0 0
    %3563 = vmatpush1.bf16.msra.mxu0 0
    %3564 = vmatprep.subr.bf16.mxu0 0
    %3565 = vmatpush1.bf16.msra.mxu0 0
    %3566 = vmatprep.subr.bf16.mxu0 0
    %3567 = vmatpush1.bf16.msra.mxu0 0
    %3568 = vmatprep.subr.bf16.mxu0 0
    %3569 = vmatpush1.bf16.msra.mxu0 0
    %3570 = vmatprep.subr.bf16.mxu0 0
    %3571 = vmatpush1.bf16.msra.mxu0 0
    %3572 = vmatprep.subr.bf16.mxu0 0
    %3573 = vmatpush1.bf16.msra.mxu0 0
    %3574 = vmatprep.subr.bf16.mxu0 0
    %3575 = vmatpush1.bf16.msra.mxu0 0
    %3576 = vmatprep.subr.bf16.mxu0 0
    %3577 = vmatpush1.bf16.msra.mxu0 0
    %3578 = vmatprep.subr.bf16.mxu0 0
    %3579 = vmatpush1.bf16.msra.mxu0 0
    %3580 = vmatprep.subr.bf16.mxu0 0
    %3581 = vmatpush1.bf16.msra.mxu0 0
    %3582 = vmatprep.subr.bf16.mxu0 0
    %3583 = vmatpush1.bf16.msra.mxu0 0
    %3584 = vmatprep.subr.bf16.mxu0 0
    %3585 = vmatpush1.bf16.msra.mxu0 0
    %3586 = vmatprep.subr.bf16.mxu0 0
    %3587 = vmatpush1.bf16.msra.mxu0 0
    %3588 = vmatprep.subr.bf16.mxu0 0
    %3589 = vmatpush1.bf16.msra.mxu0 0
    %3590 = vmatprep.subr.bf16.mxu0 0
    %3591 = vmatpush1.bf16.msra.mxu0 0
    %3592 = vmatprep.mubr.bf16.mxu0 0
    %3593 = vmatmul.mubr.bf16.gmra.mrb[0].mxu0 %v3552
    %v3594 = vpop.f32.mrb[0].mxu0
    %v3595 = vadd.f32 0.0, %v3594
    %v3596 = vpop.f32.mrb[0].mxu0
    %v3597 = vpop.f32.mrb[0].mxu0
    %v3598 = vadd.f32 0.0, %v3597
    %v3599 = vpop.f32.mrb[0].mxu0
    %3600 = vmatprep.mubr.bf16.mxu0 0
    %3601 = vmatmul.mubr.bf16.gmra.mrb[0].mxu0 %v3555
    %v3602 = vpop.f32.mrb[0].mxu0
    %v3603 = vadd.f32 0.0, %v3602
    %v3604 = vpop.f32.mrb[0].mxu0
    %v3605 = vpop.f32.mrb[0].mxu0
    %v3606 = vadd.f32 0.0, %v3605
    %v3607 = vpop.f32.mrb[0].mxu0
    %3608 = vdwg.mxu0
    %v3610 = vsel %vm3259, %v2367, 0
    %v3613 = vsel %vm3259, %v2368, 0
    %v3616 = vsel %vm3266, %v3249, 0
    %3618 = vmatprep.subr.bf16.mxu0 0
    %3619 = vmatpush1.bf16.msra.mxu0 %v3616
    %3620 = vmatprep.subr.bf16.mxu0 0
    %3621 = vmatpush1.bf16.msra.mxu0 0
    %3622 = vmatprep.subr.bf16.mxu0 0
    %3623 = vmatpush1.bf16.msra.mxu0 0
    %3624 = vmatprep.subr.bf16.mxu0 0
    %3625 = vmatpush1.bf16.msra.mxu0 0
    %3626 = vmatprep.subr.bf16.mxu0 0
    %3627 = vmatpush1.bf16.msra.mxu0 0
    %3628 = vmatprep.subr.bf16.mxu0 0
    %3629 = vmatpush1.bf16.msra.mxu0 0
    %3630 = vmatprep.subr.bf16.mxu0 0
    %3631 = vmatpush1.bf16.msra.mxu0 0
    %3632 = vmatprep.subr.bf16.mxu0 0
    %3633 = vmatpush1.bf16.msra.mxu0 0
    %3634 = vmatprep.subr.bf16.mxu0 0
    %3635 = vmatpush1.bf16.msra.mxu0 0
    %3636 = vmatprep.subr.bf16.mxu0 0
    %3637 = vmatpush1.bf16.msra.mxu0 0
    %3638 = vmatprep.subr.bf16.mxu0 0
    %3639 = vmatpush1.bf16.msra.mxu0 0
    %3640 = vmatprep.subr.bf16.mxu0 0
    %3641 = vmatpush1.bf16.msra.mxu0 0
    %3642 = vmatprep.subr.bf16.mxu0 0
    %3643 = vmatpush1.bf16.msra.mxu0 0
    %3644 = vmatprep.subr.bf16.mxu0 0
    %3645 = vmatpush1.bf16.msra.mxu0 0
    %3646 = vmatprep.subr.bf16.mxu0 0
    %3647 = vmatpush1.bf16.msra.mxu0 0
    %3648 = vmatprep.subr.bf16.mxu0 0
    %3649 = vmatpush1.bf16.msra.mxu0 0
    %3650 = vmatprep.mubr.bf16.mxu0 0
    %3651 = vmatmul.mubr.bf16.gmra.mrb[0].mxu0 %v3610
    %v3652 = vpop.f32.mrb[0].mxu0
    %v3653 = vadd.f32 0.0, %v3652
    %v3654 = vpop.f32.mrb[0].mxu0
    %v3655 = vpop.f32.mrb[0].mxu0
    %v3656 = vadd.f32 0.0, %v3655
    %v3657 = vpop.f32.mrb[0].mxu0
    %3658 = vmatprep.mubr.bf16.mxu0 0
    %3659 = vmatmul.mubr.bf16.gmra.mrb[0].mxu0 %v3613
    %v3660 = vpop.f32.mrb[0].mxu0
    %v3661 = vadd.f32 0.0, %v3660
    %v3662 = vpop.f32.mrb[0].mxu0
    %v3663 = vpop.f32.mrb[0].mxu0
    %v3664 = vadd.f32 0.0, %v3663
    %v3665 = vpop.f32.mrb[0].mxu0
    %3666 = vdwg.mxu0
    %v3668 = vsel %vm3259, %v2369, 0
    %v3671 = vsel %vm3259, %v2370, 0
    %v3674 = vsel %vm3266, %v3250, 0
    %3676 = vmatprep.subr.bf16.mxu0 0
    %3677 = vmatpush1.bf16.msra.mxu0 %v3674
    %3678 = vmatprep.subr.bf16.mxu0 0
    %3679 = vmatpush1.bf16.msra.mxu0 0
    %3680 = vmatprep.subr.bf16.mxu0 0
    %3681 = vmatpush1.bf16.msra.mxu0 0
    %3682 = vmatprep.subr.bf16.mxu0 0
    %3683 = vmatpush1.bf16.msra.mxu0 0
    %3684 = vmatprep.subr.bf16.mxu0 0
    %3685 = vmatpush1.bf16.msra.mxu0 0
    %3686 = vmatprep.subr.bf16.mxu0 0
    %3687 = vmatpush1.bf16.msra.mxu0 0
    %3688 = vmatprep.subr.bf16.mxu0 0
    %3689 = vmatpush1.bf16.msra.mxu0 0
    %3690 = vmatprep.subr.bf16.mxu0 0
    %3691 = vmatpush1.bf16.msra.mxu0 0
    %3692 = vmatprep.subr.bf16.mxu0 0
    %3693 = vmatpush1.bf16.msra.mxu0 0
    %3694 = vmatprep.subr.bf16.mxu0 0
    %3695 = vmatpush1.bf16.msra.mxu0 0
    %3696 = vmatprep.subr.bf16.mxu0 0
    %3697 = vmatpush1.bf16.msra.mxu0 0
    %3698 = vmatprep.subr.bf16.mxu0 0
    %3699 = vmatpush1.bf16.msra.mxu0 0
    %3700 = vmatprep.subr.bf16.mxu0 0
    %3701 = vmatpush1.bf16.msra.mxu0 0
    %3702 = vmatprep.subr.bf16.mxu0 0
    %3703 = vmatpush1.bf16.msra.mxu0 0
    %3704 = vmatprep.subr.bf16.mxu0 0
    %3705 = vmatpush1.bf16.msra.mxu0 0
    %3706 = vmatprep.subr.bf16.mxu0 0
    %3707 = vmatpush1.bf16.msra.mxu0 0
    %3708 = vmatprep.mubr.bf16.mxu0 0
    %3709 = vmatmul.mubr.bf16.gmra.mrb[0].mxu0 %v3668
    %v3710 = vpop.f32.mrb[0].mxu0
    %v3711 = vadd.f32 0.0, %v3710
    %v3712 = vpop.f32.mrb[0].mxu0
    %v3713 = vpop.f32.mrb[0].mxu0
    %v3714 = vadd.f32 0.0, %v3713
    %v3715 = vpop.f32.mrb[0].mxu0
    %3716 = vmatprep.mubr.bf16.mxu0 0
    %3717 = vmatmul.mubr.bf16.gmra.mrb[0].mxu0 %v3671
    %v3718 = vpop.f32.mrb[0].mxu0
    %v3719 = vadd.f32 0.0, %v3718
    %v3720 = vpop.f32.mrb[0].mxu0
    %v3721 = vpop.f32.mrb[0].mxu0
    %v3722 = vadd.f32 0.0, %v3721
    %v3723 = vpop.f32.mrb[0].mxu0
    %3724 = vdwg.mxu0
    %v3726 = vsel %vm3259, %v2371, 0
    %v3729 = vsel %vm3259, %v2372, 0
    %v3732 = vsel %vm3266, %v3251, 0
    %3734 = vmatprep.subr.bf16.mxu0 0
    %3735 = vmatpush1.bf16.msra.mxu0 %v3732
    %3736 = vmatprep.subr.bf16.mxu0 0
    %3737 = vmatpush1.bf16.msra.mxu0 0
    %3738 = vmatprep.subr.bf16.mxu0 0
    %3739 = vmatpush1.bf16.msra.mxu0 0
    %3740 = vmatprep.subr.bf16.mxu0 0
    %3741 = vmatpush1.bf16.msra.mxu0 0
    %3742 = vmatprep.subr.bf16.mxu0 0
    %3743 = vmatpush1.bf16.msra.mxu0 0
    %3744 = vmatprep.subr.bf16.mxu0 0
    %3745 = vmatpush1.bf16.msra.mxu0 0
    %3746 = vmatprep.subr.bf16.mxu0 0
    %3747 = vmatpush1.bf16.msra.mxu0 0
    %3748 = vmatprep.subr.bf16.mxu0 0
    %3749 = vmatpush1.bf16.msra.mxu0 0
    %3750 = vmatprep.subr.bf16.mxu0 0
    %3751 = vmatpush1.bf16.msra.mxu0 0
    %3752 = vmatprep.subr.bf16.mxu0 0
    %3753 = vmatpush1.bf16.msra.mxu0 0
    %3754 = vmatprep.subr.bf16.mxu0 0
    %3755 = vmatpush1.bf16.msra.mxu0 0
    %3756 = vmatprep.subr.bf16.mxu0 0
    %3757 = vmatpush1.bf16.msra.mxu0 0
    %3758 = vmatprep.subr.bf16.mxu0 0
    %3759 = vmatpush1.bf16.msra.mxu0 0
    %3760 = vmatprep.subr.bf16.mxu0 0
    %3761 = vmatpush1.bf16.msra.mxu0 0
    %3762 = vmatprep.subr.bf16.mxu0 0
    %3763 = vmatpush1.bf16.msra.mxu0 0
    %3764 = vmatprep.subr.bf16.mxu0 0
    %3765 = vmatpush1.bf16.msra.mxu0 0
    %3766 = vmatprep.mubr.bf16.mxu0 0
    %3767 = vmatmul.mubr.bf16.gmra.mrb[0].mxu0 %v3726
    %v3768 = vpop.f32.mrb[0].mxu0
    %v3769 = vadd.f32 0.0, %v3768
    %v3770 = vpop.f32.mrb[0].mxu0
    %v3771 = vpop.f32.mrb[0].mxu0
    %v3772 = vadd.f32 0.0, %v3771
    %v3773 = vpop.f32.mrb[0].mxu0
    %3774 = vmatprep.mubr.bf16.mxu0 0
    %3775 = vmatmul.mubr.bf16.gmra.mrb[0].mxu0 %v3729
    %v3776 = vpop.f32.mrb[0].mxu0
    %v3777 = vadd.f32 0.0, %v3776
    %v3778 = vpop.f32.mrb[0].mxu0
    %v3779 = vpop.f32.mrb[0].mxu0
    %v3780 = vadd.f32 0.0, %v3779
    %v3781 = vpop.f32.mrb[0].mxu0
    %3782 = vdwg.mxu0
    %v3784 = vsel %vm3259, %v2373, 0
    %v3787 = vsel %vm3259, %v2374, 0
    %v3790 = vsel %vm3266, %v3252, 0
    %3792 = vmatprep.subr.bf16.mxu0 0
    %3793 = vmatpush1.bf16.msra.mxu0 %v3790
    %3794 = vmatprep.subr.bf16.mxu0 0
    %3795 = vmatpush1.bf16.msra.mxu0 0
    %3796 = vmatprep.subr.bf16.mxu0 0
    %3797 = vmatpush1.bf16.msra.mxu0 0
    %3798 = vmatprep.subr.bf16.mxu0 0
    %3799 = vmatpush1.bf16.msra.mxu0 0
    %3800 = vmatprep.subr.bf16.mxu0 0
    %3801 = vmatpush1.bf16.msra.mxu0 0
    %3802 = vmatprep.subr.bf16.mxu0 0
    %3803 = vmatpush1.bf16.msra.mxu0 0
    %3804 = vmatprep.subr.bf16.mxu0 0
    %3805 = vmatpush1.bf16.msra.mxu0 0
    %3806 = vmatprep.subr.bf16.mxu0 0
    %3807 = vmatpush1.bf16.msra.mxu0 0
    %3808 = vmatprep.subr.bf16.mxu0 0
    %3809 = vmatpush1.bf16.msra.mxu0 0
    %3810 = vmatprep.subr.bf16.mxu0 0
    %3811 = vmatpush1.bf16.msra.mxu0 0
    %3812 = vmatprep.subr.bf16.mxu0 0
    %3813 = vmatpush1.bf16.msra.mxu0 0
    %3814 = vmatprep.subr.bf16.mxu0 0
    %3815 = vmatpush1.bf16.msra.mxu0 0
    %3816 = vmatprep.subr.bf16.mxu0 0
    %3817 = vmatpush1.bf16.msra.mxu0 0
    %3818 = vmatprep.subr.bf16.mxu0 0
    %3819 = vmatpush1.bf16.msra.mxu0 0
    %3820 = vmatprep.subr.bf16.mxu0 0
    %3821 = vmatpush1.bf16.msra.mxu0 0
    %3822 = vmatprep.subr.bf16.mxu0 0
    %3823 = vmatpush1.bf16.msra.mxu0 0
    %3824 = vmatprep.mubr.bf16.mxu0 0
    %3825 = vmatmul.mubr.bf16.gmra.mrb[0].mxu0 %v3784
    %v3826 = vpop.f32.mrb[0].mxu0
    %v3827 = vadd.f32 0.0, %v3826
    %v3828 = vpop.f32.mrb[0].mxu0
    %v3829 = vpop.f32.mrb[0].mxu0
    %v3830 = vadd.f32 0.0, %v3829
    %v3831 = vpop.f32.mrb[0].mxu0
    %3832 = vmatprep.mubr.bf16.mxu0 0
    %3833 = vmatmul.mubr.bf16.gmra.mrb[0].mxu0 %v3787
    %v3834 = vpop.f32.mrb[0].mxu0
    %v3835 = vadd.f32 0.0, %v3834
    %v3836 = vpop.f32.mrb[0].mxu0
    %v3837 = vpop.f32.mrb[0].mxu0
    %v3838 = vadd.f32 0.0, %v3837
    %v3839 = vpop.f32.mrb[0].mxu0
    %3840 = vdwg.mxu0
    %v3842 = vsel %vm3259, %v2375, 0
    %v3845 = vsel %vm3259, %v2376, 0
    %v3848 = vsel %vm3266, %v3253, 0
    %3850 = vmatprep.subr.bf16.mxu0 0
    %3851 = vmatpush1.bf16.msra.mxu0 %v3848
    %3852 = vmatprep.subr.bf16.mxu0 0
    %3853 = vmatpush1.bf16.msra.mxu0 0
    %3854 = vmatprep.subr.bf16.mxu0 0
    %3855 = vmatpush1.bf16.msra.mxu0 0
    %3856 = vmatprep.subr.bf16.mxu0 0
    %3857 = vmatpush1.bf16.msra.mxu0 0
    %3858 = vmatprep.subr.bf16.mxu0 0
    %3859 = vmatpush1.bf16.msra.mxu0 0
    %3860 = vmatprep.subr.bf16.mxu0 0
    %3861 = vmatpush1.bf16.msra.mxu0 0
    %3862 = vmatprep.subr.bf16.mxu0 0
    %3863 = vmatpush1.bf16.msra.mxu0 0
    %3864 = vmatprep.subr.bf16.mxu0 0
    %3865 = vmatpush1.bf16.msra.mxu0 0
    %3866 = vmatprep.subr.bf16.mxu0 0
    %3867 = vmatpush1.bf16.msra.mxu0 0
    %3868 = vmatprep.subr.bf16.mxu0 0
    %3869 = vmatpush1.bf16.msra.mxu0 0
    %3870 = vmatprep.subr.bf16.mxu0 0
    %3871 = vmatpush1.bf16.msra.mxu0 0
    %3872 = vmatprep.subr.bf16.mxu0 0
    %3873 = vmatpush1.bf16.msra.mxu0 0
    %3874 = vmatprep.subr.bf16.mxu0 0
    %3875 = vmatpush1.bf16.msra.mxu0 0
    %3876 = vmatprep.subr.bf16.mxu0 0
    %3877 = vmatpush1.bf16.msra.mxu0 0
    %3878 = vmatprep.subr.bf16.mxu0 0
    %3879 = vmatpush1.bf16.msra.mxu0 0
    %3880 = vmatprep.subr.bf16.mxu0 0
    %3881 = vmatpush1.bf16.msra.mxu0 0
    %3882 = vmatprep.mubr.bf16.mxu0 0
    %3883 = vmatmul.mubr.bf16.gmra.mrb[0].mxu0 %v3842
    %v3884 = vpop.f32.mrb[0].mxu0
    %v3885 = vadd.f32 0.0, %v3884
    %v3886 = vpop.f32.mrb[0].mxu0
    %v3887 = vpop.f32.mrb[0].mxu0
    %v3888 = vadd.f32 0.0, %v3887
    %v3889 = vpop.f32.mrb[0].mxu0
    %3890 = vmatprep.mubr.bf16.mxu0 0
    %3891 = vmatmul.mubr.bf16.gmra.mrb[0].mxu0 %v3845
    %v3892 = vpop.f32.mrb[0].mxu0
    %v3893 = vadd.f32 0.0, %v3892
    %v3894 = vpop.f32.mrb[0].mxu0
    %v3895 = vpop.f32.mrb[0].mxu0
    %v3896 = vadd.f32 0.0, %v3895
    %v3897 = vpop.f32.mrb[0].mxu0
    %3898 = vdwg.mxu0
    %v3900 = vsel %vm3259, %v2377, 0
    %v3903 = vsel %vm3259, %v2378, 0
    %v3906 = vsel %vm3266, %v3254, 0
    %3908 = vmatprep.subr.bf16.mxu0 0
    %3909 = vmatpush1.bf16.msra.mxu0 %v3906
    %3910 = vmatprep.subr.bf16.mxu0 0
    %3911 = vmatpush1.bf16.msra.mxu0 0
    %3912 = vmatprep.subr.bf16.mxu0 0
    %3913 = vmatpush1.bf16.msra.mxu0 0
    %3914 = vmatprep.subr.bf16.mxu0 0
    %3915 = vmatpush1.bf16.msra.mxu0 0
    %3916 = vmatprep.subr.bf16.mxu0 0
    %3917 = vmatpush1.bf16.msra.mxu0 0
    %3918 = vmatprep.subr.bf16.mxu0 0
    %3919 = vmatpush1.bf16.msra.mxu0 0
    %3920 = vmatprep.subr.bf16.mxu0 0
    %3921 = vmatpush1.bf16.msra.mxu0 0
    %3922 = vmatprep.subr.bf16.mxu0 0
    %3923 = vmatpush1.bf16.msra.mxu0 0
    %3924 = vmatprep.subr.bf16.mxu0 0
    %3925 = vmatpush1.bf16.msra.mxu0 0
    %3926 = vmatprep.subr.bf16.mxu0 0
    %3927 = vmatpush1.bf16.msra.mxu0 0
    %3928 = vmatprep.subr.bf16.mxu0 0
    %3929 = vmatpush1.bf16.msra.mxu0 0
    %3930 = vmatprep.subr.bf16.mxu0 0
    %3931 = vmatpush1.bf16.msra.mxu0 0
    %3932 = vmatprep.subr.bf16.mxu0 0
    %3933 = vmatpush1.bf16.msra.mxu0 0
    %3934 = vmatprep.subr.bf16.mxu0 0
    %3935 = vmatpush1.bf16.msra.mxu0 0
    %3936 = vmatprep.subr.bf16.mxu0 0
    %3937 = vmatpush1.bf16.msra.mxu0 0
    %3938 = vmatprep.subr.bf16.mxu0 0
    %3939 = vmatpush1.bf16.msra.mxu0 0
    %3940 = vmatprep.mubr.bf16.mxu0 0
    %3941 = vmatmul.mubr.bf16.gmra.mrb[0].mxu0 %v3900
    %v3942 = vpop.f32.mrb[0].mxu0
    %v3943 = vadd.f32 0.0, %v3942
    %v3944 = vpop.f32.mrb[0].mxu0
    %v3945 = vpop.f32.mrb[0].mxu0
    %v3946 = vadd.f32 0.0, %v3945
    %v3947 = vpop.f32.mrb[0].mxu0
    %3948 = vmatprep.mubr.bf16.mxu0 0
    %3949 = vmatmul.mubr.bf16.gmra.mrb[0].mxu0 %v3903
    %v3950 = vpop.f32.mrb[0].mxu0
    %v3951 = vadd.f32 0.0, %v3950
    %v3952 = vpop.f32.mrb[0].mxu0
    %v3953 = vpop.f32.mrb[0].mxu0
    %v3954 = vadd.f32 0.0, %v3953
    %v3955 = vpop.f32.mrb[0].mxu0
    %3956 = vdwg.mxu0
    %v3958 = vsel %vm3259, %v2379, 0
    %v3961 = vsel %vm3259, %v2380, 0
    %v3964 = vsel %vm3266, %v3255, 0
    %3966 = vmatprep.subr.bf16.mxu0 0
    %3967 = vmatpush1.bf16.msra.mxu0 %v3964
    %3968 = vmatprep.subr.bf16.mxu0 0
    %3969 = vmatpush1.bf16.msra.mxu0 0
    %3970 = vmatprep.subr.bf16.mxu0 0
    %3971 = vmatpush1.bf16.msra.mxu0 0
    %3972 = vmatprep.subr.bf16.mxu0 0
    %3973 = vmatpush1.bf16.msra.mxu0 0
    %3974 = vmatprep.subr.bf16.mxu0 0
    %3975 = vmatpush1.bf16.msra.mxu0 0
    %3976 = vmatprep.subr.bf16.mxu0 0
    %3977 = vmatpush1.bf16.msra.mxu0 0
    %3978 = vmatprep.subr.bf16.mxu0 0
    %3979 = vmatpush1.bf16.msra.mxu0 0
    %3980 = vmatprep.subr.bf16.mxu0 0
    %3981 = vmatpush1.bf16.msra.mxu0 0
    %3982 = vmatprep.subr.bf16.mxu0 0
    %3983 = vmatpush1.bf16.msra.mxu0 0
    %3984 = vmatprep.subr.bf16.mxu0 0
    %3985 = vmatpush1.bf16.msra.mxu0 0
    %3986 = vmatprep.subr.bf16.mxu0 0
    %3987 = vmatpush1.bf16.msra.mxu0 0
    %3988 = vmatprep.subr.bf16.mxu0 0
    %3989 = vmatpush1.bf16.msra.mxu0 0
    %3990 = vmatprep.subr.bf16.mxu0 0
    %3991 = vmatpush1.bf16.msra.mxu0 0
    %3992 = vmatprep.subr.bf16.mxu0 0
    %3993 = vmatpush1.bf16.msra.mxu0 0
    %3994 = vmatprep.subr.bf16.mxu0 0
    %3995 = vmatpush1.bf16.msra.mxu0 0
    %3996 = vmatprep.subr.bf16.mxu0 0
    %3997 = vmatpush1.bf16.msra.mxu0 0
    %3998 = vmatprep.mubr.bf16.mxu0 0
    %3999 = vmatmul.mubr.bf16.gmra.mrb[0].mxu0 %v3958
    %v4000 = vpop.f32.mrb[0].mxu0
    %v4001 = vadd.f32 0.0, %v4000
    %v4002 = vpop.f32.mrb[0].mxu0
    %v4003 = vpop.f32.mrb[0].mxu0
    %v4004 = vadd.f32 0.0, %v4003
    %v4005 = vpop.f32.mrb[0].mxu0
    %4006 = vmatprep.mubr.bf16.mxu0 0
    %4007 = vmatmul.mubr.bf16.gmra.mrb[0].mxu0 %v3961
    %v4008 = vpop.f32.mrb[0].mxu0
    %v4009 = vadd.f32 0.0, %v4008
    %v4010 = vpop.f32.mrb[0].mxu0
    %v4011 = vpop.f32.mrb[0].mxu0
    %v4012 = vadd.f32 0.0, %v4011
    %v4013 = vpop.f32.mrb[0].mxu0
    %4014 = vdwg.mxu0
    %v4016 = vsel %vm3259, %v2381, 0
    %v4019 = vsel %vm3259, %v2382, 0
    %v4022 = vsel %vm3266, %v3256, 0
    %4024 = vmatprep.subr.bf16.mxu0 0
    %4025 = vmatpush1.bf16.msra.mxu0 %v4022
    %4026 = vmatprep.subr.bf16.mxu0 0
    %4027 = vmatpush1.bf16.msra.mxu0 0
    %4028 = vmatprep.subr.bf16.mxu0 0
    %4029 = vmatpush1.bf16.msra.mxu0 0
    %4030 = vmatprep.subr.bf16.mxu0 0
    %4031 = vmatpush1.bf16.msra.mxu0 0
    %4032 = vmatprep.subr.bf16.mxu0 0
    %4033 = vmatpush1.bf16.msra.mxu0 0
    %4034 = vmatprep.subr.bf16.mxu0 0
    %4035 = vmatpush1.bf16.msra.mxu0 0
    %4036 = vmatprep.subr.bf16.mxu0 0
    %4037 = vmatpush1.bf16.msra.mxu0 0
    %4038 = vmatprep.subr.bf16.mxu0 0
    %4039 = vmatpush1.bf16.msra.mxu0 0
    %4040 = vmatprep.subr.bf16.mxu0 0
    %4041 = vmatpush1.bf16.msra.mxu0 0
    %4042 = vmatprep.subr.bf16.mxu0 0
    %4043 = vmatpush1.bf16.msra.mxu0 0
    %4044 = vmatprep.subr.bf16.mxu0 0
    %4045 = vmatpush1.bf16.msra.mxu0 0
    %4046 = vmatprep.subr.bf16.mxu0 0
    %4047 = vmatpush1.bf16.msra.mxu0 0
    %4048 = vmatprep.subr.bf16.mxu0 0
    %4049 = vmatpush1.bf16.msra.mxu0 0
    %4050 = vmatprep.subr.bf16.mxu0 0
    %4051 = vmatpush1.bf16.msra.mxu0 0
    %4052 = vmatprep.subr.bf16.mxu0 0
    %4053 = vmatpush1.bf16.msra.mxu0 0
    %4054 = vmatprep.subr.bf16.mxu0 0
    %4055 = vmatpush1.bf16.msra.mxu0 0
    %4056 = vmatprep.mubr.bf16.mxu0 0
    %4057 = vmatmul.mubr.bf16.gmra.mrb[0].mxu0 %v4016
    %v4058 = vpop.f32.mrb[0].mxu0
    %v4059 = vadd.f32 0.0, %v4058
    %v4060 = vpop.f32.mrb[0].mxu0
    %v4061 = vpop.f32.mrb[0].mxu0
    %v4062 = vadd.f32 0.0, %v4061
    %v4063 = vpop.f32.mrb[0].mxu0
    %4064 = vmatprep.mubr.bf16.mxu0 0
    %4065 = vmatmul.mubr.bf16.gmra.mrb[0].mxu0 %v4019
    %v4066 = vpop.f32.mrb[0].mxu0
    %v4067 = vadd.f32 0.0, %v4066
    %v4068 = vpop.f32.mrb[0].mxu0
    %v4069 = vpop.f32.mrb[0].mxu0
    %v4070 = vadd.f32 0.0, %v4069
    %v4071 = vpop.f32.mrb[0].mxu0
    %4072 = vdwg.mxu0
    %v4074 = vsel %vm3259, %v2383, 0
    %v4077 = vsel %vm3259, %v2384, 0
    %v4080 = vsel %vm3266, %v3257, 0
    %4082 = vmatprep.subr.bf16.mxu0 0
    %4083 = vmatpush1.bf16.msra.mxu0 %v4080
    %4084 = vmatprep.subr.bf16.mxu0 0
    %4085 = vmatpush1.bf16.msra.mxu0 0
    %4086 = vmatprep.subr.bf16.mxu0 0
    %4087 = vmatpush1.bf16.msra.mxu0 0
    %4088 = vmatprep.subr.bf16.mxu0 0
    %4089 = vmatpush1.bf16.msra.mxu0 0
    %4090 = vmatprep.subr.bf16.mxu0 0
    %4091 = vmatpush1.bf16.msra.mxu0 0
    %4092 = vmatprep.subr.bf16.mxu0 0
    %4093 = vmatpush1.bf16.msra.mxu0 0
    %4094 = vmatprep.subr.bf16.mxu0 0
    %4095 = vmatpush1.bf16.msra.mxu0 0
    %4096 = vmatprep.subr.bf16.mxu0 0
    %4097 = vmatpush1.bf16.msra.mxu0 0
    %4098 = vmatprep.subr.bf16.mxu0 0
    %4099 = vmatpush1.bf16.msra.mxu0 0
    %4100 = vmatprep.subr.bf16.mxu0 0
    %4101 = vmatpush1.bf16.msra.mxu0 0
    %4102 = vmatprep.subr.bf16.mxu0 0
    %4103 = vmatpush1.bf16.msra.mxu0 0
    %4104 = vmatprep.subr.bf16.mxu0 0
    %4105 = vmatpush1.bf16.msra.mxu0 0
    %4106 = vmatprep.subr.bf16.mxu0 0
    %4107 = vmatpush1.bf16.msra.mxu0 0
    %4108 = vmatprep.subr.bf16.mxu0 0
    %4109 = vmatpush1.bf16.msra.mxu0 0
    %4110 = vmatprep.subr.bf16.mxu0 0
    %4111 = vmatpush1.bf16.msra.mxu0 0
    %4112 = vmatprep.subr.bf16.mxu0 0
    %4113 = vmatpush1.bf16.msra.mxu0 0
    %4114 = vmatprep.mubr.bf16.mxu0 0
    %4115 = vmatmul.mubr.bf16.gmra.mrb[0].mxu0 %v4074
    %v4116 = vpop.f32.mrb[0].mxu0
    %v4117 = vadd.f32 0.0, %v4116
    %v4118 = vpop.f32.mrb[0].mxu0
    %v4119 = vpop.f32.mrb[0].mxu0
    %v4120 = vadd.f32 0.0, %v4119
    %v4121 = vpop.f32.mrb[0].mxu0
    %4122 = vmatprep.mubr.bf16.mxu0 0
    %4123 = vmatmul.mubr.bf16.gmra.mrb[0].mxu0 %v4077
    %v4124 = vpop.f32.mrb[0].mxu0
    %v4125 = vadd.f32 0.0, %v4124
    %v4126 = vpop.f32.mrb[0].mxu0
    %v4127 = vpop.f32.mrb[0].mxu0
    %v4128 = vadd.f32 0.0, %v4127
    %v4129 = vpop.f32.mrb[0].mxu0
    %4130 = vdwg.mxu0
    %v4132 = vsel %vm3259, %v2385, 0
    %v4135 = vsel %vm3259, %v2386, 0
    %v4138 = vsel %vm3266, %v3258, 0
    %4140 = vmatprep.subr.bf16.mxu0 0
    %4141 = vmatpush1.bf16.msra.mxu0 %v4138
    %4142 = vmatprep.subr.bf16.mxu0 0
    %4143 = vmatpush1.bf16.msra.mxu0 0
    %4144 = vmatprep.subr.bf16.mxu0 0
    %4145 = vmatpush1.bf16.msra.mxu0 0
    %4146 = vmatprep.subr.bf16.mxu0 0
    %4147 = vmatpush1.bf16.msra.mxu0 0
    %4148 = vmatprep.subr.bf16.mxu0 0
    %4149 = vmatpush1.bf16.msra.mxu0 0
    %4150 = vmatprep.subr.bf16.mxu0 0
    %4151 = vmatpush1.bf16.msra.mxu0 0
    %4152 = vmatprep.subr.bf16.mxu0 0
    %4153 = vmatpush1.bf16.msra.mxu0 0
    %4154 = vmatprep.subr.bf16.mxu0 0
    %4155 = vmatpush1.bf16.msra.mxu0 0
    %4156 = vmatprep.subr.bf16.mxu0 0
    %4157 = vmatpush1.bf16.msra.mxu0 0
    %4158 = vmatprep.subr.bf16.mxu0 0
    %4159 = vmatpush1.bf16.msra.mxu0 0
    %4160 = vmatprep.subr.bf16.mxu0 0
    %4161 = vmatpush1.bf16.msra.mxu0 0
    %4162 = vmatprep.subr.bf16.mxu0 0
    %4163 = vmatpush1.bf16.msra.mxu0 0
    %4164 = vmatprep.subr.bf16.mxu0 0
    %4165 = vmatpush1.bf16.msra.mxu0 0
    %4166 = vmatprep.subr.bf16.mxu0 0
    %4167 = vmatpush1.bf16.msra.mxu0 0
    %4168 = vmatprep.subr.bf16.mxu0 0
    %4169 = vmatpush1.bf16.msra.mxu0 0
    %4170 = vmatprep.subr.bf16.mxu0 0
    %4171 = vmatpush1.bf16.msra.mxu0 0
    %4172 = vmatprep.mubr.bf16.mxu0 0
    %4173 = vmatmul.mubr.bf16.gmra.mrb[0].mxu0 %v4132
    %v4174 = vpop.f32.mrb[0].mxu0
    %v4175 = vadd.f32 0.0, %v4174
    %v4176 = vpop.f32.mrb[0].mxu0
    %v4177 = vpop.f32.mrb[0].mxu0
    %v4178 = vadd.f32 0.0, %v4177
    %v4179 = vpop.f32.mrb[0].mxu0
    %4180 = vmatprep.mubr.bf16.mxu0 0
    %4181 = vmatmul.mubr.bf16.gmra.mrb[0].mxu0 %v4135
    %v4182 = vpop.f32.mrb[0].mxu0
    %v4183 = vadd.f32 0.0, %v4182
    %v4184 = vpop.f32.mrb[0].mxu0
    %v4185 = vpop.f32.mrb[0].mxu0
    %v4186 = vadd.f32 0.0, %v4185
    %v4187 = vpop.f32.mrb[0].mxu0
    %4188 = vdwg.mxu0
    %v4189 = vcombine.low %v3305, %v3421
    %v4190 = vcombine.high %v3305, %v3421
    %v4192 = vunpack.c.l.s4 1983009808
    %v4193 = vunpack.c.0.s8 %v4192
    %v4194 = vlaneseq
    %v4195 = vshrl.u32 %v4194, 7
    %v4196 = vsub.s32 %v4193, %v4195
    %v4197 = vrot.slane %v4189, %v4196
    %v4199 = vunpack.c.l.s4 1983009808
    %v4200 = vunpack.c.0.s8 %v4199
    %v4201 = vlaneseq
    %v4202 = vshrl.u32 %v4201, 7
    %v4203 = vsub.s32 %v4200, %v4202
    %v4204 = vrot.slane %v4190, %v4203
    %v4205 = vcombine.low %v3363, %v3479
    %v4206 = vcombine.high %v3363, %v3479
    %v4208 = vunpack.c.l.s4 1983009808
    %v4209 = vunpack.c.0.s8 %v4208
    %v4210 = vlaneseq
    %v4211 = vshrl.u32 %v4210, 7
    %v4212 = vsub.s32 %v4209, %v4211
    %v4213 = vrot.slane %v4205, %v4212
    %v4215 = vunpack.c.l.s4 1983009808
    %v4216 = vunpack.c.0.s8 %v4215
    %v4217 = vlaneseq
    %v4218 = vshrl.u32 %v4217, 7
    %v4219 = vsub.s32 %v4216, %v4218
    %v4220 = vrot.slane %v4206, %v4219
    %v4221 = vcombine.low %v3537, %v3653
    %v4222 = vcombine.high %v3537, %v3653
    %v4224 = vunpack.c.l.s4 1983009808
    %v4225 = vunpack.c.0.s8 %v4224
    %v4226 = vlaneseq
    %v4227 = vshrl.u32 %v4226, 7
    %v4228 = vsub.s32 %v4225, %v4227
    %v4229 = vrot.slane %v4221, %v4228
    %v4231 = vunpack.c.l.s4 1983009808
    %v4232 = vunpack.c.0.s8 %v4231
    %v4233 = vlaneseq
    %v4234 = vshrl.u32 %v4233, 7
    %v4235 = vsub.s32 %v4232, %v4234
    %v4236 = vrot.slane %v4222, %v4235
    %v4237 = vcombine.low %v3595, %v3711
    %v4238 = vcombine.high %v3595, %v3711
    %v4240 = vunpack.c.l.s4 1983009808
    %v4241 = vunpack.c.0.s8 %v4240
    %v4242 = vlaneseq
    %v4243 = vshrl.u32 %v4242, 7
    %v4244 = vsub.s32 %v4241, %v4243
    %v4245 = vrot.slane %v4237, %v4244
    %v4247 = vunpack.c.l.s4 1983009808
    %v4248 = vunpack.c.0.s8 %v4247
    %v4249 = vlaneseq
    %v4250 = vshrl.u32 %v4249, 7
    %v4251 = vsub.s32 %v4248, %v4250
    %v4252 = vrot.slane %v4238, %v4251
    %v4253 = vcombine.low %v4197, %v4213
    %v4254 = vcombine.high %v4197, %v4213
    %v4256 = vunpack.c.l.s4 1934713408
    %v4257 = vunpack.c.0.s8 %v4256
    %v4258 = vlaneseq
    %v4259 = vshrl.u32 %v4258, 7
    %v4260 = vsub.s32 %v4257, %v4259
    %v4261 = vrot.slane %v4253, %v4260
    %v4263 = vunpack.c.l.s4 1934713408
    %v4264 = vunpack.c.0.s8 %v4263
    %v4265 = vlaneseq
    %v4266 = vshrl.u32 %v4265, 7
    %v4267 = vsub.s32 %v4264, %v4266
    %v4268 = vrot.slane %v4254, %v4267
    %v4269 = vcombine.low %v4204, %v4220
    %v4270 = vcombine.high %v4204, %v4220
    %v4272 = vunpack.c.l.s4 1934713408
    %v4273 = vunpack.c.0.s8 %v4272
    %v4274 = vlaneseq
    %v4275 = vshrl.u32 %v4274, 7
    %v4276 = vsub.s32 %v4273, %v4275
    %v4277 = vrot.slane %v4269, %v4276
    %v4279 = vunpack.c.l.s4 1934713408
    %v4280 = vunpack.c.0.s8 %v4279
    %v4281 = vlaneseq
    %v4282 = vshrl.u32 %v4281, 7
    %v4283 = vsub.s32 %v4280, %v4282
    %v4284 = vrot.slane %v4270, %v4283
    %v4285 = vcombine.low %v4229, %v4245
    %v4286 = vcombine.high %v4229, %v4245
    %v4288 = vunpack.c.l.s4 1934713408
    %v4289 = vunpack.c.0.s8 %v4288
    %v4290 = vlaneseq
    %v4291 = vshrl.u32 %v4290, 7
    %v4292 = vsub.s32 %v4289, %v4291
    %v4293 = vrot.slane %v4285, %v4292
    %v4295 = vunpack.c.l.s4 1934713408
    %v4296 = vunpack.c.0.s8 %v4295
    %v4297 = vlaneseq
    %v4298 = vshrl.u32 %v4297, 7
    %v4299 = vsub.s32 %v4296, %v4298
    %v4300 = vrot.slane %v4286, %v4299
    %v4301 = vcombine.low %v4236, %v4252
    %v4302 = vcombine.high %v4236, %v4252
    %v4304 = vunpack.c.l.s4 1934713408
    %v4305 = vunpack.c.0.s8 %v4304
    %v4306 = vlaneseq
    %v4307 = vshrl.u32 %v4306, 7
    %v4308 = vsub.s32 %v4305, %v4307
    %v4309 = vrot.slane %v4301, %v4308
    %v4311 = vunpack.c.l.s4 1934713408
    %v4312 = vunpack.c.0.s8 %v4311
    %v4313 = vlaneseq
    %v4314 = vshrl.u32 %v4313, 7
    %v4315 = vsub.s32 %v4312, %v4314
    %v4316 = vrot.slane %v4302, %v4315
    %v4317 = vcombine.low %v4261, %v4293
    %v4318 = vcombine.high %v4261, %v4293
    %v4319 = vcombine.low %v4268, %v4300
    %v4320 = vcombine.high %v4268, %v4300
    %v4321 = vcombine.low %v4277, %v4309
    %v4322 = vcombine.high %v4277, %v4309
    %v4323 = vcombine.low %v4284, %v4316
    %v4324 = vcombine.high %v4284, %v4316
    %v4325 = vcombine.low %v3769, %v3885
    %v4326 = vcombine.high %v3769, %v3885
    %v4328 = vunpack.c.l.s4 1983009808
    %v4329 = vunpack.c.0.s8 %v4328
    %v4330 = vlaneseq
    %v4331 = vshrl.u32 %v4330, 7
    %v4332 = vsub.s32 %v4329, %v4331
    %v4333 = vrot.slane %v4325, %v4332
    %v4335 = vunpack.c.l.s4 1983009808
    %v4336 = vunpack.c.0.s8 %v4335
    %v4337 = vlaneseq
    %v4338 = vshrl.u32 %v4337, 7
    %v4339 = vsub.s32 %v4336, %v4338
    %v4340 = vrot.slane %v4326, %v4339
    %v4341 = vcombine.low %v3827, %v3943
    %v4342 = vcombine.high %v3827, %v3943
    %v4344 = vunpack.c.l.s4 1983009808
    %v4345 = vunpack.c.0.s8 %v4344
    %v4346 = vlaneseq
    %v4347 = vshrl.u32 %v4346, 7
    %v4348 = vsub.s32 %v4345, %v4347
    %v4349 = vrot.slane %v4341, %v4348
    %v4351 = vunpack.c.l.s4 1983009808
    %v4352 = vunpack.c.0.s8 %v4351
    %v4353 = vlaneseq
    %v4354 = vshrl.u32 %v4353, 7
    %v4355 = vsub.s32 %v4352, %v4354
    %v4356 = vrot.slane %v4342, %v4355
    %v4357 = vcombine.low %v4001, %v4117
    %v4358 = vcombine.high %v4001, %v4117
    %v4360 = vunpack.c.l.s4 1983009808
    %v4361 = vunpack.c.0.s8 %v4360
    %v4362 = vlaneseq
    %v4363 = vshrl.u32 %v4362, 7
    %v4364 = vsub.s32 %v4361, %v4363
    %v4365 = vrot.slane %v4357, %v4364
    %v4367 = vunpack.c.l.s4 1983009808
    %v4368 = vunpack.c.0.s8 %v4367
    %v4369 = vlaneseq
    %v4370 = vshrl.u32 %v4369, 7
    %v4371 = vsub.s32 %v4368, %v4370
    %v4372 = vrot.slane %v4358, %v4371
    %v4373 = vcombine.low %v4059, %v4175
    %v4374 = vcombine.high %v4059, %v4175
    %v4376 = vunpack.c.l.s4 1983009808
    %v4377 = vunpack.c.0.s8 %v4376
    %v4378 = vlaneseq
    %v4379 = vshrl.u32 %v4378, 7
    %v4380 = vsub.s32 %v4377, %v4379
    %v4381 = vrot.slane %v4373, %v4380
    %v4383 = vunpack.c.l.s4 1983009808
    %v4384 = vunpack.c.0.s8 %v4383
    %v4385 = vlaneseq
    %v4386 = vshrl.u32 %v4385, 7
    %v4387 = vsub.s32 %v4384, %v4386
    %v4388 = vrot.slane %v4374, %v4387
    %v4389 = vcombine.low %v4333, %v4349
    %v4390 = vcombine.high %v4333, %v4349
    %v4392 = vunpack.c.l.s4 1934713408
    %v4393 = vunpack.c.0.s8 %v4392
    %v4394 = vlaneseq
    %v4395 = vshrl.u32 %v4394, 7
    %v4396 = vsub.s32 %v4393, %v4395
    %v4397 = vrot.slane %v4389, %v4396
    %v4399 = vunpack.c.l.s4 1934713408
    %v4400 = vunpack.c.0.s8 %v4399
    %v4401 = vlaneseq
    %v4402 = vshrl.u32 %v4401, 7
    %v4403 = vsub.s32 %v4400, %v4402
    %v4404 = vrot.slane %v4390, %v4403
    %v4405 = vcombine.low %v4340, %v4356
    %v4406 = vcombine.high %v4340, %v4356
    %v4408 = vunpack.c.l.s4 1934713408
    %v4409 = vunpack.c.0.s8 %v4408
    %v4410 = vlaneseq
    %v4411 = vshrl.u32 %v4410, 7
    %v4412 = vsub.s32 %v4409, %v4411
    %v4413 = vrot.slane %v4405, %v4412
    %v4415 = vunpack.c.l.s4 1934713408
    %v4416 = vunpack.c.0.s8 %v4415
    %v4417 = vlaneseq
    %v4418 = vshrl.u32 %v4417, 7
    %v4419 = vsub.s32 %v4416, %v4418
    %v4420 = vrot.slane %v4406, %v4419
    %v4421 = vcombine.low %v4365, %v4381
    %v4422 = vcombine.high %v4365, %v4381
    %v4424 = vunpack.c.l.s4 1934713408
    %v4425 = vunpack.c.0.s8 %v4424
    %v4426 = vlaneseq
    %v4427 = vshrl.u32 %v4426, 7
    %v4428 = vsub.s32 %v4425, %v4427
    %v4429 = vrot.slane %v4421, %v4428
    %v4431 = vunpack.c.l.s4 1934713408
    %v4432 = vunpack.c.0.s8 %v4431
    %v4433 = vlaneseq
    %v4434 = vshrl.u32 %v4433, 7
    %v4435 = vsub.s32 %v4432, %v4434
    %v4436 = vrot.slane %v4422, %v4435
    %v4437 = vcombine.low %v4372, %v4388
    %v4438 = vcombine.high %v4372, %v4388
    %v4440 = vunpack.c.l.s4 1934713408
    %v4441 = vunpack.c.0.s8 %v4440
    %v4442 = vlaneseq
    %v4443 = vshrl.u32 %v4442, 7
    %v4444 = vsub.s32 %v4441, %v4443
    %v4445 = vrot.slane %v4437, %v4444
    %v4447 = vunpack.c.l.s4 1934713408
    %v4448 = vunpack.c.0.s8 %v4447
    %v4449 = vlaneseq
    %v4450 = vshrl.u32 %v4449, 7
    %v4451 = vsub.s32 %v4448, %v4450
    %v4452 = vrot.slane %v4438, %v4451
    %v4453 = vcombine.low %v4397, %v4429
    %v4454 = vcombine.high %v4397, %v4429
    %v4455 = vcombine.low %v4404, %v4436
    %v4456 = vcombine.high %v4404, %v4436
    %v4457 = vcombine.low %v4413, %v4445
    %v4458 = vcombine.high %v4413, %v4445
    %v4459 = vcombine.low %v4420, %v4452
    %v4460 = vcombine.high %v4420, %v4452
    %v4461 = vcombine.low %v3308, %v3424
    %v4462 = vcombine.high %v3308, %v3424
    %v4464 = vunpack.c.l.s4 1983009808
    %v4465 = vunpack.c.0.s8 %v4464
    %v4466 = vlaneseq
    %v4467 = vshrl.u32 %v4466, 7
    %v4468 = vsub.s32 %v4465, %v4467
    %v4469 = vrot.slane %v4461, %v4468
    %v4471 = vunpack.c.l.s4 1983009808
    %v4472 = vunpack.c.0.s8 %v4471
    %v4473 = vlaneseq
    %v4474 = vshrl.u32 %v4473, 7
    %v4475 = vsub.s32 %v4472, %v4474
    %v4476 = vrot.slane %v4462, %v4475
    %v4477 = vcombine.low %v3366, %v3482
    %v4478 = vcombine.high %v3366, %v3482
    %v4480 = vunpack.c.l.s4 1983009808
    %v4481 = vunpack.c.0.s8 %v4480
    %v4482 = vlaneseq
    %v4483 = vshrl.u32 %v4482, 7
    %v4484 = vsub.s32 %v4481, %v4483
    %v4485 = vrot.slane %v4477, %v4484
    %v4487 = vunpack.c.l.s4 1983009808
    %v4488 = vunpack.c.0.s8 %v4487
    %v4489 = vlaneseq
    %v4490 = vshrl.u32 %v4489, 7
    %v4491 = vsub.s32 %v4488, %v4490
    %v4492 = vrot.slane %v4478, %v4491
    %v4493 = vcombine.low %v3540, %v3656
    %v4494 = vcombine.high %v3540, %v3656
    %v4496 = vunpack.c.l.s4 1983009808
    %v4497 = vunpack.c.0.s8 %v4496
    %v4498 = vlaneseq
    %v4499 = vshrl.u32 %v4498, 7
    %v4500 = vsub.s32 %v4497, %v4499
    %v4501 = vrot.slane %v4493, %v4500
    %v4503 = vunpack.c.l.s4 1983009808
    %v4504 = vunpack.c.0.s8 %v4503
    %v4505 = vlaneseq
    %v4506 = vshrl.u32 %v4505, 7
    %v4507 = vsub.s32 %v4504, %v4506
    %v4508 = vrot.slane %v4494, %v4507
    %v4509 = vcombine.low %v3598, %v3714
    %v4510 = vcombine.high %v3598, %v3714
    %v4512 = vunpack.c.l.s4 1983009808
    %v4513 = vunpack.c.0.s8 %v4512
    %v4514 = vlaneseq
    %v4515 = vshrl.u32 %v4514, 7
    %v4516 = vsub.s32 %v4513, %v4515
    %v4517 = vrot.slane %v4509, %v4516
    %v4519 = vunpack.c.l.s4 1983009808
    %v4520 = vunpack.c.0.s8 %v4519
    %v4521 = vlaneseq
    %v4522 = vshrl.u32 %v4521, 7
    %v4523 = vsub.s32 %v4520, %v4522
    %v4524 = vrot.slane %v4510, %v4523
    %v4525 = vcombine.low %v4469, %v4485
    %v4526 = vcombine.high %v4469, %v4485
    %v4528 = vunpack.c.l.s4 1934713408
    %v4529 = vunpack.c.0.s8 %v4528
    %v4530 = vlaneseq
    %v4531 = vshrl.u32 %v4530, 7
    %v4532 = vsub.s32 %v4529, %v4531
    %v4533 = vrot.slane %v4525, %v4532
    %v4535 = vunpack.c.l.s4 1934713408
    %v4536 = vunpack.c.0.s8 %v4535
    %v4537 = vlaneseq
    %v4538 = vshrl.u32 %v4537, 7
    %v4539 = vsub.s32 %v4536, %v4538
    %v4540 = vrot.slane %v4526, %v4539
    %v4541 = vcombine.low %v4476, %v4492
    %v4542 = vcombine.high %v4476, %v4492
    %v4544 = vunpack.c.l.s4 1934713408
    %v4545 = vunpack.c.0.s8 %v4544
    %v4546 = vlaneseq
    %v4547 = vshrl.u32 %v4546, 7
    %v4548 = vsub.s32 %v4545, %v4547
    %v4549 = vrot.slane %v4541, %v4548
    %v4551 = vunpack.c.l.s4 1934713408
    %v4552 = vunpack.c.0.s8 %v4551
    %v4553 = vlaneseq
    %v4554 = vshrl.u32 %v4553, 7
    %v4555 = vsub.s32 %v4552, %v4554
    %v4556 = vrot.slane %v4542, %v4555
    %v4557 = vcombine.low %v4501, %v4517
    %v4558 = vcombine.high %v4501, %v4517
    %v4560 = vunpack.c.l.s4 1934713408
    %v4561 = vunpack.c.0.s8 %v4560
    %v4562 = vlaneseq
    %v4563 = vshrl.u32 %v4562, 7
    %v4564 = vsub.s32 %v4561, %v4563
    %v4565 = vrot.slane %v4557, %v4564
    %v4567 = vunpack.c.l.s4 1934713408
    %v4568 = vunpack.c.0.s8 %v4567
    %v4569 = vlaneseq
    %v4570 = vshrl.u32 %v4569, 7
    %v4571 = vsub.s32 %v4568, %v4570
    %v4572 = vrot.slane %v4558, %v4571
    %v4573 = vcombine.low %v4508, %v4524
    %v4574 = vcombine.high %v4508, %v4524
    %v4576 = vunpack.c.l.s4 1934713408
    %v4577 = vunpack.c.0.s8 %v4576
    %v4578 = vlaneseq
    %v4579 = vshrl.u32 %v4578, 7
    %v4580 = vsub.s32 %v4577, %v4579
    %v4581 = vrot.slane %v4573, %v4580
    %v4583 = vunpack.c.l.s4 1934713408
    %v4584 = vunpack.c.0.s8 %v4583
    %v4585 = vlaneseq
    %v4586 = vshrl.u32 %v4585, 7
    %v4587 = vsub.s32 %v4584, %v4586
    %v4588 = vrot.slane %v4574, %v4587
    %v4589 = vcombine.low %v4533, %v4565
    %v4590 = vcombine.high %v4533, %v4565
    %v4591 = vcombine.low %v4540, %v4572
    %v4592 = vcombine.high %v4540, %v4572
    %v4593 = vcombine.low %v4549, %v4581
    %v4594 = vcombine.high %v4549, %v4581
    %v4595 = vcombine.low %v4556, %v4588
    %v4596 = vcombine.high %v4556, %v4588
    %v4597 = vcombine.low %v3772, %v3888
    %v4598 = vcombine.high %v3772, %v3888
    %v4600 = vunpack.c.l.s4 1983009808
    %v4601 = vunpack.c.0.s8 %v4600
    %v4602 = vlaneseq
    %v4603 = vshrl.u32 %v4602, 7
    %v4604 = vsub.s32 %v4601, %v4603
    %v4605 = vrot.slane %v4597, %v4604
    %v4607 = vunpack.c.l.s4 1983009808
    %v4608 = vunpack.c.0.s8 %v4607
    %v4609 = vlaneseq
    %v4610 = vshrl.u32 %v4609, 7
    %v4611 = vsub.s32 %v4608, %v4610
    %v4612 = vrot.slane %v4598, %v4611
    %v4613 = vcombine.low %v3830, %v3946
    %v4614 = vcombine.high %v3830, %v3946
    %v4616 = vunpack.c.l.s4 1983009808
    %v4617 = vunpack.c.0.s8 %v4616
    %v4618 = vlaneseq
    %v4619 = vshrl.u32 %v4618, 7
    %v4620 = vsub.s32 %v4617, %v4619
    %v4621 = vrot.slane %v4613, %v4620
    %v4623 = vunpack.c.l.s4 1983009808
    %v4624 = vunpack.c.0.s8 %v4623
    %v4625 = vlaneseq
    %v4626 = vshrl.u32 %v4625, 7
    %v4627 = vsub.s32 %v4624, %v4626
    %v4628 = vrot.slane %v4614, %v4627
    %v4629 = vcombine.low %v4004, %v4120
    %v4630 = vcombine.high %v4004, %v4120
    %v4632 = vunpack.c.l.s4 1983009808
    %v4633 = vunpack.c.0.s8 %v4632
    %v4634 = vlaneseq
    %v4635 = vshrl.u32 %v4634, 7
    %v4636 = vsub.s32 %v4633, %v4635
    %v4637 = vrot.slane %v4629, %v4636
    %v4639 = vunpack.c.l.s4 1983009808
    %v4640 = vunpack.c.0.s8 %v4639
    %v4641 = vlaneseq
    %v4642 = vshrl.u32 %v4641, 7
    %v4643 = vsub.s32 %v4640, %v4642
    %v4644 = vrot.slane %v4630, %v4643
    %v4645 = vcombine.low %v4062, %v4178
    %v4646 = vcombine.high %v4062, %v4178
    %v4648 = vunpack.c.l.s4 1983009808
    %v4649 = vunpack.c.0.s8 %v4648
    %v4650 = vlaneseq
    %v4651 = vshrl.u32 %v4650, 7
    %v4652 = vsub.s32 %v4649, %v4651
    %v4653 = vrot.slane %v4645, %v4652
    %v4655 = vunpack.c.l.s4 1983009808
    %v4656 = vunpack.c.0.s8 %v4655
    %v4657 = vlaneseq
    %v4658 = vshrl.u32 %v4657, 7
    %v4659 = vsub.s32 %v4656, %v4658
    %v4660 = vrot.slane %v4646, %v4659
    %v4661 = vcombine.low %v4605, %v4621
    %v4662 = vcombine.high %v4605, %v4621
    %v4664 = vunpack.c.l.s4 1934713408
    %v4665 = vunpack.c.0.s8 %v4664
    %v4666 = vlaneseq
    %v4667 = vshrl.u32 %v4666, 7
    %v4668 = vsub.s32 %v4665, %v4667
    %v4669 = vrot.slane %v4661, %v4668
    %v4671 = vunpack.c.l.s4 1934713408
    %v4672 = vunpack.c.0.s8 %v4671
    %v4673 = vlaneseq
    %v4674 = vshrl.u32 %v4673, 7
    %v4675 = vsub.s32 %v4672, %v4674
    %v4676 = vrot.slane %v4662, %v4675
    %v4677 = vcombine.low %v4612, %v4628
    %v4678 = vcombine.high %v4612, %v4628
    %v4680 = vunpack.c.l.s4 1934713408
    %v4681 = vunpack.c.0.s8 %v4680
    %v4682 = vlaneseq
    %v4683 = vshrl.u32 %v4682, 7
    %v4684 = vsub.s32 %v4681, %v4683
    %v4685 = vrot.slane %v4677, %v4684
    %v4687 = vunpack.c.l.s4 1934713408
    %v4688 = vunpack.c.0.s8 %v4687
    %v4689 = vlaneseq
    %v4690 = vshrl.u32 %v4689, 7
    %v4691 = vsub.s32 %v4688, %v4690
    %v4692 = vrot.slane %v4678, %v4691
    %v4693 = vcombine.low %v4637, %v4653
    %v4694 = vcombine.high %v4637, %v4653
    %v4696 = vunpack.c.l.s4 1934713408
    %v4697 = vunpack.c.0.s8 %v4696
    %v4698 = vlaneseq
    %v4699 = vshrl.u32 %v4698, 7
    %v4700 = vsub.s32 %v4697, %v4699
    %v4701 = vrot.slane %v4693, %v4700
    %v4703 = vunpack.c.l.s4 1934713408
    %v4704 = vunpack.c.0.s8 %v4703
    %v4705 = vlaneseq
    %v4706 = vshrl.u32 %v4705, 7
    %v4707 = vsub.s32 %v4704, %v4706
    %v4708 = vrot.slane %v4694, %v4707
    %v4709 = vcombine.low %v4644, %v4660
    %v4710 = vcombine.high %v4644, %v4660
    %v4712 = vunpack.c.l.s4 1934713408
    %v4713 = vunpack.c.0.s8 %v4712
    %v4714 = vlaneseq
    %v4715 = vshrl.u32 %v4714, 7
    %v4716 = vsub.s32 %v4713, %v4715
    %v4717 = vrot.slane %v4709, %v4716
    %v4719 = vunpack.c.l.s4 1934713408
    %v4720 = vunpack.c.0.s8 %v4719
    %v4721 = vlaneseq
    %v4722 = vshrl.u32 %v4721, 7
    %v4723 = vsub.s32 %v4720, %v4722
    %v4724 = vrot.slane %v4710, %v4723
    %v4725 = vcombine.low %v4669, %v4701
    %v4726 = vcombine.high %v4669, %v4701
    %v4727 = vcombine.low %v4676, %v4708
    %v4728 = vcombine.high %v4676, %v4708
    %v4729 = vcombine.low %v4685, %v4717
    %v4730 = vcombine.high %v4685, %v4717
    %v4731 = vcombine.low %v4692, %v4724
    %v4732 = vcombine.high %v4692, %v4724
    %v4733 = vcombine.low %v3313, %v3429
    %v4734 = vcombine.high %v3313, %v3429
    %v4736 = vunpack.c.l.s4 1983009808
    %v4737 = vunpack.c.0.s8 %v4736
    %v4738 = vlaneseq
    %v4739 = vshrl.u32 %v4738, 7
    %v4740 = vsub.s32 %v4737, %v4739
    %v4741 = vrot.slane %v4733, %v4740
    %v4743 = vunpack.c.l.s4 1983009808
    %v4744 = vunpack.c.0.s8 %v4743
    %v4745 = vlaneseq
    %v4746 = vshrl.u32 %v4745, 7
    %v4747 = vsub.s32 %v4744, %v4746
    %v4748 = vrot.slane %v4734, %v4747
    %v4749 = vcombine.low %v3371, %v3487
    %v4750 = vcombine.high %v3371, %v3487
    %v4752 = vunpack.c.l.s4 1983009808
    %v4753 = vunpack.c.0.s8 %v4752
    %v4754 = vlaneseq
    %v4755 = vshrl.u32 %v4754, 7
    %v4756 = vsub.s32 %v4753, %v4755
    %v4757 = vrot.slane %v4749, %v4756
    %v4759 = vunpack.c.l.s4 1983009808
    %v4760 = vunpack.c.0.s8 %v4759
    %v4761 = vlaneseq
    %v4762 = vshrl.u32 %v4761, 7
    %v4763 = vsub.s32 %v4760, %v4762
    %v4764 = vrot.slane %v4750, %v4763
    %v4765 = vcombine.low %v3545, %v3661
    %v4766 = vcombine.high %v3545, %v3661
    %v4768 = vunpack.c.l.s4 1983009808
    %v4769 = vunpack.c.0.s8 %v4768
    %v4770 = vlaneseq
    %v4771 = vshrl.u32 %v4770, 7
    %v4772 = vsub.s32 %v4769, %v4771
    %v4773 = vrot.slane %v4765, %v4772
    %v4775 = vunpack.c.l.s4 1983009808
    %v4776 = vunpack.c.0.s8 %v4775
    %v4777 = vlaneseq
    %v4778 = vshrl.u32 %v4777, 7
    %v4779 = vsub.s32 %v4776, %v4778
    %v4780 = vrot.slane %v4766, %v4779
    %v4781 = vcombine.low %v3603, %v3719
    %v4782 = vcombine.high %v3603, %v3719
    %v4784 = vunpack.c.l.s4 1983009808
    %v4785 = vunpack.c.0.s8 %v4784
    %v4786 = vlaneseq
    %v4787 = vshrl.u32 %v4786, 7
    %v4788 = vsub.s32 %v4785, %v4787
    %v4789 = vrot.slane %v4781, %v4788
    %v4791 = vunpack.c.l.s4 1983009808
    %v4792 = vunpack.c.0.s8 %v4791
    %v4793 = vlaneseq
    %v4794 = vshrl.u32 %v4793, 7
    %v4795 = vsub.s32 %v4792, %v4794
    %v4796 = vrot.slane %v4782, %v4795
    %v4797 = vcombine.low %v4741, %v4757
    %v4798 = vcombine.high %v4741, %v4757
    %v4800 = vunpack.c.l.s4 1934713408
    %v4801 = vunpack.c.0.s8 %v4800
    %v4802 = vlaneseq
    %v4803 = vshrl.u32 %v4802, 7
    %v4804 = vsub.s32 %v4801, %v4803
    %v4805 = vrot.slane %v4797, %v4804
    %v4807 = vunpack.c.l.s4 1934713408
    %v4808 = vunpack.c.0.s8 %v4807
    %v4809 = vlaneseq
    %v4810 = vshrl.u32 %v4809, 7
    %v4811 = vsub.s32 %v4808, %v4810
    %v4812 = vrot.slane %v4798, %v4811
    %v4813 = vcombine.low %v4748, %v4764
    %v4814 = vcombine.high %v4748, %v4764
    %v4816 = vunpack.c.l.s4 1934713408
    %v4817 = vunpack.c.0.s8 %v4816
    %v4818 = vlaneseq
    %v4819 = vshrl.u32 %v4818, 7
    %v4820 = vsub.s32 %v4817, %v4819
    %v4821 = vrot.slane %v4813, %v4820
    %v4823 = vunpack.c.l.s4 1934713408
    %v4824 = vunpack.c.0.s8 %v4823
    %v4825 = vlaneseq
    %v4826 = vshrl.u32 %v4825, 7
    %v4827 = vsub.s32 %v4824, %v4826
    %v4828 = vrot.slane %v4814, %v4827
    %v4829 = vcombine.low %v4773, %v4789
    %v4830 = vcombine.high %v4773, %v4789
    %v4832 = vunpack.c.l.s4 1934713408
    %v4833 = vunpack.c.0.s8 %v4832
    %v4834 = vlaneseq
    %v4835 = vshrl.u32 %v4834, 7
    %v4836 = vsub.s32 %v4833, %v4835
    %v4837 = vrot.slane %v4829, %v4836
    %v4839 = vunpack.c.l.s4 1934713408
    %v4840 = vunpack.c.0.s8 %v4839
    %v4841 = vlaneseq
    %v4842 = vshrl.u32 %v4841, 7
    %v4843 = vsub.s32 %v4840, %v4842
    %v4844 = vrot.slane %v4830, %v4843
    %v4845 = vcombine.low %v4780, %v4796
    %v4846 = vcombine.high %v4780, %v4796
    %v4848 = vunpack.c.l.s4 1934713408
    %v4849 = vunpack.c.0.s8 %v4848
    %v4850 = vlaneseq
    %v4851 = vshrl.u32 %v4850, 7
    %v4852 = vsub.s32 %v4849, %v4851
    %v4853 = vrot.slane %v4845, %v4852
    %v4855 = vunpack.c.l.s4 1934713408
    %v4856 = vunpack.c.0.s8 %v4855
    %v4857 = vlaneseq
    %v4858 = vshrl.u32 %v4857, 7
    %v4859 = vsub.s32 %v4856, %v4858
    %v4860 = vrot.slane %v4846, %v4859
    %v4861 = vcombine.low %v4805, %v4837
    %v4862 = vcombine.high %v4805, %v4837
    %v4863 = vcombine.low %v4812, %v4844
    %v4864 = vcombine.high %v4812, %v4844
    %v4865 = vcombine.low %v4821, %v4853
    %v4866 = vcombine.high %v4821, %v4853
    %v4867 = vcombine.low %v4828, %v4860
    %v4868 = vcombine.high %v4828, %v4860
    %v4869 = vcombine.low %v3777, %v3893
    %v4870 = vcombine.high %v3777, %v3893
    %v4872 = vunpack.c.l.s4 1983009808
    %v4873 = vunpack.c.0.s8 %v4872
    %v4874 = vlaneseq
    %v4875 = vshrl.u32 %v4874, 7
    %v4876 = vsub.s32 %v4873, %v4875
    %v4877 = vrot.slane %v4869, %v4876
    %v4879 = vunpack.c.l.s4 1983009808
    %v4880 = vunpack.c.0.s8 %v4879
    %v4881 = vlaneseq
    %v4882 = vshrl.u32 %v4881, 7
    %v4883 = vsub.s32 %v4880, %v4882
    %v4884 = vrot.slane %v4870, %v4883
    %v4885 = vcombine.low %v3835, %v3951
    %v4886 = vcombine.high %v3835, %v3951
    %v4888 = vunpack.c.l.s4 1983009808
    %v4889 = vunpack.c.0.s8 %v4888
    %v4890 = vlaneseq
    %v4891 = vshrl.u32 %v4890, 7
    %v4892 = vsub.s32 %v4889, %v4891
    %v4893 = vrot.slane %v4885, %v4892
    %v4895 = vunpack.c.l.s4 1983009808
    %v4896 = vunpack.c.0.s8 %v4895
    %v4897 = vlaneseq
    %v4898 = vshrl.u32 %v4897, 7
    %v4899 = vsub.s32 %v4896, %v4898
    %v4900 = vrot.slane %v4886, %v4899
    %v4901 = vcombine.low %v4009, %v4125
    %v4902 = vcombine.high %v4009, %v4125
    %v4904 = vunpack.c.l.s4 1983009808
    %v4905 = vunpack.c.0.s8 %v4904
    %v4906 = vlaneseq
    %v4907 = vshrl.u32 %v4906, 7
    %v4908 = vsub.s32 %v4905, %v4907
    %v4909 = vrot.slane %v4901, %v4908
    %v4911 = vunpack.c.l.s4 1983009808
    %v4912 = vunpack.c.0.s8 %v4911
    %v4913 = vlaneseq
    %v4914 = vshrl.u32 %v4913, 7
    %v4915 = vsub.s32 %v4912, %v4914
    %v4916 = vrot.slane %v4902, %v4915
    %v4917 = vcombine.low %v4067, %v4183
    %v4918 = vcombine.high %v4067, %v4183
    %v4920 = vunpack.c.l.s4 1983009808
    %v4921 = vunpack.c.0.s8 %v4920
    %v4922 = vlaneseq
    %v4923 = vshrl.u32 %v4922, 7
    %v4924 = vsub.s32 %v4921, %v4923
    %v4925 = vrot.slane %v4917, %v4924
    %v4927 = vunpack.c.l.s4 1983009808
    %v4928 = vunpack.c.0.s8 %v4927
    %v4929 = vlaneseq
    %v4930 = vshrl.u32 %v4929, 7
    %v4931 = vsub.s32 %v4928, %v4930
    %v4932 = vrot.slane %v4918, %v4931
    %v4933 = vcombine.low %v4877, %v4893
    %v4934 = vcombine.high %v4877, %v4893
    %v4936 = vunpack.c.l.s4 1934713408
    %v4937 = vunpack.c.0.s8 %v4936
    %v4938 = vlaneseq
    %v4939 = vshrl.u32 %v4938, 7
    %v4940 = vsub.s32 %v4937, %v4939
    %v4941 = vrot.slane %v4933, %v4940
    %v4943 = vunpack.c.l.s4 1934713408
    %v4944 = vunpack.c.0.s8 %v4943
    %v4945 = vlaneseq
    %v4946 = vshrl.u32 %v4945, 7
    %v4947 = vsub.s32 %v4944, %v4946
    %v4948 = vrot.slane %v4934, %v4947
    %v4949 = vcombine.low %v4884, %v4900
    %v4950 = vcombine.high %v4884, %v4900
    %v4952 = vunpack.c.l.s4 1934713408
    %v4953 = vunpack.c.0.s8 %v4952
    %v4954 = vlaneseq
    %v4955 = vshrl.u32 %v4954, 7
    %v4956 = vsub.s32 %v4953, %v4955
    %v4957 = vrot.slane %v4949, %v4956
    %v4959 = vunpack.c.l.s4 1934713408
    %v4960 = vunpack.c.0.s8 %v4959
    %v4961 = vlaneseq
    %v4962 = vshrl.u32 %v4961, 7
    %v4963 = vsub.s32 %v4960, %v4962
    %v4964 = vrot.slane %v4950, %v4963
    %v4965 = vcombine.low %v4909, %v4925
    %v4966 = vcombine.high %v4909, %v4925
    %v4968 = vunpack.c.l.s4 1934713408
    %v4969 = vunpack.c.0.s8 %v4968
    %v4970 = vlaneseq
    %v4971 = vshrl.u32 %v4970, 7
    %v4972 = vsub.s32 %v4969, %v4971
    %v4973 = vrot.slane %v4965, %v4972
    %v4975 = vunpack.c.l.s4 1934713408
    %v4976 = vunpack.c.0.s8 %v4975
    %v4977 = vlaneseq
    %v4978 = vshrl.u32 %v4977, 7
    %v4979 = vsub.s32 %v4976, %v4978
    %v4980 = vrot.slane %v4966, %v4979
    %v4981 = vcombine.low %v4916, %v4932
    %v4982 = vcombine.high %v4916, %v4932
    %v4984 = vunpack.c.l.s4 1934713408
    %v4985 = vunpack.c.0.s8 %v4984
    %v4986 = vlaneseq
    %v4987 = vshrl.u32 %v4986, 7
    %v4988 = vsub.s32 %v4985, %v4987
    %v4989 = vrot.slane %v4981, %v4988
    %v4991 = vunpack.c.l.s4 1934713408
    %v4992 = vunpack.c.0.s8 %v4991
    %v4993 = vlaneseq
    %v4994 = vshrl.u32 %v4993, 7
    %v4995 = vsub.s32 %v4992, %v4994
    %v4996 = vrot.slane %v4982, %v4995
    %v4997 = vcombine.low %v4941, %v4973
    %v4998 = vcombine.high %v4941, %v4973
    %v4999 = vcombine.low %v4948, %v4980
    %v5000 = vcombine.high %v4948, %v4980
    %v5001 = vcombine.low %v4957, %v4989
    %v5002 = vcombine.high %v4957, %v4989
    %v5003 = vcombine.low %v4964, %v4996
    %v5004 = vcombine.high %v4964, %v4996
    %v5005 = vcombine.low %v3316, %v3432
    %v5006 = vcombine.high %v3316, %v3432
    %v5008 = vunpack.c.l.s4 1983009808
    %v5009 = vunpack.c.0.s8 %v5008
    %v5010 = vlaneseq
    %v5011 = vshrl.u32 %v5010, 7
    %v5012 = vsub.s32 %v5009, %v5011
    %v5013 = vrot.slane %v5005, %v5012
    %v5015 = vunpack.c.l.s4 1983009808
    %v5016 = vunpack.c.0.s8 %v5015
    %v5017 = vlaneseq
    %v5018 = vshrl.u32 %v5017, 7
    %v5019 = vsub.s32 %v5016, %v5018
    %v5020 = vrot.slane %v5006, %v5019
    %v5021 = vcombine.low %v3374, %v3490
    %v5022 = vcombine.high %v3374, %v3490
    %v5024 = vunpack.c.l.s4 1983009808
    %v5025 = vunpack.c.0.s8 %v5024
    %v5026 = vlaneseq
    %v5027 = vshrl.u32 %v5026, 7
    %v5028 = vsub.s32 %v5025, %v5027
    %v5029 = vrot.slane %v5021, %v5028
    %v5031 = vunpack.c.l.s4 1983009808
    %v5032 = vunpack.c.0.s8 %v5031
    %v5033 = vlaneseq
    %v5034 = vshrl.u32 %v5033, 7
    %v5035 = vsub.s32 %v5032, %v5034
    %v5036 = vrot.slane %v5022, %v5035
    %v5037 = vcombine.low %v3548, %v3664
    %v5038 = vcombine.high %v3548, %v3664
    %v5040 = vunpack.c.l.s4 1983009808
    %v5041 = vunpack.c.0.s8 %v5040
    %v5042 = vlaneseq
    %v5043 = vshrl.u32 %v5042, 7
    %v5044 = vsub.s32 %v5041, %v5043
    %v5045 = vrot.slane %v5037, %v5044
    %v5047 = vunpack.c.l.s4 1983009808
    %v5048 = vunpack.c.0.s8 %v5047
    %v5049 = vlaneseq
    %v5050 = vshrl.u32 %v5049, 7
    %v5051 = vsub.s32 %v5048, %v5050
    %v5052 = vrot.slane %v5038, %v5051
    %v5053 = vcombine.low %v3606, %v3722
    %v5054 = vcombine.high %v3606, %v3722
    %v5056 = vunpack.c.l.s4 1983009808
    %v5057 = vunpack.c.0.s8 %v5056
    %v5058 = vlaneseq
    %v5059 = vshrl.u32 %v5058, 7
    %v5060 = vsub.s32 %v5057, %v5059
    %v5061 = vrot.slane %v5053, %v5060
    %v5063 = vunpack.c.l.s4 1983009808
    %v5064 = vunpack.c.0.s8 %v5063
    %v5065 = vlaneseq
    %v5066 = vshrl.u32 %v5065, 7
    %v5067 = vsub.s32 %v5064, %v5066
    %v5068 = vrot.slane %v5054, %v5067
    %v5069 = vcombine.low %v5013, %v5029
    %v5070 = vcombine.high %v5013, %v5029
    %v5072 = vunpack.c.l.s4 1934713408
    %v5073 = vunpack.c.0.s8 %v5072
    %v5074 = vlaneseq
    %v5075 = vshrl.u32 %v5074, 7
    %v5076 = vsub.s32 %v5073, %v5075
    %v5077 = vrot.slane %v5069, %v5076
    %v5079 = vunpack.c.l.s4 1934713408
    %v5080 = vunpack.c.0.s8 %v5079
    %v5081 = vlaneseq
    %v5082 = vshrl.u32 %v5081, 7
    %v5083 = vsub.s32 %v5080, %v5082
    %v5084 = vrot.slane %v5070, %v5083
    %v5085 = vcombine.low %v5020, %v5036
    %v5086 = vcombine.high %v5020, %v5036
    %v5088 = vunpack.c.l.s4 1934713408
    %v5089 = vunpack.c.0.s8 %v5088
    %v5090 = vlaneseq
    %v5091 = vshrl.u32 %v5090, 7
    %v5092 = vsub.s32 %v5089, %v5091
    %v5093 = vrot.slane %v5085, %v5092
    %v5095 = vunpack.c.l.s4 1934713408
    %v5096 = vunpack.c.0.s8 %v5095
    %v5097 = vlaneseq
    %v5098 = vshrl.u32 %v5097, 7
    %v5099 = vsub.s32 %v5096, %v5098
    %v5100 = vrot.slane %v5086, %v5099
    %v5101 = vcombine.low %v5045, %v5061
    %v5102 = vcombine.high %v5045, %v5061
    %v5104 = vunpack.c.l.s4 1934713408
    %v5105 = vunpack.c.0.s8 %v5104
    %v5106 = vlaneseq
    %v5107 = vshrl.u32 %v5106, 7
    %v5108 = vsub.s32 %v5105, %v5107
    %v5109 = vrot.slane %v5101, %v5108
    %v5111 = vunpack.c.l.s4 1934713408
    %v5112 = vunpack.c.0.s8 %v5111
    %v5113 = vlaneseq
    %v5114 = vshrl.u32 %v5113, 7
    %v5115 = vsub.s32 %v5112, %v5114
    %v5116 = vrot.slane %v5102, %v5115
    %v5117 = vcombine.low %v5052, %v5068
    %v5118 = vcombine.high %v5052, %v5068
    %v5120 = vunpack.c.l.s4 1934713408
    %v5121 = vunpack.c.0.s8 %v5120
    %v5122 = vlaneseq
    %v5123 = vshrl.u32 %v5122, 7
    %v5124 = vsub.s32 %v5121, %v5123
    %v5125 = vrot.slane %v5117, %v5124
    %v5127 = vunpack.c.l.s4 1934713408
    %v5128 = vunpack.c.0.s8 %v5127
    %v5129 = vlaneseq
    %v5130 = vshrl.u32 %v5129, 7
    %v5131 = vsub.s32 %v5128, %v5130
    %v5132 = vrot.slane %v5118, %v5131
    %v5133 = vcombine.low %v5077, %v5109
    %v5134 = vcombine.high %v5077, %v5109
    %v5135 = vcombine.low %v5084, %v5116
    %v5136 = vcombine.high %v5084, %v5116
    %v5137 = vcombine.low %v5093, %v5125
    %v5138 = vcombine.high %v5093, %v5125
    %v5139 = vcombine.low %v5100, %v5132
    %v5140 = vcombine.high %v5100, %v5132
    %v5141 = vcombine.low %v3780, %v3896
    %v5142 = vcombine.high %v3780, %v3896
    %v5144 = vunpack.c.l.s4 1983009808
    %v5145 = vunpack.c.0.s8 %v5144
    %v5146 = vlaneseq
    %v5147 = vshrl.u32 %v5146, 7
    %v5148 = vsub.s32 %v5145, %v5147
    %v5149 = vrot.slane %v5141, %v5148
    %v5151 = vunpack.c.l.s4 1983009808
    %v5152 = vunpack.c.0.s8 %v5151
    %v5153 = vlaneseq
    %v5154 = vshrl.u32 %v5153, 7
    %v5155 = vsub.s32 %v5152, %v5154
    %v5156 = vrot.slane %v5142, %v5155
    %v5157 = vcombine.low %v3838, %v3954
    %v5158 = vcombine.high %v3838, %v3954
    %v5160 = vunpack.c.l.s4 1983009808
    %v5161 = vunpack.c.0.s8 %v5160
    %v5162 = vlaneseq
    %v5163 = vshrl.u32 %v5162, 7
    %v5164 = vsub.s32 %v5161, %v5163
    %v5165 = vrot.slane %v5157, %v5164
    %v5167 = vunpack.c.l.s4 1983009808
    %v5168 = vunpack.c.0.s8 %v5167
    %v5169 = vlaneseq
    %v5170 = vshrl.u32 %v5169, 7
    %v5171 = vsub.s32 %v5168, %v5170
    %v5172 = vrot.slane %v5158, %v5171
    %v5173 = vcombine.low %v4012, %v4128
    %v5174 = vcombine.high %v4012, %v4128
    %v5176 = vunpack.c.l.s4 1983009808
    %v5177 = vunpack.c.0.s8 %v5176
    %v5178 = vlaneseq
    %v5179 = vshrl.u32 %v5178, 7
    %v5180 = vsub.s32 %v5177, %v5179
    %v5181 = vrot.slane %v5173, %v5180
    %v5183 = vunpack.c.l.s4 1983009808
    %v5184 = vunpack.c.0.s8 %v5183
    %v5185 = vlaneseq
    %v5186 = vshrl.u32 %v5185, 7
    %v5187 = vsub.s32 %v5184, %v5186
    %v5188 = vrot.slane %v5174, %v5187
    %v5189 = vcombine.low %v4070, %v4186
    %v5190 = vcombine.high %v4070, %v4186
    %v5192 = vunpack.c.l.s4 1983009808
    %v5193 = vunpack.c.0.s8 %v5192
    %v5194 = vlaneseq
    %v5195 = vshrl.u32 %v5194, 7
    %v5196 = vsub.s32 %v5193, %v5195
    %v5197 = vrot.slane %v5189, %v5196
    %v5199 = vunpack.c.l.s4 1983009808
    %v5200 = vunpack.c.0.s8 %v5199
    %v5201 = vlaneseq
    %v5202 = vshrl.u32 %v5201, 7
    %v5203 = vsub.s32 %v5200, %v5202
    %v5204 = vrot.slane %v5190, %v5203
    %v5205 = vcombine.low %v5149, %v5165
    %v5206 = vcombine.high %v5149, %v5165
    %v5208 = vunpack.c.l.s4 1934713408
    %v5209 = vunpack.c.0.s8 %v5208
    %v5210 = vlaneseq
    %v5211 = vshrl.u32 %v5210, 7
    %v5212 = vsub.s32 %v5209, %v5211
    %v5213 = vrot.slane %v5205, %v5212
    %v5215 = vunpack.c.l.s4 1934713408
    %v5216 = vunpack.c.0.s8 %v5215
    %v5217 = vlaneseq
    %v5218 = vshrl.u32 %v5217, 7
    %v5219 = vsub.s32 %v5216, %v5218
    %v5220 = vrot.slane %v5206, %v5219
    %v5221 = vcombine.low %v5156, %v5172
    %v5222 = vcombine.high %v5156, %v5172
    %v5224 = vunpack.c.l.s4 1934713408
    %v5225 = vunpack.c.0.s8 %v5224
    %v5226 = vlaneseq
    %v5227 = vshrl.u32 %v5226, 7
    %v5228 = vsub.s32 %v5225, %v5227
    %v5229 = vrot.slane %v5221, %v5228
    %v5231 = vunpack.c.l.s4 1934713408
    %v5232 = vunpack.c.0.s8 %v5231
    %v5233 = vlaneseq
    %v5234 = vshrl.u32 %v5233, 7
    %v5235 = vsub.s32 %v5232, %v5234
    %v5236 = vrot.slane %v5222, %v5235
    %v5237 = vcombine.low %v5181, %v5197
    %v5238 = vcombine.high %v5181, %v5197
    %v5240 = vunpack.c.l.s4 1934713408
    %v5241 = vunpack.c.0.s8 %v5240
    %v5242 = vlaneseq
    %v5243 = vshrl.u32 %v5242, 7
    %v5244 = vsub.s32 %v5241, %v5243
    %v5245 = vrot.slane %v5237, %v5244
    %v5247 = vunpack.c.l.s4 1934713408
    %v5248 = vunpack.c.0.s8 %v5247
    %v5249 = vlaneseq
    %v5250 = vshrl.u32 %v5249, 7
    %v5251 = vsub.s32 %v5248, %v5250
    %v5252 = vrot.slane %v5238, %v5251
    %v5253 = vcombine.low %v5188, %v5204
    %v5254 = vcombine.high %v5188, %v5204
    %v5256 = vunpack.c.l.s4 1934713408
    %v5257 = vunpack.c.0.s8 %v5256
    %v5258 = vlaneseq
    %v5259 = vshrl.u32 %v5258, 7
    %v5260 = vsub.s32 %v5257, %v5259
    %v5261 = vrot.slane %v5253, %v5260
    %v5263 = vunpack.c.l.s4 1934713408
    %v5264 = vunpack.c.0.s8 %v5263
    %v5265 = vlaneseq
    %v5266 = vshrl.u32 %v5265, 7
    %v5267 = vsub.s32 %v5264, %v5266
    %v5268 = vrot.slane %v5254, %v5267
    %v5269 = vcombine.low %v5213, %v5245
    %v5270 = vcombine.high %v5213, %v5245
    %v5271 = vcombine.low %v5220, %v5252
    %v5272 = vcombine.high %v5220, %v5252
    %v5273 = vcombine.low %v5229, %v5261
    %v5274 = vcombine.high %v5229, %v5261
    %v5275 = vcombine.low %v5236, %v5268
    %v5276 = vcombine.high %v5236, %v5268
    %5279 = vrot.lane.b32.xlu0 %v4318, 16
    %v5280 = vpop.permute.xlu0 %5279
    %5281 = vrot.lane.b32.xlu0 %v4454, 16
    %v5282 = vpop.permute.xlu0 %5281
    %5287 = vrot.lane.b32.xlu0 %v4319, 32
    %v5288 = vpop.permute.xlu0 %5287
    %5289 = vrot.lane.b32.xlu0 %v4455, 32
    %v5290 = vpop.permute.xlu0 %5289
    %5295 = vrot.lane.b32.xlu0 %v4320, 48
    %v5296 = vpop.permute.xlu0 %5295
    %5297 = vrot.lane.b32.xlu0 %v4456, 48
    %v5298 = vpop.permute.xlu0 %5297
    %5303 = vrot.lane.b32.xlu0 %v4321, 64
    %v5304 = vpop.permute.xlu0 %5303
    %5305 = vrot.lane.b32.xlu0 %v4457, 64
    %v5306 = vpop.permute.xlu0 %5305
    %5311 = vrot.lane.b32.xlu0 %v4322, 80
    %v5312 = vpop.permute.xlu0 %5311
    %5313 = vrot.lane.b32.xlu0 %v4458, 80
    %v5314 = vpop.permute.xlu0 %5313
    %5319 = vrot.lane.b32.xlu0 %v4323, 96
    %v5320 = vpop.permute.xlu0 %5319
    %5321 = vrot.lane.b32.xlu0 %v4459, 96
    %v5322 = vpop.permute.xlu0 %5321
    %5327 = vrot.lane.b32.xlu0 %v4324, 112
    %v5328 = vpop.permute.xlu0 %5327
    %5329 = vrot.lane.b32.xlu0 %v4460, 112
    %v5330 = vpop.permute.xlu0 %5329
    %5335 = vrot.lane.b32.xlu0 %v4590, 16
    %v5336 = vpop.permute.xlu0 %5335
    %5337 = vrot.lane.b32.xlu0 %v4726, 16
    %v5338 = vpop.permute.xlu0 %5337
    %5343 = vrot.lane.b32.xlu0 %v4591, 32
    %v5344 = vpop.permute.xlu0 %5343
    %5345 = vrot.lane.b32.xlu0 %v4727, 32
    %v5346 = vpop.permute.xlu0 %5345
    %5351 = vrot.lane.b32.xlu0 %v4592, 48
    %v5352 = vpop.permute.xlu0 %5351
    %5353 = vrot.lane.b32.xlu0 %v4728, 48
    %v5354 = vpop.permute.xlu0 %5353
    %5359 = vrot.lane.b32.xlu0 %v4593, 64
    %v5360 = vpop.permute.xlu0 %5359
    %5361 = vrot.lane.b32.xlu0 %v4729, 64
    %v5362 = vpop.permute.xlu0 %5361
    %5367 = vrot.lane.b32.xlu0 %v4594, 80
    %v5368 = vpop.permute.xlu0 %5367
    %5369 = vrot.lane.b32.xlu0 %v4730, 80
    %v5370 = vpop.permute.xlu0 %5369
    %5375 = vrot.lane.b32.xlu0 %v4595, 96
    %v5376 = vpop.permute.xlu0 %5375
    %5377 = vrot.lane.b32.xlu0 %v4731, 96
    %v5378 = vpop.permute.xlu0 %5377
    %5383 = vrot.lane.b32.xlu0 %v4596, 112
    %v5384 = vpop.permute.xlu0 %5383
    %5385 = vrot.lane.b32.xlu0 %v4732, 112
    %v5386 = vpop.permute.xlu0 %5385
    %5391 = vrot.lane.b32.xlu0 %v4862, 16
    %v5392 = vpop.permute.xlu0 %5391
    %5393 = vrot.lane.b32.xlu0 %v4998, 16
    %v5394 = vpop.permute.xlu0 %5393
    %5399 = vrot.lane.b32.xlu0 %v4863, 32
    %v5400 = vpop.permute.xlu0 %5399
    %5401 = vrot.lane.b32.xlu0 %v4999, 32
    %v5402 = vpop.permute.xlu0 %5401
    %5407 = vrot.lane.b32.xlu0 %v4864, 48
    %v5408 = vpop.permute.xlu0 %5407
    %5409 = vrot.lane.b32.xlu0 %v5000, 48
    %v5410 = vpop.permute.xlu0 %5409
    %5415 = vrot.lane.b32.xlu0 %v4865, 64
    %v5416 = vpop.permute.xlu0 %5415
    %5417 = vrot.lane.b32.xlu0 %v5001, 64
    %v5418 = vpop.permute.xlu0 %5417
    %5423 = vrot.lane.b32.xlu0 %v4866, 80
    %v5424 = vpop.permute.xlu0 %5423
    %5425 = vrot.lane.b32.xlu0 %v5002, 80
    %v5426 = vpop.permute.xlu0 %5425
    %5431 = vrot.lane.b32.xlu0 %v4867, 96
    %v5432 = vpop.permute.xlu0 %5431
    %5433 = vrot.lane.b32.xlu0 %v5003, 96
    %v5434 = vpop.permute.xlu0 %5433
    %5439 = vrot.lane.b32.xlu0 %v4868, 112
    %v5440 = vpop.permute.xlu0 %5439
    %5441 = vrot.lane.b32.xlu0 %v5004, 112
    %v5442 = vpop.permute.xlu0 %5441
    %5447 = vrot.lane.b32.xlu0 %v5134, 16
    %v5448 = vpop.permute.xlu0 %5447
    %5449 = vrot.lane.b32.xlu0 %v5270, 16
    %v5450 = vpop.permute.xlu0 %5449
    %5455 = vrot.lane.b32.xlu0 %v5135, 32
    %v5456 = vpop.permute.xlu0 %5455
    %5457 = vrot.lane.b32.xlu0 %v5271, 32
    %v5458 = vpop.permute.xlu0 %5457
    %5463 = vrot.lane.b32.xlu0 %v5136, 48
    %v5464 = vpop.permute.xlu0 %5463
    %5465 = vrot.lane.b32.xlu0 %v5272, 48
    %v5466 = vpop.permute.xlu0 %5465
    %5471 = vrot.lane.b32.xlu0 %v5137, 64
    %v5472 = vpop.permute.xlu0 %5471
    %5473 = vrot.lane.b32.xlu0 %v5273, 64
    %v5474 = vpop.permute.xlu0 %5473
    %5479 = vrot.lane.b32.xlu0 %v5138, 80
    %v5480 = vpop.permute.xlu0 %5479
    %5481 = vrot.lane.b32.xlu0 %v5274, 80
    %v5482 = vpop.permute.xlu0 %5481
    %5487 = vrot.lane.b32.xlu0 %v5139, 96
    %v5488 = vpop.permute.xlu0 %5487
    %5489 = vrot.lane.b32.xlu0 %v5275, 96
    %v5490 = vpop.permute.xlu0 %5489
    %5495 = vrot.lane.b32.xlu0 %v5140, 112
    %v5496 = vpop.permute.xlu0 %5495
    %5497 = vrot.lane.b32.xlu0 %v5276, 112
    %v5498 = vpop.permute.xlu0 %5497
    %v5501 = vsel %vm2410, %v4317, %v5280
    %v5502 = vsel %vm2410, %v4453, %v5282
    %v5503 = vsel %vm345, %v5501, %v5288
    %v5504 = vsel %vm345, %v5502, %v5290
    %vm5505 = vcmask 392192
    %v5506 = vsel %vm5505, %v5503, %v5296
    %v5507 = vsel %vm5505, %v5504, %v5298
    %vm5508 = vcmask 523264
    %v5509 = vsel %vm5508, %v5506, %v5304
    %v5510 = vsel %vm5508, %v5507, %v5306
    %vm5511 = vcmask 654336
    %v5512 = vsel %vm5511, %v5509, %v5312
    %v5513 = vsel %vm5511, %v5510, %v5314
    %vm5514 = vcmask 785408
    %v5515 = vsel %vm5514, %v5512, %v5320
    %v5516 = vsel %vm5514, %v5513, %v5322
    %vm5517 = vcmask 916480
    %v5518 = vsel %vm5517, %v5515, %v5328
    %v5519 = vsel %vm5517, %v5516, %v5330
    %v5520 = vsel %vm2410, %v4589, %v5336
    %v5521 = vsel %vm2410, %v4725, %v5338
    %v5522 = vsel %vm345, %v5520, %v5344
    %v5523 = vsel %vm345, %v5521, %v5346
    %v5524 = vsel %vm5505, %v5522, %v5352
    %v5525 = vsel %vm5505, %v5523, %v5354
    %v5526 = vsel %vm5508, %v5524, %v5360
    %v5527 = vsel %vm5508, %v5525, %v5362
    %v5528 = vsel %vm5511, %v5526, %v5368
    %v5529 = vsel %vm5511, %v5527, %v5370
    %v5530 = vsel %vm5514, %v5528, %v5376
    %v5531 = vsel %vm5514, %v5529, %v5378
    %v5532 = vsel %vm5517, %v5530, %v5384
    %v5533 = vsel %vm5517, %v5531, %v5386
    %v5534 = vsel %vm2410, %v4861, %v5392
    %v5535 = vsel %vm2410, %v4997, %v5394
    %v5536 = vsel %vm345, %v5534, %v5400
    %v5537 = vsel %vm345, %v5535, %v5402
    %v5538 = vsel %vm5505, %v5536, %v5408
    %v5539 = vsel %vm5505, %v5537, %v5410
    %v5540 = vsel %vm5508, %v5538, %v5416
    %v5541 = vsel %vm5508, %v5539, %v5418
    %v5542 = vsel %vm5511, %v5540, %v5424
    %v5543 = vsel %vm5511, %v5541, %v5426
    %v5544 = vsel %vm5514, %v5542, %v5432
    %v5545 = vsel %vm5514, %v5543, %v5434
    %v5546 = vsel %vm5517, %v5544, %v5440
    %v5547 = vsel %vm5517, %v5545, %v5442
    %v5548 = vsel %vm2410, %v5133, %v5448
    %v5549 = vsel %vm2410, %v5269, %v5450
    %v5550 = vsel %vm345, %v5548, %v5456
    %v5551 = vsel %vm345, %v5549, %v5458
    %v5552 = vsel %vm5505, %v5550, %v5464
    %v5553 = vsel %vm5505, %v5551, %v5466
    %v5554 = vsel %vm5508, %v5552, %v5472
    %v5555 = vsel %vm5508, %v5553, %v5474
    %v5556 = vsel %vm5511, %v5554, %v5480
    %v5557 = vsel %vm5511, %v5555, %v5482
    %v5558 = vsel %vm5514, %v5556, %v5488
    %v5559 = vsel %vm5514, %v5557, %v5490
    %v5560 = vsel %vm5517, %v5558, %v5496
    %v5561 = vsel %vm5517, %v5559, %v5498
    %v5562 = vld [vmem:[%s9] sm:$0xf]
    %v5564 = vlaneseq
    %v5565 = vshrl.u32 %v5564, 7
    %v5566 = vsub.s32 0, %v5565
    %v5567 = vrot.slane %v5562, %v5566
    %v5568 = vlaneseq
    %v5569 = vshrl.u32 %v5568, 7
    %v5570 = vsub.s32 1, %v5569
    %v5571 = vrot.slane %v5562, %v5570
    %v5572 = vlaneseq
    %v5573 = vshrl.u32 %v5572, 7
    %v5574 = vsub.s32 2, %v5573
    %v5575 = vrot.slane %v5562, %v5574
    %v5576 = vlaneseq
    %v5577 = vshrl.u32 %v5576, 7
    %v5578 = vsub.s32 3, %v5577
    %v5579 = vrot.slane %v5562, %v5578
    %v5584 = vadd.f32 %v5518, %v5567
    %v5585 = vadd.f32 %v5532, %v5571
    %v5586 = vadd.f32 %v5546, %v5575
    %v5587 = vadd.f32 %v5560, %v5579
    %v5588 = vadd.f32 %v5519, %v5567
    %v5589 = vadd.f32 %v5533, %v5571
    %v5590 = vadd.f32 %v5547, %v5575
    %v5591 = vadd.f32 %v5561, %v5579
    %v5592 = vmul.f32 %v5584, 0.5
    %v5593 = vmul.f32 %v5585, 0.5
    %v5594 = vmul.f32 %v5586, 0.5
    %v5595 = vmul.f32 %v5587, 0.5
    %v5596 = vmul.f32 %v5588, 0.5
    %v5597 = vmul.f32 %v5589, 0.5
    %v5598 = vmul.f32 %v5590, 0.5
    %v5599 = vmul.f32 %v5591, 0.5
    %v5600 = vmul.f32 %v5584, 0.044715
    %v5601 = vmul.f32 %v5585, 0.044715
    %v5602 = vmul.f32 %v5586, 0.044715
    %v5603 = vmul.f32 %v5587, 0.044715
    %v5604 = vmul.f32 %v5588, 0.044715
    %v5605 = vmul.f32 %v5589, 0.044715
    %v5606 = vmul.f32 %v5590, 0.044715
    %v5607 = vmul.f32 %v5591, 0.044715
    %v5608 = vmul.f32 %v5600, %v5584
    %v5609 = vmul.f32 %v5601, %v5585
    %v5610 = vmul.f32 %v5602, %v5586
    %v5611 = vmul.f32 %v5603, %v5587
    %v5612 = vmul.f32 %v5604, %v5588
    %v5613 = vmul.f32 %v5605, %v5589
    %v5614 = vmul.f32 %v5606, %v5590
    %v5615 = vmul.f32 %v5607, %v5591
    %v5616 = vmul.f32 %v5608, %v5584
    %v5617 = vmul.f32 %v5609, %v5585
    %v5618 = vmul.f32 %v5610, %v5586
    %v5619 = vmul.f32 %v5611, %v5587
    %v5620 = vmul.f32 %v5612, %v5588
    %v5621 = vmul.f32 %v5613, %v5589
    %v5622 = vmul.f32 %v5614, %v5590
    %v5623 = vmul.f32 %v5615, %v5591
    %v5624 = vadd.f32 %v5584, %v5616
    %v5625 = vadd.f32 %v5585, %v5617
    %v5626 = vadd.f32 %v5586, %v5618
    %v5627 = vadd.f32 %v5587, %v5619
    %v5628 = vadd.f32 %v5588, %v5620
    %v5629 = vadd.f32 %v5589, %v5621
    %v5630 = vadd.f32 %v5590, %v5622
    %v5631 = vadd.f32 %v5591, %v5623
    %v5632 = vmul.f32 %v5624, 0.7978846
    %v5633 = vmul.f32 %v5625, 0.7978846
    %v5634 = vmul.f32 %v5626, 0.7978846
    %v5635 = vmul.f32 %v5627, 0.7978846
    %v5636 = vmul.f32 %v5628, 0.7978846
    %v5637 = vmul.f32 %v5629, 0.7978846
    %v5638 = vmul.f32 %v5630, 0.7978846
    %v5639 = vmul.f32 %v5631, 0.7978846
    %v5640 = vtanh.pop %v5632
    %v5641 = vtanh.pop %v5633
    %v5642 = vtanh.pop %v5634
    %v5643 = vtanh.pop %v5635
    %v5644 = vtanh.pop %v5636
    %v5645 = vtanh.pop %v5637
    %v5646 = vtanh.pop %v5638
    %v5647 = vtanh.pop %v5639
    %v5648 = vadd.f32 %v5640, 1.0
    %v5649 = vadd.f32 %v5641, 1.0
    %v5650 = vadd.f32 %v5642, 1.0
    %v5651 = vadd.f32 %v5643, 1.0
    %v5652 = vadd.f32 %v5644, 1.0
    %v5653 = vadd.f32 %v5645, 1.0
    %v5654 = vadd.f32 %v5646, 1.0
    %v5655 = vadd.f32 %v5647, 1.0
    %v5656 = vmul.f32 %v5592, %v5648
    %v5657 = vmul.f32 %v5593, %v5649
    %v5658 = vmul.f32 %v5594, %v5650
    %v5659 = vmul.f32 %v5595, %v5651
    %v5660 = vmul.f32 %v5596, %v5652
    %v5661 = vmul.f32 %v5597, %v5653
    %v5662 = vmul.f32 %v5598, %v5654
    %v5663 = vmul.f32 %v5599, %v5655
    %v5664 = vld [vmem:[%s10] sm:$0xf]
    %v5665 = vld [vmem:[%s10 + $0x4] sm:$0xf]
    %v5666 = vld [vmem:[%s10 + $0x8] sm:$0xf]
    %v5667 = vld [vmem:[%s10 + $0xc] sm:$0xf]
    %v5668 = vld [vmem:[%s10 + $0x10] sm:$0xf]
    %v5669 = vld [vmem:[%s10 + $0x14] sm:$0xf]
    %v5670 = vld [vmem:[%s10 + $0x18] sm:$0xf]
    %v5671 = vld [vmem:[%s10 + $0x1c] sm:$0xf]
    %v5672 = vld [vmem:[%s10 + $0x20] sm:$0xf]
    %v5673 = vld [vmem:[%s10 + $0x24] sm:$0xf]
    %v5674 = vld [vmem:[%s10 + $0x28] sm:$0xf]
    %v5675 = vld [vmem:[%s10 + $0x2c] sm:$0xf]
    %v5676 = vld [vmem:[%s10 + $0x30] sm:$0xf]
    %v5677 = vld [vmem:[%s10 + $0x34] sm:$0xf]
    %v5678 = vld [vmem:[%s10 + $0x38] sm:$0xf]
    %v5679 = vld [vmem:[%s10 + $0x3c] sm:$0xf]
    %v5680 = vld [vmem:[%s10 + $0x40] sm:$0xf]
    %v5681 = vld [vmem:[%s10 + $0x44] sm:$0xf]
    %v5682 = vld [vmem:[%s10 + $0x48] sm:$0xf]
    %v5683 = vld [vmem:[%s10 + $0x4c] sm:$0xf]
    %v5684 = vld [vmem:[%s10 + $0x50] sm:$0xf]
    %v5685 = vld [vmem:[%s10 + $0x54] sm:$0xf]
    %v5686 = vld [vmem:[%s10 + $0x58] sm:$0xf]
    %v5687 = vld [vmem:[%s10 + $0x5c] sm:$0xf]
    %v5688 = vld [vmem:[%s10 + $0x60] sm:$0xf]
    %v5689 = vld [vmem:[%s10 + $0x64] sm:$0xf]
    %v5690 = vld [vmem:[%s10 + $0x68] sm:$0xf]
    %v5691 = vld [vmem:[%s10 + $0x6c] sm:$0xf]
    %v5692 = vld [vmem:[%s10 + $0x70] sm:$0xf]
    %v5693 = vld [vmem:[%s10 + $0x74] sm:$0xf]
    %v5694 = vld [vmem:[%s10 + $0x78] sm:$0xf]
    %v5695 = vld [vmem:[%s10 + $0x7c] sm:$0xf]
    %v5696 = vld [vmem:[%s10 + $0x80] sm:$0xf]
    %v5697 = vld [vmem:[%s10 + $0x84] sm:$0xf]
    %v5698 = vld [vmem:[%s10 + $0x88] sm:$0xf]
    %v5699 = vld [vmem:[%s10 + $0x8c] sm:$0xf]
    %v5700 = vld [vmem:[%s10 + $0x90] sm:$0xf]
    %v5701 = vld [vmem:[%s10 + $0x94] sm:$0xf]
    %v5702 = vld [vmem:[%s10 + $0x98] sm:$0xf]
    %v5703 = vld [vmem:[%s10 + $0x9c] sm:$0xf]
    %v5704 = vld [vmem:[%s10 + $0xa0] sm:$0xf]
    %v5705 = vld [vmem:[%s10 + $0xa4] sm:$0xf]
    %v5706 = vld [vmem:[%s10 + $0xa8] sm:$0xf]
    %v5707 = vld [vmem:[%s10 + $0xac] sm:$0xf]
    %v5708 = vld [vmem:[%s10 + $0xb0] sm:$0xf]
    %v5709 = vld [vmem:[%s10 + $0xb4] sm:$0xf]
    %v5710 = vld [vmem:[%s10 + $0xb8] sm:$0xf]
    %v5711 = vld [vmem:[%s10 + $0xbc] sm:$0xf]
    %v5712 = vld [vmem:[%s10 + $0xc0] sm:$0xf]
    %v5713 = vld [vmem:[%s10 + $0xc4] sm:$0xf]
    %v5714 = vld [vmem:[%s10 + $0xc8] sm:$0xf]
    %v5715 = vld [vmem:[%s10 + $0xcc] sm:$0xf]
    %v5716 = vld [vmem:[%s10 + $0xd0] sm:$0xf]
    %v5717 = vld [vmem:[%s10 + $0xd4] sm:$0xf]
    %v5718 = vld [vmem:[%s10 + $0xd8] sm:$0xf]
    %v5719 = vld [vmem:[%s10 + $0xdc] sm:$0xf]
    %v5720 = vld [vmem:[%s10 + $0xe0] sm:$0xf]
    %v5721 = vld [vmem:[%s10 + $0xe4] sm:$0xf]
    %v5722 = vld [vmem:[%s10 + $0xe8] sm:$0xf]
    %v5723 = vld [vmem:[%s10 + $0xec] sm:$0xf]
    %v5724 = vld [vmem:[%s10 + $0xf0] sm:$0xf]
    %v5725 = vld [vmem:[%s10 + $0xf4] sm:$0xf]
    %v5726 = vld [vmem:[%s10 + $0xf8] sm:$0xf]
    %v5727 = vld [vmem:[%s10 + $0xfc] sm:$0xf]
    %v5728 = vpack.c.bf16 %v5660, %v5656
    %v5729 = vpack.c.bf16 %v5661, %v5657
    %v5730 = vpack.c.bf16 %v5662, %v5658
    %v5731 = vpack.c.bf16 %v5663, %v5659
    %v5732 = vld [vmem:[#allocation11] sm:$0x1]
    %v5734 = vlaneseq
    %v5735 = vshrl.u32 %v5734, 7
    %v5736 = vsub.s32 0, %v5735
    %v5737 = vrot.slane %v5732, %v5736
    %v5803 = vunpack.c.l.b16 %v5664
    %v5804 = vunpack.c.l.b16 %v5665
    %v5805 = vunpack.c.l.b16 %v5666
    %v5806 = vunpack.c.l.b16 %v5667
    %v5807 = vunpack.c.l.b16 %v5668
    %v5808 = vunpack.c.l.b16 %v5669
    %v5809 = vunpack.c.l.b16 %v5670
    %v5810 = vunpack.c.l.b16 %v5671
    %v5811 = vunpack.c.l.b16 %v5672
    %v5812 = vunpack.c.l.b16 %v5673
    %v5813 = vunpack.c.l.b16 %v5674
    %v5814 = vunpack.c.l.b16 %v5675
    %v5815 = vunpack.c.l.b16 %v5676
    %v5816 = vunpack.c.l.b16 %v5677
    %v5817 = vunpack.c.l.b16 %v5678
    %v5818 = vunpack.c.l.b16 %v5679
    %v5819 = vunpack.c.l.b16 %v5680
    %v5820 = vunpack.c.l.b16 %v5681
    %v5821 = vunpack.c.l.b16 %v5682
    %v5822 = vunpack.c.l.b16 %v5683
    %v5823 = vunpack.c.l.b16 %v5684
    %v5824 = vunpack.c.l.b16 %v5685
    %v5825 = vunpack.c.l.b16 %v5686
    %v5826 = vunpack.c.l.b16 %v5687
    %v5827 = vunpack.c.l.b16 %v5688
    %v5828 = vunpack.c.l.b16 %v5689
    %v5829 = vunpack.c.l.b16 %v5690
    %v5830 = vunpack.c.l.b16 %v5691
    %v5831 = vunpack.c.l.b16 %v5692
    %v5832 = vunpack.c.l.b16 %v5693
    %v5833 = vunpack.c.l.b16 %v5694
    %v5834 = vunpack.c.l.b16 %v5695
    %v5835 = vunpack.c.l.b16 %v5696
    %v5836 = vunpack.c.l.b16 %v5697
    %v5837 = vunpack.c.l.b16 %v5698
    %v5838 = vunpack.c.l.b16 %v5699
    %v5839 = vunpack.c.l.b16 %v5700
    %v5840 = vunpack.c.l.b16 %v5701
    %v5841 = vunpack.c.l.b16 %v5702
    %v5842 = vunpack.c.l.b16 %v5703
    %v5843 = vunpack.c.l.b16 %v5704
    %v5844 = vunpack.c.l.b16 %v5705
    %v5845 = vunpack.c.l.b16 %v5706
    %v5846 = vunpack.c.l.b16 %v5707
    %v5847 = vunpack.c.l.b16 %v5708
    %v5848 = vunpack.c.l.b16 %v5709
    %v5849 = vunpack.c.l.b16 %v5710
    %v5850 = vunpack.c.l.b16 %v5711
    %v5851 = vunpack.c.l.b16 %v5712
    %v5852 = vunpack.c.l.b16 %v5713
    %v5853 = vunpack.c.l.b16 %v5714
    %v5854 = vunpack.c.l.b16 %v5715
    %v5855 = vunpack.c.l.b16 %v5716
    %v5856 = vunpack.c.l.b16 %v5717
    %v5857 = vunpack.c.l.b16 %v5718
    %v5858 = vunpack.c.l.b16 %v5719
    %v5859 = vunpack.c.l.b16 %v5720
    %v5860 = vunpack.c.l.b16 %v5721
    %v5861 = vunpack.c.l.b16 %v5722
    %v5862 = vunpack.c.l.b16 %v5723
    %v5863 = vunpack.c.l.b16 %v5724
    %v5864 = vunpack.c.l.b16 %v5725
    %v5865 = vunpack.c.l.b16 %v5726
    %v5866 = vunpack.c.l.b16 %v5727
    %v5867 = vpack.c.b16 %v5804, %v5803
    %v5868 = vpack.c.b16 %v5806, %v5805
    %v5869 = vpack.c.b16 %v5808, %v5807
    %v5870 = vpack.c.b16 %v5810, %v5809
    %v5871 = vpack.c.b16 %v5812, %v5811
    %v5872 = vpack.c.b16 %v5814, %v5813
    %v5873 = vpack.c.b16 %v5816, %v5815
    %v5874 = vpack.c.b16 %v5818, %v5817
    %v5875 = vpack.c.b16 %v5820, %v5819
    %v5876 = vpack.c.b16 %v5822, %v5821
    %v5877 = vpack.c.b16 %v5824, %v5823
    %v5878 = vpack.c.b16 %v5826, %v5825
    %v5879 = vpack.c.b16 %v5828, %v5827
    %v5880 = vpack.c.b16 %v5830, %v5829
    %v5881 = vpack.c.b16 %v5832, %v5831
    %v5882 = vpack.c.b16 %v5834, %v5833
    %v5883 = vpack.c.b16 %v5836, %v5835
    %v5884 = vpack.c.b16 %v5838, %v5837
    %v5885 = vpack.c.b16 %v5840, %v5839
    %v5886 = vpack.c.b16 %v5842, %v5841
    %v5887 = vpack.c.b16 %v5844, %v5843
    %v5888 = vpack.c.b16 %v5846, %v5845
    %v5889 = vpack.c.b16 %v5848, %v5847
    %v5890 = vpack.c.b16 %v5850, %v5849
    %v5891 = vpack.c.b16 %v5852, %v5851
    %v5892 = vpack.c.b16 %v5854, %v5853
    %v5893 = vpack.c.b16 %v5856, %v5855
    %v5894 = vpack.c.b16 %v5858, %v5857
    %v5895 = vpack.c.b16 %v5860, %v5859
    %v5896 = vpack.c.b16 %v5862, %v5861
    %v5897 = vpack.c.b16 %v5864, %v5863
    %v5898 = vpack.c.b16 %v5866, %v5865
    %5931 = vmatprep.subr.bf16.mxu0 0
    %5932 = vmatpush1.bf16.msra.mxu0 %v5867
    %5933 = vmatprep.subr.bf16.mxu0 0
    %5934 = vmatpush1.bf16.msra.mxu0 %v5868
    %5935 = vmatprep.subr.bf16.mxu0 0
    %5936 = vmatpush1.bf16.msra.mxu0 %v5869
    %5937 = vmatprep.subr.bf16.mxu0 0
    %5938 = vmatpush1.bf16.msra.mxu0 %v5870
    %5939 = vmatprep.subr.bf16.mxu0 0
    %5940 = vmatpush1.bf16.msra.mxu0 %v5871
    %5941 = vmatprep.subr.bf16.mxu0 0
    %5942 = vmatpush1.bf16.msra.mxu0 %v5872
    %5943 = vmatprep.subr.bf16.mxu0 0
    %5944 = vmatpush1.bf16.msra.mxu0 %v5873
    %5945 = vmatprep.subr.bf16.mxu0 0
    %5946 = vmatpush1.bf16.msra.mxu0 %v5874
    %5947 = vmatprep.subr.bf16.mxu0 0
    %5948 = vmatpush1.bf16.msra.mxu0 %v5875
    %5949 = vmatprep.subr.bf16.mxu0 0
    %5950 = vmatpush1.bf16.msra.mxu0 %v5876
    %5951 = vmatprep.subr.bf16.mxu0 0
    %5952 = vmatpush1.bf16.msra.mxu0 %v5877
    %5953 = vmatprep.subr.bf16.mxu0 0
    %5954 = vmatpush1.bf16.msra.mxu0 %v5878
    %5955 = vmatprep.subr.bf16.mxu0 0
    %5956 = vmatpush1.bf16.msra.mxu0 %v5879
    %5957 = vmatprep.subr.bf16.mxu0 0
    %5958 = vmatpush1.bf16.msra.mxu0 %v5880
    %5959 = vmatprep.subr.bf16.mxu0 0
    %5960 = vmatpush1.bf16.msra.mxu0 %v5881
    %5961 = vmatprep.subr.bf16.mxu0 0
    %5962 = vmatpush1.bf16.msra.mxu0 %v5882
    %5963 = vmatprep.mubr.bf16.mxu0 %v5729
    %5964 = vmatmul.mubr.bf16.gmra.mrb[0].mxu0 %v5728
    %v5965 = vpop.f32.mrb[0].mxu0
    %v5966 = vadd.f32 %v5737, %v5965
    %v5967 = vpop.f32.mrb[0].mxu0
    %v5968 = vpop.f32.mrb[0].mxu0
    %v5969 = vadd.f32 %v5737, %v5968
    %v5970 = vpop.f32.mrb[0].mxu0
    %5971 = vdwg.mxu0
    %5972 = vmatprep.subr.bf16.mxu0 0
    %5973 = vmatpush1.bf16.msra.mxu0 %v5883
    %5974 = vmatprep.subr.bf16.mxu0 0
    %5975 = vmatpush1.bf16.msra.mxu0 %v5884
    %5976 = vmatprep.subr.bf16.mxu0 0
    %5977 = vmatpush1.bf16.msra.mxu0 %v5885
    %5978 = vmatprep.subr.bf16.mxu0 0
    %5979 = vmatpush1.bf16.msra.mxu0 %v5886
    %5980 = vmatprep.subr.bf16.mxu0 0
    %5981 = vmatpush1.bf16.msra.mxu0 %v5887
    %5982 = vmatprep.subr.bf16.mxu0 0
    %5983 = vmatpush1.bf16.msra.mxu0 %v5888
    %5984 = vmatprep.subr.bf16.mxu0 0
    %5985 = vmatpush1.bf16.msra.mxu0 %v5889
    %5986 = vmatprep.subr.bf16.mxu0 0
    %5987 = vmatpush1.bf16.msra.mxu0 %v5890
    %5988 = vmatprep.subr.bf16.mxu0 0
    %5989 = vmatpush1.bf16.msra.mxu0 %v5891
    %5990 = vmatprep.subr.bf16.mxu0 0
    %5991 = vmatpush1.bf16.msra.mxu0 %v5892
    %5992 = vmatprep.subr.bf16.mxu0 0
    %5993 = vmatpush1.bf16.msra.mxu0 %v5893
    %5994 = vmatprep.subr.bf16.mxu0 0
    %5995 = vmatpush1.bf16.msra.mxu0 %v5894
    %5996 = vmatprep.subr.bf16.mxu0 0
    %5997 = vmatpush1.bf16.msra.mxu0 %v5895
    %5998 = vmatprep.subr.bf16.mxu0 0
    %5999 = vmatpush1.bf16.msra.mxu0 %v5896
    %6000 = vmatprep.subr.bf16.mxu0 0
    %6001 = vmatpush1.bf16.msra.mxu0 %v5897
    %6002 = vmatprep.subr.bf16.mxu0 0
    %6003 = vmatpush1.bf16.msra.mxu0 %v5898
    %6004 = vmatprep.mubr.bf16.mxu0 %v5731
    %6005 = vmatmul.mubr.bf16.gmra.mrb[0].mxu0 %v5730
    %v6006 = vpop.f32.mrb[0].mxu0
    %v6007 = vadd.f32 %v5966, %v6006
    %v6008 = vpop.f32.mrb[0].mxu0
    %v6009 = vpop.f32.mrb[0].mxu0
    %v6010 = vadd.f32 %v5969, %v6009
    %v6011 = vpop.f32.mrb[0].mxu0
    %6012 = vdwg.mxu0
    %6013 = vst [vmem:[#allocation13] sm:$0xff] %v6007
    %6014 = vst [vmem:[#allocation13 + $0x8] sm:$0xff] %v6010
    // Predicated region
    $region74: #{adaptive_mixing.1} parent=1 // pred_check
      _
    $region75: #{adaptive_mixing.1} parent=1 // pred_check_branch
      %6016 = sbr.rel (0) target = $region77
    $region76: #{adaptive_mixing.1} parent=1 // pred_region
      %s6018 = ssub.s32 256, 256
      %6019 = vsyncadd [#allocation4], %s6018
      %s6020 = sshll.u32 [#allocation13], 4
      %s6021 = int_to_ptr.vmem [resolvable:$true] %s6020
      %6026 = dma.vmem_to_hbm [thread:$0]  %s6021, 256, %s12, [#allocation4], 128, 128, 8
    $region77: #{adaptive_mixing.1} parent=1 // pred_fallthru
      _
    // Predicated region
    $region78: #{adaptive_mixing.1} parent=1 // pred_check
      _
    $region79: #{adaptive_mixing.1} parent=1 // pred_check_branch
      %6028 = sbr.rel (0) target = $region81
    $region80: #{adaptive_mixing.1} parent=1 // pred_region
      %6029 = dma.done [#allocation4], 256
    $region81: #{adaptive_mixing.1} parent=1 // pred_fallthru
      _
    %6030 = vsyncpa [#allocation3], 1
    %6031 = vsyncpa [#allocation6], 1
    %6032 = vsyncpa [#allocation9], 1
    %6033 = vsyncpa [#allocation12], 1
    %6034 = vsyncpa [#allocation4], 1

</llo_original>
